<compile_context>
chip_gen: v7x
topology: tpu7x:2x2x1
jax: 0.10.0
libtpu: 0.0.40
codegen_flags: <defaults>
</compile_context>

<pallas_src>
import jax
import jax.numpy as jnp
import numpy as np
from jax.experimental import pallas as pl
from jax.experimental.pallas import tpu as pltpu


def _make_kernel(S, D, N, C1, C2):
    """Kernel factory; S/D/N and the packed-weight group widths are static."""

    def kernel(x_ref, wmat_ref, vec_ref, negA_ref, o_ref):
        T = x_ref.shape[0]          # bb * S token rows in this block
        BB = T // S
        G = 2 * BB                  # (direction, batch) folded together

        xt = x_ref[...].astype(jnp.float32)                 # (T, D) skip connection
        V = vec_ref[...].astype(jnp.float32)                # packed vectors (8, >=128)
        gamma, beta, dpar = V[0:1, :D], V[1:2, :D], V[2:3, :D]

        # --- LayerNorm over features (nn.LayerNorm default eps=1e-5) ---
        mean = jnp.mean(xt, axis=-1, keepdims=True)
        var = jnp.mean((xt - mean) ** 2, axis=-1, keepdims=True)
        xn = (xt - mean) * jax.lax.rsqrt(var + 1e-5) * gamma + beta

        mm = wmat_ref.dtype          # matmul operand dtype (f32 or bf16)

        # --- ONE fused matmul: [proj | proj∘fwd_conv | proj∘bwd_conv] (+ fused biases) ---
        xall = jnp.dot(xn.astype(mm), wmat_ref[:, :C1],
                       preferred_element_type=jnp.float32) + V[3:4, :C1]
        xp = xall[:, :D]                                     # proj(x) (== z1)
        z = xp * jax.nn.sigmoid(xp)                          # SiLU gate
        u_f = jax.nn.softplus(xall[:, D:2 * D])              # forward-conv branch
        u_b = jax.nn.softplus(xall[:, 2 * D:3 * D])          # backward-conv branch

        # --- ONE fused matmul: [delta (low-rank pre-fused) | B | C] on stacked dirs ---
        u = jnp.concatenate([u_f, u_b], axis=0)              # (2T, D), rows = (dir,b,s)
        dbc = jnp.dot(u.astype(mm), wmat_ref[:, C1:C1 + C2],
                      preferred_element_type=jnp.float32) + V[4:5, :C2]
        delta = jax.nn.softplus(dbc[:, :D])
        Bm = dbc[:, D:D + N]
        Cm = dbc[:, D + N:D + 2 * N]

        A_T = negA_ref[...].astype(jnp.float32)              # (N, D) == -exp(A_log).T

        d_g = delta.reshape(G, S, D)
        u_g = u.reshape(G, S, D)
        B_g = Bm.reshape(G, S, N)
        C_g = Cm.reshape(G, S, N)

        # --- hoisted out of the recurrence: one wide exp stream + vectorized dBx ---
        dA = jnp.exp(d_g[:, :, None, :] * A_T[None, None, :, :])       # (G,S,N,D)
        dBx = (d_g * u_g)[:, :, None, :] * B_g[:, :, :, None]          # (G,S,N,D)

        # --- selective scan: h_t = dA_t*h + dBx_t ; y_t = <h_t, C_t> ---
        h0 = jnp.zeros((G, N, D), jnp.float32)
        if S <= 32:
            h = h0
            outs = []
            for t in range(S):                               # static full unroll
                h = dA[:, t] * h + dBx[:, t]
                outs.append(jnp.sum(h * C_g[:, t, :, None], axis=1))   # (G, D)
            y = jnp.stack(outs, axis=1)                                 # (G, S, D)
        else:
            # Large-S path: bounded vreg live ranges via fori_loop with modest unroll.
            def body(t, carry):
                h, y = carry
                dA_t = jax.lax.dynamic_index_in_dim(dA, t, axis=1, keepdims=False)
                dBx_t = jax.lax.dynamic_index_in_dim(dBx, t, axis=1, keepdims=False)
                C_t = jax.lax.dynamic_index_in_dim(C_g, t, axis=1, keepdims=False)
                h = dA_t * h + dBx_t
                y_t = jnp.sum(h * C_t[:, :, None], axis=1)
                y = jax.lax.dynamic_update_slice(y, y_t[:, None, :], (0, t, 0))
                return h, y
            _, y = jax.lax.fori_loop(
                0, S, body, (h0, jnp.zeros((G, S, D), jnp.float32)), unroll=4)

        # --- vectorized combine: sum directions, +D*u, *SiLU gate, +skip; ONE store ---
        ys = (y[:BB] + y[BB:]).reshape(T, D)
        Du = (u_f + u_b) * dpar
        out = (ys + Du) * z + xt
        o_ref[...] = out.astype(o_ref.dtype)

    return kernel


def _tensorcores_per_device():
    """Best-effort: 2 for megacore-style devices (v7x/v4/v5p), else 1 (v5e/v6e)."""
    try:
        kind = jax.devices()[0].device_kind.lower()
    except Exception:
        return 1
    if "v7" in kind or "v5p" in kind or ("v4" in kind and "lite" not in kind):
        return 2
    return 1


def _pad_lanes(a, mult=128):
    w = a.shape[1]
    tgt = max(mult, ((w + mult - 1) // mult) * mult)
    return jnp.pad(a, ((0, 0), (0, tgt - w)))


def bi_mamba_block(x, params, dt_rank, d_state, *, matmul_dtype=jnp.float32, nblk=None):
    B, S, D = x.shape
    R, N = dt_rank, d_state
    f32 = jnp.float32
    hp = jax.lax.Precision.HIGHEST

    # ---- trace-time weight fusion / packing (exact linear composition) ----
    wp_t = params["wp_t"].astype(f32)
    bp = params["bp"].astype(f32).reshape(1, D)
    # proj followed by conv1d(k=1) is linear -> fuse:  x@wp+bp then @wc+bc.
    w_fwd = jnp.dot(wp_t, params["wfc_t"], precision=hp)
    w_bwd = jnp.dot(wp_t, params["wbc_t"], precision=hp)
    b_fwd = jnp.dot(bp, params["wfc_t"], precision=hp) + params["bfc"].reshape(1, D)
    b_bwd = jnp.dot(bp, params["wbc_t"], precision=hp) + params["bbc"].reshape(1, D)
    w3 = jnp.concatenate([wp_t, w_fwd, w_bwd], axis=1)                    # (D, 3D)
    b3 = jnp.concatenate([bp, b_fwd, b_bwd], axis=1)                      # (1, 3D)

    # delta low-rank path fused:  u @ (wdbc[:, :R] @ wdt) ; B/C slices appended.
    wdelta = jnp.dot(params["wdbc_t"][:, :R], params["wdt_t"], precision=hp)     # (D, D)
    wdbc = jnp.concatenate([wdelta, params["wdbc_t"][:, R:R + 2 * N]], axis=1)   # (D, D+2N)

    w3p = _pad_lanes(w3)
    wdbcp = _pad_lanes(wdbc)
    C1, C2 = w3p.shape[1], wdbcp.shape[1]
    wmat = jnp.concatenate([w3p, wdbcp], axis=1).astype(matmul_dtype)     # (D, C1+C2)

    VW = max(C1, C2)
    vec = jnp.zeros((8, VW), f32)
    vec = vec.at[0, :D].set(params["gamma"].reshape(-1))
    vec = vec.at[1, :D].set(params["beta"].reshape(-1))
    vec = vec.at[2, :D].set(params["dpar"].reshape(-1))
    vec = vec.at[3, :3 * D].set(b3.reshape(-1))
    vec = vec.at[4, :D].set(params["bdt"].reshape(-1))     # B/C projections have no bias

    negA_T = -jnp.exp(params["alog_t"]).astype(f32)        # (N, D)

    # ---- grid: 2 blocks only when the chip actually has 2 TCs per device ----
    if nblk is None:
        nblk = 2 if (_tensorcores_per_device() >= 2 and B >= 2 and B % 2 == 0) else 1
    if B % nblk != 0 or ((B // nblk) * S) % 8 != 0:
        nblk = 1
    bb_rows = (B // nblk) * S

    xf = x.reshape(B * S, D)        # token-major, free layout plumbing in the wrapper

    out2d = pl.pallas_call(
        _make_kernel(S, D, N, C1, C2),
        out_shape=jax.ShapeDtypeStruct((B * S, D), x.dtype),
        grid_spec=pltpu.PrefetchScalarGridSpec(
            num_scalar_prefetch=0,
            grid=(nblk,),
            in_specs=[
                pl.BlockSpec((bb_rows, D), lambda i: (i, 0)),
                pl.BlockSpec(wmat.shape, lambda i: (0, 0)),
                pl.BlockSpec(vec.shape, lambda i: (0, 0)),
                pl.BlockSpec(negA_T.shape, lambda i: (0, 0)),
            ],
            out_specs=pl.BlockSpec((bb_rows, D), lambda i: (i, 0)),
        ),
        compiler_params=pltpu.CompilerParams(
            dimension_semantics=("parallel",),
            vmem_limit_bytes=32 * 1024 * 1024,
        ),
    )(xf, wmat, vec, negA_T)
    return out2d.reshape(B, S, D)


def reference(x, p, R, N):
    """Pure-JAX reference mirroring the PyTorch forward (unfused weights)."""
    mean = jnp.mean(x, -1, keepdims=True)
    var = jnp.mean((x - mean) ** 2, -1, keepdims=True)
    xn = (x - mean) / jnp.sqrt(var + 1e-5) * p["gamma"] + p["beta"]
    hp = jax.lax.Precision.HIGHEST
    xp = jnp.dot(xn, p["wp_t"], precision=hp) + p["bp"]
    z = xp * jax.nn.sigmoid(xp)
    A_T = -jnp.exp(p["alog_t"])                                  # (N, D)

    def direction(wc_t, bc):
        u = jax.nn.softplus(jnp.dot(xp, wc_t, precision=hp) + bc)
        dbc = jnp.dot(u, p["wdbc_t"], precision=hp)
        dlow, Bm, Cm = dbc[..., :R], dbc[..., R:R + N], dbc[..., R + N:R + 2 * N]
        delta = jax.nn.softplus(jnp.dot(dlow, p["wdt_t"], precision=hp) + p["bdt"])
        deltaA = jnp.exp(delta[..., None, :] * A_T)              # (B,S,N,D)
        BX = (delta * u)[..., None, :] * Bm[..., :, None]        # (B,S,N,D)
        Bsz, S, D = x.shape
        h = jnp.zeros((Bsz, N, D), jnp.float32)
        ys = []
        for t in range(S):
            h = deltaA[:, t] * h + BX[:, t]
            ys.append(jnp.sum(h * Cm[:, t, :, None], axis=1))
        y = jnp.stack(ys, axis=1)
        return y + u * p["dpar"]

    x1 = direction(p["wfc_t"], p["bfc"])
    x2 = direction(p["wbc_t"], p["bbc"])
    return x1 * z + x2 * z + x


if __name__ == "__main__":
    B, S, D = 2, 16, 32              # batch, seq, dim
    R, N = 8, 16                     # dt_rank, d_state; dim_inner == dim
    f32 = jnp.float32
    key = jax.random.PRNGKey(0)
    ks = jax.random.split(key, 10)

    def rnd(k, shape, scale=0.2):
        return jax.random.normal(k, shape, dtype=f32) * scale

    params = {
        "gamma": jnp.ones((1, D), f32),
        "beta": jnp.zeros((1, D), f32),
        "wp_t": rnd(ks[0], (D, D)),            # proj.weight.T
        "bp": rnd(ks[1], (1, D), 0.05),        # proj.bias
        "wfc_t": rnd(ks[2], (D, D)),           # forward_conv1d.weight[:,:,0].T
        "bfc": rnd(ks[3], (1, D), 0.05),
        "wbc_t": rnd(ks[4], (D, D)),           # backward_conv1d.weight[:,:,0].T
        "bbc": rnd(ks[5], (1, D), 0.05),
        "wdbc_t": rnd(ks[6], (D, R + 2 * N)),  # ssm.deltaBC_layer.weight.T (no bias)
        "wdt_t": rnd(ks[7], (R, D)),           # ssm.dt_proj_layer.weight.T
        "bdt": rnd(ks[8], (1, D), 0.05),       # ssm.dt_proj_layer.bias
        # A_log = log(arange(1, N+1)) broadcast to (dim_inner, N), stored transposed (N, D).
        "alog_t": jnp.log(jnp.broadcast_to(
            jnp.arange(1, N + 1, dtype=f32)[:, None], (N, D))),
        "dpar": jnp.ones((1, D), f32),         # ssm.D
    }

    x = jax.random.normal(ks[9], (B, S, D), dtype=f32)

    out = bi_mamba_block(x, params, R, N)
    out = jax.block_until_ready(out)

    ref = reference(x, params, R, N)
    assert out.shape == (B, S, D)
    np.testing.assert_allclose(np.asarray(out), np.asarray(ref), rtol=1e-2, atol=1e-2)
    print("KERNEL_OK")
</pallas_src>

<mosaic_0001>
module attributes {stable_mosaic.version = 11 : i64} {
  func.func @kernel(%arg0: i32, %arg1: memref<32x32xf32, #tpu.memory_space<vmem>>, %arg2: memref<32x256xf32, #tpu.memory_space<vmem>>, %arg3: memref<8x128xf32, #tpu.memory_space<vmem>>, %arg4: memref<16x32xf32, #tpu.memory_space<vmem>>, %arg5: memref<32x32xf32, #tpu.memory_space<vmem>>) attributes {dimension_semantics = [#tpu.dimension_semantics<parallel>], iteration_bounds = array<i64: 1>, scalar_prefetch = 0 : i64, scratch_operands = 0 : i64, tpu.core_type = #tpu.core_type<tc>, window_params = [{transform_indices = @transform_0, window_bounds = array<i64: 32, 32>}, {pipeline_mode = #tpu.pipeline_mode<synchronous>, transform_indices = @transform_1, window_bounds = array<i64: 32, 256>}, {pipeline_mode = #tpu.pipeline_mode<synchronous>, transform_indices = @transform_2, window_bounds = array<i64: 8, 128>}, {pipeline_mode = #tpu.pipeline_mode<synchronous>, transform_indices = @transform_3, window_bounds = array<i64: 16, 32>}, {transform_indices = @transform_4, window_bounds = array<i64: 32, 32>}]} {
    %c0 = arith.constant 0 : index
    %c0_0 = arith.constant 0 : index
    %0 = vector.load %arg1[%c0, %c0_0] : memref<32x32xf32, #tpu.memory_space<vmem>>, vector<32x32xf32>
    %c0_1 = arith.constant 0 : index
    %c0_2 = arith.constant 0 : index
    %1 = vector.load %arg3[%c0_1, %c0_2] : memref<8x128xf32, #tpu.memory_space<vmem>>, vector<8x128xf32>
    %2 = vector.extract_strided_slice %1 {offsets = [0, 0], sizes = [1, 32], strides = [1, 1]} : vector<8x128xf32> to vector<1x32xf32>
    %3 = vector.extract_strided_slice %1 {offsets = [1, 0], sizes = [1, 32], strides = [1, 1]} : vector<8x128xf32> to vector<1x32xf32>
    %4 = vector.extract_strided_slice %1 {offsets = [2, 0], sizes = [1, 32], strides = [1, 1]} : vector<8x128xf32> to vector<1x32xf32>
    %cst = arith.constant dense<0.000000e+00> : vector<32xf32>
    %5 = vector.multi_reduction <add>, %0, %cst [1] : vector<32x32xf32> to vector<32xf32>
    %6 = vector.shape_cast %5 : vector<32xf32> to vector<32x1xf32>
    %cst_3 = arith.constant 3.200000e+01 : f32
    %7 = vector.broadcast %cst_3 : f32 to vector<32x1xf32>
    %8 = arith.divf %6, %7 : vector<32x1xf32>
    %9 = vector.broadcast %8 : vector<32x1xf32> to vector<32x32xf32>
    %10 = arith.subf %0, %9 : vector<32x32xf32>
    %11 = arith.mulf %10, %10 : vector<32x32xf32>
    %cst_4 = arith.constant dense<0.000000e+00> : vector<32xf32>
    %12 = vector.multi_reduction <add>, %11, %cst_4 [1] : vector<32x32xf32> to vector<32xf32>
    %13 = vector.shape_cast %12 : vector<32xf32> to vector<32x1xf32>
    %cst_5 = arith.constant 3.200000e+01 : f32
    %14 = vector.broadcast %cst_5 : f32 to vector<32x1xf32>
    %15 = arith.divf %13, %14 : vector<32x1xf32>
    %16 = vector.broadcast %8 : vector<32x1xf32> to vector<32x32xf32>
    %17 = arith.subf %0, %16 : vector<32x32xf32>
    %cst_6 = arith.constant 9.99999974E-6 : f32
    %18 = vector.broadcast %cst_6 : f32 to vector<32x1xf32>
    %19 = arith.addf %15, %18 : vector<32x1xf32>
    %20 = math.rsqrt %19 : vector<32x1xf32>
    %21 = vector.broadcast %20 : vector<32x1xf32> to vector<32x32xf32>
    %22 = arith.mulf %17, %21 : vector<32x32xf32>
    %23 = vector.broadcast %2 : vector<1x32xf32> to vector<32x32xf32>
    %24 = arith.mulf %22, %23 : vector<32x32xf32>
    %25 = vector.broadcast %3 : vector<1x32xf32> to vector<32x32xf32>
    %26 = arith.addf %24, %25 : vector<32x32xf32>
    %c0_7 = arith.constant 0 : index
    %c0_8 = arith.constant 0 : index
    %27 = vector.load %arg2[%c0_7, %c0_8] : memref<32x256xf32, #tpu.memory_space<vmem>>, vector<32x128xf32>
    %cst_9 = arith.constant dense<0.000000e+00> : vector<32x128xf32>
    %28 = tpu.matmul %26, %27, %cst_9 {dimension_numbers = #tpu.dot_dimension_numbers<[1], [0], [0], [1], [0, 0, 1, 1], [], []>} : vector<32x32xf32>, vector<32x128xf32>, vector<32x128xf32> -> vector<32x128xf32>
    %29 = vector.extract_strided_slice %1 {offsets = [3, 0], sizes = [1, 128], strides = [1, 1]} : vector<8x128xf32> to vector<1x128xf32>
    %30 = vector.broadcast %29 : vector<1x128xf32> to vector<32x128xf32>
    %31 = arith.addf %28, %30 : vector<32x128xf32>
    %32 = vector.extract_strided_slice %31 {offsets = [0, 0], sizes = [32, 32], strides = [1, 1]} : vector<32x128xf32> to vector<32x32xf32>
    %33 = arith.negf %32 : vector<32x32xf32>
    %34 = math.exp %33 : vector<32x32xf32>
    %cst_10 = arith.constant 1.000000e+00 : f32
    %35 = vector.broadcast %cst_10 : f32 to vector<32x32xf32>
    %36 = arith.addf %35, %34 : vector<32x32xf32>
    %37 = arith.divf %35, %36 : vector<32x32xf32>
    %38 = arith.mulf %32, %37 : vector<32x32xf32>
    %39 = vector.extract_strided_slice %31 {offsets = [0, 32], sizes = [32, 32], strides = [1, 1]} : vector<32x128xf32> to vector<32x32xf32>
    %cst_11 = arith.constant 0.000000e+00 : f32
    %40 = vector.broadcast %cst_11 : f32 to vector<32x32xf32>
    %41 = arith.maximumf %39, %40 : vector<32x32xf32>
    %42 = vector.broadcast %cst_11 : f32 to vector<32x32xf32>
    %43 = arith.subf %39, %42 : vector<32x32xf32>
    %44 = arith.cmpf one, %43, %43 : vector<32x32xf32>
    %45 = vector.broadcast %cst_11 : f32 to vector<32x32xf32>
    %46 = arith.addf %39, %45 : vector<32x32xf32>
    %47 = math.absf %43 : vector<32x32xf32>
    %cst_12 = arith.constant 0.000000e+00 : f32
    %48 = vector.broadcast %cst_12 : f32 to vector<32x32xf32>
    %49 = arith.subf %48, %47 : vector<32x32xf32>
    %50 = math.exp %49 : vector<32x32xf32>
    %51 = math.log1p %50 : vector<32x32xf32>
    %52 = arith.addf %41, %51 : vector<32x32xf32>
    %53 = arith.select %44, %46, %52 : vector<32x32xi1>, vector<32x32xf32>
    %54 = vector.extract_strided_slice %31 {offsets = [0, 64], sizes = [32, 32], strides = [1, 1]} : vector<32x128xf32> to vector<32x32xf32>
    %cst_13 = arith.constant 0.000000e+00 : f32
    %55 = vector.broadcast %cst_13 : f32 to vector<32x32xf32>
    %56 = arith.maximumf %54, %55 : vector<32x32xf32>
    %57 = vector.broadcast %cst_13 : f32 to vector<32x32xf32>
    %58 = arith.subf %54, %57 : vector<32x32xf32>
    %59 = arith.cmpf one, %58, %58 : vector<32x32xf32>
    %60 = vector.broadcast %cst_13 : f32 to vector<32x32xf32>
    %61 = arith.addf %54, %60 : vector<32x32xf32>
    %62 = math.absf %58 : vector<32x32xf32>
    %cst_14 = arith.constant 0.000000e+00 : f32
    %63 = vector.broadcast %cst_14 : f32 to vector<32x32xf32>
    %64 = arith.subf %63, %62 : vector<32x32xf32>
    %65 = math.exp %64 : vector<32x32xf32>
    %66 = math.log1p %65 : vector<32x32xf32>
    %67 = arith.addf %56, %66 : vector<32x32xf32>
    %68 = arith.select %59, %61, %67 : vector<32x32xi1>, vector<32x32xf32>
    %69 = tpu.concatenate %53, %68 in 0 : vector<32x32xf32>, vector<32x32xf32> -> vector<64x32xf32>
    %c0_15 = arith.constant 0 : index
    %c128 = arith.constant 128 : index
    %70 = vector.load %arg2[%c0_15, %c128] : memref<32x256xf32, #tpu.memory_space<vmem>>, vector<32x128xf32>
    %cst_16 = arith.constant dense<0.000000e+00> : vector<64x128xf32>
    %71 = tpu.matmul %69, %70, %cst_16 {dimension_numbers = #tpu.dot_dimension_numbers<[1], [0], [0], [1], [0, 0, 1, 1], [], []>} : vector<64x32xf32>, vector<32x128xf32>, vector<64x128xf32> -> vector<64x128xf32>
    %72 = vector.extract_strided_slice %1 {offsets = [4, 0], sizes = [1, 128], strides = [1, 1]} : vector<8x128xf32> to vector<1x128xf32>
    %73 = vector.broadcast %72 : vector<1x128xf32> to vector<64x128xf32>
    %74 = arith.addf %71, %73 : vector<64x128xf32>
    %75 = vector.extract_strided_slice %74 {offsets = [0, 0], sizes = [64, 32], strides = [1, 1]} : vector<64x128xf32> to vector<64x32xf32>
    %cst_17 = arith.constant 0.000000e+00 : f32
    %76 = vector.broadcast %cst_17 : f32 to vector<64x32xf32>
    %77 = arith.maximumf %75, %76 : vector<64x32xf32>
    %78 = vector.broadcast %cst_17 : f32 to vector<64x32xf32>
    %79 = arith.subf %75, %78 : vector<64x32xf32>
    %80 = arith.cmpf one, %79, %79 : vector<64x32xf32>
    %81 = vector.broadcast %cst_17 : f32 to vector<64x32xf32>
    %82 = arith.addf %75, %81 : vector<64x32xf32>
    %83 = math.absf %79 : vector<64x32xf32>
    %cst_18 = arith.constant 0.000000e+00 : f32
    %84 = vector.broadcast %cst_18 : f32 to vector<64x32xf32>
    %85 = arith.subf %84, %83 : vector<64x32xf32>
    %86 = math.exp %85 : vector<64x32xf32>
    %87 = math.log1p %86 : vector<64x32xf32>
    %88 = arith.addf %77, %87 : vector<64x32xf32>
    %89 = arith.select %80, %82, %88 : vector<64x32xi1>, vector<64x32xf32>
    %90 = vector.extract_strided_slice %74 {offsets = [0, 32], sizes = [64, 16], strides = [1, 1]} : vector<64x128xf32> to vector<64x16xf32>
    %91 = vector.extract_strided_slice %74 {offsets = [0, 48], sizes = [64, 16], strides = [1, 1]} : vector<64x128xf32> to vector<64x16xf32>
    %c0_19 = arith.constant 0 : index
    %c0_20 = arith.constant 0 : index
    %92 = vector.load %arg4[%c0_19, %c0_20] : memref<16x32xf32, #tpu.memory_space<vmem>>, vector<16x32xf32>
    %93 = vector.shape_cast %89 : vector<64x32xf32> to vector<4x16x32xf32>
    %94 = vector.shape_cast %69 : vector<64x32xf32> to vector<4x16x32xf32>
    %95 = vector.shape_cast %90 : vector<64x16xf32> to vector<4x16x16xf32>
    %96 = vector.shape_cast %91 : vector<64x16xf32> to vector<4x16x16xf32>
    %97 = vector.shape_cast %93 : vector<4x16x32xf32> to vector<4x16x1x32xf32>
    %98 = vector.shape_cast %92 : vector<16x32xf32> to vector<1x1x16x32xf32>
    %99 = vector.broadcast %97 : vector<4x16x1x32xf32> to vector<4x16x16x32xf32>
    %100 = vector.broadcast %98 : vector<1x1x16x32xf32> to vector<4x16x16x32xf32>
    %101 = arith.mulf %99, %100 : vector<4x16x16x32xf32>
    %102 = math.exp %101 : vector<4x16x16x32xf32>
    %103 = arith.mulf %93, %94 : vector<4x16x32xf32>
    %104 = vector.shape_cast %103 : vector<4x16x32xf32> to vector<4x16x1x32xf32>
    %105 = vector.shape_cast %95 : vector<4x16x16xf32> to vector<4x16x16x1xf32>
    %106 = vector.broadcast %104 : vector<4x16x1x32xf32> to vector<4x16x16x32xf32>
    %107 = vector.broadcast %105 : vector<4x16x16x1xf32> to vector<4x16x16x32xf32>
    %108 = arith.mulf %106, %107 : vector<4x16x16x32xf32>
    %cst_21 = arith.constant 0.000000e+00 : f32
    %109 = vector.broadcast %cst_21 : f32 to vector<4x16x32xf32>
    %110 = vector.extract_strided_slice %102 {offsets = [0, 0, 0, 0], sizes = [4, 1, 16, 32], strides = [1, 1, 1, 1]} : vector<4x16x16x32xf32> to vector<4x1x16x32xf32>
    %111 = vector.shape_cast %110 : vector<4x1x16x32xf32> to vector<4x16x32xf32>
    %112 = arith.mulf %111, %109 : vector<4x16x32xf32>
    %113 = vector.extract_strided_slice %108 {offsets = [0, 0, 0, 0], sizes = [4, 1, 16, 32], strides = [1, 1, 1, 1]} : vector<4x16x16x32xf32> to vector<4x1x16x32xf32>
    %114 = vector.shape_cast %113 : vector<4x1x16x32xf32> to vector<4x16x32xf32>
    %115 = arith.addf %112, %114 : vector<4x16x32xf32>
    %116 = vector.extract_strided_slice %96 {offsets = [0, 0, 0], sizes = [4, 1, 16], strides = [1, 1, 1]} : vector<4x16x16xf32> to vector<4x1x16xf32>
    %117 = vector.shape_cast %116 : vector<4x1x16xf32> to vector<4x16xf32>
    %118 = vector.shape_cast %117 : vector<4x16xf32> to vector<4x16x1xf32>
    %119 = vector.broadcast %118 : vector<4x16x1xf32> to vector<4x16x32xf32>
    %120 = arith.mulf %115, %119 : vector<4x16x32xf32>
    %cst_22 = arith.constant dense<0.000000e+00> : vector<4x32xf32>
    %121 = vector.multi_reduction <add>, %120, %cst_22 [1] : vector<4x16x32xf32> to vector<4x32xf32>
    %122 = vector.extract_strided_slice %102 {offsets = [0, 1, 0, 0], sizes = [4, 1, 16, 32], strides = [1, 1, 1, 1]} : vector<4x16x16x32xf32> to vector<4x1x16x32xf32>
    %123 = vector.shape_cast %122 : vector<4x1x16x32xf32> to vector<4x16x32xf32>
    %124 = arith.mulf %123, %115 : vector<4x16x32xf32>
    %125 = vector.extract_strided_slice %108 {offsets = [0, 1, 0, 0], sizes = [4, 1, 16, 32], strides = [1, 1, 1, 1]} : vector<4x16x16x32xf32> to vector<4x1x16x32xf32>
    %126 = vector.shape_cast %125 : vector<4x1x16x32xf32> to vector<4x16x32xf32>
    %127 = arith.addf %124, %126 : vector<4x16x32xf32>
    %128 = vector.extract_strided_slice %96 {offsets = [0, 1, 0], sizes = [4, 1, 16], strides = [1, 1, 1]} : vector<4x16x16xf32> to vector<4x1x16xf32>
    %129 = vector.shape_cast %128 : vector<4x1x16xf32> to vector<4x16xf32>
    %130 = vector.shape_cast %129 : vector<4x16xf32> to vector<4x16x1xf32>
    %131 = vector.broadcast %130 : vector<4x16x1xf32> to vector<4x16x32xf32>
    %132 = arith.mulf %127, %131 : vector<4x16x32xf32>
    %cst_23 = arith.constant dense<0.000000e+00> : vector<4x32xf32>
    %133 = vector.multi_reduction <add>, %132, %cst_23 [1] : vector<4x16x32xf32> to vector<4x32xf32>
    %134 = vector.extract_strided_slice %102 {offsets = [0, 2, 0, 0], sizes = [4, 1, 16, 32], strides = [1, 1, 1, 1]} : vector<4x16x16x32xf32> to vector<4x1x16x32xf32>
    %135 = vector.shape_cast %134 : vector<4x1x16x32xf32> to vector<4x16x32xf32>
    %136 = arith.mulf %135, %127 : vector<4x16x32xf32>
    %137 = vector.extract_strided_slice %108 {offsets = [0, 2, 0, 0], sizes = [4, 1, 16, 32], strides = [1, 1, 1, 1]} : vector<4x16x16x32xf32> to vector<4x1x16x32xf32>
    %138 = vector.shape_cast %137 : vector<4x1x16x32xf32> to vector<4x16x32xf32>
    %139 = arith.addf %136, %138 : vector<4x16x32xf32>
    %140 = vector.extract_strided_slice %96 {offsets = [0, 2, 0], sizes = [4, 1, 16], strides = [1, 1, 1]} : vector<4x16x16xf32> to vector<4x1x16xf32>
    %141 = vector.shape_cast %140 : vector<4x1x16xf32> to vector<4x16xf32>
    %142 = vector.shape_cast %141 : vector<4x16xf32> to vector<4x16x1xf32>
    %143 = vector.broadcast %142 : vector<4x16x1xf32> to vector<4x16x32xf32>
    %144 = arith.mulf %139, %143 : vector<4x16x32xf32>
    %cst_24 = arith.constant dense<0.000000e+00> : vector<4x32xf32>
    %145 = vector.multi_reduction <add>, %144, %cst_24 [1] : vector<4x16x32xf32> to vector<4x32xf32>
    %146 = vector.extract_strided_slice %102 {offsets = [0, 3, 0, 0], sizes = [4, 1, 16, 32], strides = [1, 1, 1, 1]} : vector<4x16x16x32xf32> to vector<4x1x16x32xf32>
    %147 = vector.shape_cast %146 : vector<4x1x16x32xf32> to vector<4x16x32xf32>
    %148 = arith.mulf %147, %139 : vector<4x16x32xf32>
    %149 = vector.extract_strided_slice %108 {offsets = [0, 3, 0, 0], sizes = [4, 1, 16, 32], strides = [1, 1, 1, 1]} : vector<4x16x16x32xf32> to vector<4x1x16x32xf32>
    %150 = vector.shape_cast %149 : vector<4x1x16x32xf32> to vector<4x16x32xf32>
    %151 = arith.addf %148, %150 : vector<4x16x32xf32>
    %152 = vector.extract_strided_slice %96 {offsets = [0, 3, 0], sizes = [4, 1, 16], strides = [1, 1, 1]} : vector<4x16x16xf32> to vector<4x1x16xf32>
    %153 = vector.shape_cast %152 : vector<4x1x16xf32> to vector<4x16xf32>
    %154 = vector.shape_cast %153 : vector<4x16xf32> to vector<4x16x1xf32>
    %155 = vector.broadcast %154 : vector<4x16x1xf32> to vector<4x16x32xf32>
    %156 = arith.mulf %151, %155 : vector<4x16x32xf32>
    %cst_25 = arith.constant dense<0.000000e+00> : vector<4x32xf32>
    %157 = vector.multi_reduction <add>, %156, %cst_25 [1] : vector<4x16x32xf32> to vector<4x32xf32>
    %158 = vector.extract_strided_slice %102 {offsets = [0, 4, 0, 0], sizes = [4, 1, 16, 32], strides = [1, 1, 1, 1]} : vector<4x16x16x32xf32> to vector<4x1x16x32xf32>
    %159 = vector.shape_cast %158 : vector<4x1x16x32xf32> to vector<4x16x32xf32>
    %160 = arith.mulf %159, %151 : vector<4x16x32xf32>
    %161 = vector.extract_strided_slice %108 {offsets = [0, 4, 0, 0], sizes = [4, 1, 16, 32], strides = [1, 1, 1, 1]} : vector<4x16x16x32xf32> to vector<4x1x16x32xf32>
    %162 = vector.shape_cast %161 : vector<4x1x16x32xf32> to vector<4x16x32xf32>
    %163 = arith.addf %160, %162 : vector<4x16x32xf32>
    %164 = vector.extract_strided_slice %96 {offsets = [0, 4, 0], sizes = [4, 1, 16], strides = [1, 1, 1]} : vector<4x16x16xf32> to vector<4x1x16xf32>
    %165 = vector.shape_cast %164 : vector<4x1x16xf32> to vector<4x16xf32>
    %166 = vector.shape_cast %165 : vector<4x16xf32> to vector<4x16x1xf32>
    %167 = vector.broadcast %166 : vector<4x16x1xf32> to vector<4x16x32xf32>
    %168 = arith.mulf %163, %167 : vector<4x16x32xf32>
    %cst_26 = arith.constant dense<0.000000e+00> : vector<4x32xf32>
    %169 = vector.multi_reduction <add>, %168, %cst_26 [1] : vector<4x16x32xf32> to vector<4x32xf32>
    %170 = vector.extract_strided_slice %102 {offsets = [0, 5, 0, 0], sizes = [4, 1, 16, 32], strides = [1, 1, 1, 1]} : vector<4x16x16x32xf32> to vector<4x1x16x32xf32>
    %171 = vector.shape_cast %170 : vector<4x1x16x32xf32> to vector<4x16x32xf32>
    %172 = arith.mulf %171, %163 : vector<4x16x32xf32>
    %173 = vector.extract_strided_slice %108 {offsets = [0, 5, 0, 0], sizes = [4, 1, 16, 32], strides = [1, 1, 1, 1]} : vector<4x16x16x32xf32> to vector<4x1x16x32xf32>
    %174 = vector.shape_cast %173 : vector<4x1x16x32xf32> to vector<4x16x32xf32>
    %175 = arith.addf %172, %174 : vector<4x16x32xf32>
    %176 = vector.extract_strided_slice %96 {offsets = [0, 5, 0], sizes = [4, 1, 16], strides = [1, 1, 1]} : vector<4x16x16xf32> to vector<4x1x16xf32>
    %177 = vector.shape_cast %176 : vector<4x1x16xf32> to vector<4x16xf32>
    %178 = vector.shape_cast %177 : vector<4x16xf32> to vector<4x16x1xf32>
    %179 = vector.broadcast %178 : vector<4x16x1xf32> to vector<4x16x32xf32>
    %180 = arith.mulf %175, %179 : vector<4x16x32xf32>
    %cst_27 = arith.constant dense<0.000000e+00> : vector<4x32xf32>
    %181 = vector.multi_reduction <add>, %180, %cst_27 [1] : vector<4x16x32xf32> to vector<4x32xf32>
    %182 = vector.extract_strided_slice %102 {offsets = [0, 6, 0, 0], sizes = [4, 1, 16, 32], strides = [1, 1, 1, 1]} : vector<4x16x16x32xf32> to vector<4x1x16x32xf32>
    %183 = vector.shape_cast %182 : vector<4x1x16x32xf32> to vector<4x16x32xf32>
    %184 = arith.mulf %183, %175 : vector<4x16x32xf32>
    %185 = vector.extract_strided_slice %108 {offsets = [0, 6, 0, 0], sizes = [4, 1, 16, 32], strides = [1, 1, 1, 1]} : vector<4x16x16x32xf32> to vector<4x1x16x32xf32>
    %186 = vector.shape_cast %185 : vector<4x1x16x32xf32> to vector<4x16x32xf32>
    %187 = arith.addf %184, %186 : vector<4x16x32xf32>
    %188 = vector.extract_strided_slice %96 {offsets = [0, 6, 0], sizes = [4, 1, 16], strides = [1, 1, 1]} : vector<4x16x16xf32> to vector<4x1x16xf32>
    %189 = vector.shape_cast %188 : vector<4x1x16xf32> to vector<4x16xf32>
    %190 = vector.shape_cast %189 : vector<4x16xf32> to vector<4x16x1xf32>
    %191 = vector.broadcast %190 : vector<4x16x1xf32> to vector<4x16x32xf32>
    %192 = arith.mulf %187, %191 : vector<4x16x32xf32>
    %cst_28 = arith.constant dense<0.000000e+00> : vector<4x32xf32>
    %193 = vector.multi_reduction <add>, %192, %cst_28 [1] : vector<4x16x32xf32> to vector<4x32xf32>
    %194 = vector.extract_strided_slice %102 {offsets = [0, 7, 0, 0], sizes = [4, 1, 16, 32], strides = [1, 1, 1, 1]} : vector<4x16x16x32xf32> to vector<4x1x16x32xf32>
    %195 = vector.shape_cast %194 : vector<4x1x16x32xf32> to vector<4x16x32xf32>
    %196 = arith.mulf %195, %187 : vector<4x16x32xf32>
    %197 = vector.extract_strided_slice %108 {offsets = [0, 7, 0, 0], sizes = [4, 1, 16, 32], strides = [1, 1, 1, 1]} : vector<4x16x16x32xf32> to vector<4x1x16x32xf32>
    %198 = vector.shape_cast %197 : vector<4x1x16x32xf32> to vector<4x16x32xf32>
    %199 = arith.addf %196, %198 : vector<4x16x32xf32>
    %200 = vector.extract_strided_slice %96 {offsets = [0, 7, 0], sizes = [4, 1, 16], strides = [1, 1, 1]} : vector<4x16x16xf32> to vector<4x1x16xf32>
    %201 = vector.shape_cast %200 : vector<4x1x16xf32> to vector<4x16xf32>
    %202 = vector.shape_cast %201 : vector<4x16xf32> to vector<4x16x1xf32>
    %203 = vector.broadcast %202 : vector<4x16x1xf32> to vector<4x16x32xf32>
    %204 = arith.mulf %199, %203 : vector<4x16x32xf32>
    %cst_29 = arith.constant dense<0.000000e+00> : vector<4x32xf32>
    %205 = vector.multi_reduction <add>, %204, %cst_29 [1] : vector<4x16x32xf32> to vector<4x32xf32>
    %206 = vector.extract_strided_slice %102 {offsets = [0, 8, 0, 0], sizes = [4, 1, 16, 32], strides = [1, 1, 1, 1]} : vector<4x16x16x32xf32> to vector<4x1x16x32xf32>
    %207 = vector.shape_cast %206 : vector<4x1x16x32xf32> to vector<4x16x32xf32>
    %208 = arith.mulf %207, %199 : vector<4x16x32xf32>
    %209 = vector.extract_strided_slice %108 {offsets = [0, 8, 0, 0], sizes = [4, 1, 16, 32], strides = [1, 1, 1, 1]} : vector<4x16x16x32xf32> to vector<4x1x16x32xf32>
    %210 = vector.shape_cast %209 : vector<4x1x16x32xf32> to vector<4x16x32xf32>
    %211 = arith.addf %208, %210 : vector<4x16x32xf32>
    %212 = vector.extract_strided_slice %96 {offsets = [0, 8, 0], sizes = [4, 1, 16], strides = [1, 1, 1]} : vector<4x16x16xf32> to vector<4x1x16xf32>
    %213 = vector.shape_cast %212 : vector<4x1x16xf32> to vector<4x16xf32>
    %214 = vector.shape_cast %213 : vector<4x16xf32> to vector<4x16x1xf32>
    %215 = vector.broadcast %214 : vector<4x16x1xf32> to vector<4x16x32xf32>
    %216 = arith.mulf %211, %215 : vector<4x16x32xf32>
    %cst_30 = arith.constant dense<0.000000e+00> : vector<4x32xf32>
    %217 = vector.multi_reduction <add>, %216, %cst_30 [1] : vector<4x16x32xf32> to vector<4x32xf32>
    %218 = vector.extract_strided_slice %102 {offsets = [0, 9, 0, 0], sizes = [4, 1, 16, 32], strides = [1, 1, 1, 1]} : vector<4x16x16x32xf32> to vector<4x1x16x32xf32>
    %219 = vector.shape_cast %218 : vector<4x1x16x32xf32> to vector<4x16x32xf32>
    %220 = arith.mulf %219, %211 : vector<4x16x32xf32>
    %221 = vector.extract_strided_slice %108 {offsets = [0, 9, 0, 0], sizes = [4, 1, 16, 32], strides = [1, 1, 1, 1]} : vector<4x16x16x32xf32> to vector<4x1x16x32xf32>
    %222 = vector.shape_cast %221 : vector<4x1x16x32xf32> to vector<4x16x32xf32>
    %223 = arith.addf %220, %222 : vector<4x16x32xf32>
    %224 = vector.extract_strided_slice %96 {offsets = [0, 9, 0], sizes = [4, 1, 16], strides = [1, 1, 1]} : vector<4x16x16xf32> to vector<4x1x16xf32>
    %225 = vector.shape_cast %224 : vector<4x1x16xf32> to vector<4x16xf32>
    %226 = vector.shape_cast %225 : vector<4x16xf32> to vector<4x16x1xf32>
    %227 = vector.broadcast %226 : vector<4x16x1xf32> to vector<4x16x32xf32>
    %228 = arith.mulf %223, %227 : vector<4x16x32xf32>
    %cst_31 = arith.constant dense<0.000000e+00> : vector<4x32xf32>
    %229 = vector.multi_reduction <add>, %228, %cst_31 [1] : vector<4x16x32xf32> to vector<4x32xf32>
    %230 = vector.extract_strided_slice %102 {offsets = [0, 10, 0, 0], sizes = [4, 1, 16, 32], strides = [1, 1, 1, 1]} : vector<4x16x16x32xf32> to vector<4x1x16x32xf32>
    %231 = vector.shape_cast %230 : vector<4x1x16x32xf32> to vector<4x16x32xf32>
    %232 = arith.mulf %231, %223 : vector<4x16x32xf32>
    %233 = vector.extract_strided_slice %108 {offsets = [0, 10, 0, 0], sizes = [4, 1, 16, 32], strides = [1, 1, 1, 1]} : vector<4x16x16x32xf32> to vector<4x1x16x32xf32>
    %234 = vector.shape_cast %233 : vector<4x1x16x32xf32> to vector<4x16x32xf32>
    %235 = arith.addf %232, %234 : vector<4x16x32xf32>
    %236 = vector.extract_strided_slice %96 {offsets = [0, 10, 0], sizes = [4, 1, 16], strides = [1, 1, 1]} : vector<4x16x16xf32> to vector<4x1x16xf32>
    %237 = vector.shape_cast %236 : vector<4x1x16xf32> to vector<4x16xf32>
    %238 = vector.shape_cast %237 : vector<4x16xf32> to vector<4x16x1xf32>
    %239 = vector.broadcast %238 : vector<4x16x1xf32> to vector<4x16x32xf32>
    %240 = arith.mulf %235, %239 : vector<4x16x32xf32>
    %cst_32 = arith.constant dense<0.000000e+00> : vector<4x32xf32>
    %241 = vector.multi_reduction <add>, %240, %cst_32 [1] : vector<4x16x32xf32> to vector<4x32xf32>
    %242 = vector.extract_strided_slice %102 {offsets = [0, 11, 0, 0], sizes = [4, 1, 16, 32], strides = [1, 1, 1, 1]} : vector<4x16x16x32xf32> to vector<4x1x16x32xf32>
    %243 = vector.shape_cast %242 : vector<4x1x16x32xf32> to vector<4x16x32xf32>
    %244 = arith.mulf %243, %235 : vector<4x16x32xf32>
    %245 = vector.extract_strided_slice %108 {offsets = [0, 11, 0, 0], sizes = [4, 1, 16, 32], strides = [1, 1, 1, 1]} : vector<4x16x16x32xf32> to vector<4x1x16x32xf32>
    %246 = vector.shape_cast %245 : vector<4x1x16x32xf32> to vector<4x16x32xf32>
    %247 = arith.addf %244, %246 : vector<4x16x32xf32>
    %248 = vector.extract_strided_slice %96 {offsets = [0, 11, 0], sizes = [4, 1, 16], strides = [1, 1, 1]} : vector<4x16x16xf32> to vector<4x1x16xf32>
    %249 = vector.shape_cast %248 : vector<4x1x16xf32> to vector<4x16xf32>
    %250 = vector.shape_cast %249 : vector<4x16xf32> to vector<4x16x1xf32>
    %251 = vector.broadcast %250 : vector<4x16x1xf32> to vector<4x16x32xf32>
    %252 = arith.mulf %247, %251 : vector<4x16x32xf32>
    %cst_33 = arith.constant dense<0.000000e+00> : vector<4x32xf32>
    %253 = vector.multi_reduction <add>, %252, %cst_33 [1] : vector<4x16x32xf32> to vector<4x32xf32>
    %254 = vector.extract_strided_slice %102 {offsets = [0, 12, 0, 0], sizes = [4, 1, 16, 32], strides = [1, 1, 1, 1]} : vector<4x16x16x32xf32> to vector<4x1x16x32xf32>
    %255 = vector.shape_cast %254 : vector<4x1x16x32xf32> to vector<4x16x32xf32>
    %256 = arith.mulf %255, %247 : vector<4x16x32xf32>
    %257 = vector.extract_strided_slice %108 {offsets = [0, 12, 0, 0], sizes = [4, 1, 16, 32], strides = [1, 1, 1, 1]} : vector<4x16x16x32xf32> to vector<4x1x16x32xf32>
    %258 = vector.shape_cast %257 : vector<4x1x16x32xf32> to vector<4x16x32xf32>
    %259 = arith.addf %256, %258 : vector<4x16x32xf32>
    %260 = vector.extract_strided_slice %96 {offsets = [0, 12, 0], sizes = [4, 1, 16], strides = [1, 1, 1]} : vector<4x16x16xf32> to vector<4x1x16xf32>
    %261 = vector.shape_cast %260 : vector<4x1x16xf32> to vector<4x16xf32>
    %262 = vector.shape_cast %261 : vector<4x16xf32> to vector<4x16x1xf32>
    %263 = vector.broadcast %262 : vector<4x16x1xf32> to vector<4x16x32xf32>
    %264 = arith.mulf %259, %263 : vector<4x16x32xf32>
    %cst_34 = arith.constant dense<0.000000e+00> : vector<4x32xf32>
    %265 = vector.multi_reduction <add>, %264, %cst_34 [1] : vector<4x16x32xf32> to vector<4x32xf32>
    %266 = vector.extract_strided_slice %102 {offsets = [0, 13, 0, 0], sizes = [4, 1, 16, 32], strides = [1, 1, 1, 1]} : vector<4x16x16x32xf32> to vector<4x1x16x32xf32>
    %267 = vector.shape_cast %266 : vector<4x1x16x32xf32> to vector<4x16x32xf32>
    %268 = arith.mulf %267, %259 : vector<4x16x32xf32>
    %269 = vector.extract_strided_slice %108 {offsets = [0, 13, 0, 0], sizes = [4, 1, 16, 32], strides = [1, 1, 1, 1]} : vector<4x16x16x32xf32> to vector<4x1x16x32xf32>
    %270 = vector.shape_cast %269 : vector<4x1x16x32xf32> to vector<4x16x32xf32>
    %271 = arith.addf %268, %270 : vector<4x16x32xf32>
    %272 = vector.extract_strided_slice %96 {offsets = [0, 13, 0], sizes = [4, 1, 16], strides = [1, 1, 1]} : vector<4x16x16xf32> to vector<4x1x16xf32>
    %273 = vector.shape_cast %272 : vector<4x1x16xf32> to vector<4x16xf32>
    %274 = vector.shape_cast %273 : vector<4x16xf32> to vector<4x16x1xf32>
    %275 = vector.broadcast %274 : vector<4x16x1xf32> to vector<4x16x32xf32>
    %276 = arith.mulf %271, %275 : vector<4x16x32xf32>
    %cst_35 = arith.constant dense<0.000000e+00> : vector<4x32xf32>
    %277 = vector.multi_reduction <add>, %276, %cst_35 [1] : vector<4x16x32xf32> to vector<4x32xf32>
    %278 = vector.extract_strided_slice %102 {offsets = [0, 14, 0, 0], sizes = [4, 1, 16, 32], strides = [1, 1, 1, 1]} : vector<4x16x16x32xf32> to vector<4x1x16x32xf32>
    %279 = vector.shape_cast %278 : vector<4x1x16x32xf32> to vector<4x16x32xf32>
    %280 = arith.mulf %279, %271 : vector<4x16x32xf32>
    %281 = vector.extract_strided_slice %108 {offsets = [0, 14, 0, 0], sizes = [4, 1, 16, 32], strides = [1, 1, 1, 1]} : vector<4x16x16x32xf32> to vector<4x1x16x32xf32>
    %282 = vector.shape_cast %281 : vector<4x1x16x32xf32> to vector<4x16x32xf32>
    %283 = arith.addf %280, %282 : vector<4x16x32xf32>
    %284 = vector.extract_strided_slice %96 {offsets = [0, 14, 0], sizes = [4, 1, 16], strides = [1, 1, 1]} : vector<4x16x16xf32> to vector<4x1x16xf32>
    %285 = vector.shape_cast %284 : vector<4x1x16xf32> to vector<4x16xf32>
    %286 = vector.shape_cast %285 : vector<4x16xf32> to vector<4x16x1xf32>
    %287 = vector.broadcast %286 : vector<4x16x1xf32> to vector<4x16x32xf32>
    %288 = arith.mulf %283, %287 : vector<4x16x32xf32>
    %cst_36 = arith.constant dense<0.000000e+00> : vector<4x32xf32>
    %289 = vector.multi_reduction <add>, %288, %cst_36 [1] : vector<4x16x32xf32> to vector<4x32xf32>
    %290 = vector.extract_strided_slice %102 {offsets = [0, 15, 0, 0], sizes = [4, 1, 16, 32], strides = [1, 1, 1, 1]} : vector<4x16x16x32xf32> to vector<4x1x16x32xf32>
    %291 = vector.shape_cast %290 : vector<4x1x16x32xf32> to vector<4x16x32xf32>
    %292 = arith.mulf %291, %283 : vector<4x16x32xf32>
    %293 = vector.extract_strided_slice %108 {offsets = [0, 15, 0, 0], sizes = [4, 1, 16, 32], strides = [1, 1, 1, 1]} : vector<4x16x16x32xf32> to vector<4x1x16x32xf32>
    %294 = vector.shape_cast %293 : vector<4x1x16x32xf32> to vector<4x16x32xf32>
    %295 = arith.addf %292, %294 : vector<4x16x32xf32>
    %296 = vector.extract_strided_slice %96 {offsets = [0, 15, 0], sizes = [4, 1, 16], strides = [1, 1, 1]} : vector<4x16x16xf32> to vector<4x1x16xf32>
    %297 = vector.shape_cast %296 : vector<4x1x16xf32> to vector<4x16xf32>
    %298 = vector.shape_cast %297 : vector<4x16xf32> to vector<4x16x1xf32>
    %299 = vector.broadcast %298 : vector<4x16x1xf32> to vector<4x16x32xf32>
    %300 = arith.mulf %295, %299 : vector<4x16x32xf32>
    %cst_37 = arith.constant dense<0.000000e+00> : vector<4x32xf32>
    %301 = vector.multi_reduction <add>, %300, %cst_37 [1] : vector<4x16x32xf32> to vector<4x32xf32>
    %302 = vector.shape_cast %121 : vector<4x32xf32> to vector<4x1x32xf32>
    %303 = vector.shape_cast %133 : vector<4x32xf32> to vector<4x1x32xf32>
    %304 = vector.shape_cast %145 : vector<4x32xf32> to vector<4x1x32xf32>
    %305 = vector.shape_cast %157 : vector<4x32xf32> to vector<4x1x32xf32>
    %306 = vector.shape_cast %169 : vector<4x32xf32> to vector<4x1x32xf32>
    %307 = vector.shape_cast %181 : vector<4x32xf32> to vector<4x1x32xf32>
    %308 = vector.shape_cast %193 : vector<4x32xf32> to vector<4x1x32xf32>
    %309 = vector.shape_cast %205 : vector<4x32xf32> to vector<4x1x32xf32>
    %310 = vector.shape_cast %217 : vector<4x32xf32> to vector<4x1x32xf32>
    %311 = vector.shape_cast %229 : vector<4x32xf32> to vector<4x1x32xf32>
    %312 = vector.shape_cast %241 : vector<4x32xf32> to vector<4x1x32xf32>
    %313 = vector.shape_cast %253 : vector<4x32xf32> to vector<4x1x32xf32>
    %314 = vector.shape_cast %265 : vector<4x32xf32> to vector<4x1x32xf32>
    %315 = vector.shape_cast %277 : vector<4x32xf32> to vector<4x1x32xf32>
    %316 = vector.shape_cast %289 : vector<4x32xf32> to vector<4x1x32xf32>
    %317 = vector.shape_cast %301 : vector<4x32xf32> to vector<4x1x32xf32>
    %318 = tpu.concatenate %302, %303, %304, %305, %306, %307, %308, %309, %310, %311, %312, %313, %314, %315, %316, %317 in 1 : vector<4x1x32xf32>, vector<4x1x32xf32>, vector<4x1x32xf32>, vector<4x1x32xf32>, vector<4x1x32xf32>, vector<4x1x32xf32>, vector<4x1x32xf32>, vector<4x1x32xf32>, vector<4x1x32xf32>, vector<4x1x32xf32>, vector<4x1x32xf32>, vector<4x1x32xf32>, vector<4x1x32xf32>, vector<4x1x32xf32>, vector<4x1x32xf32>, vector<4x1x32xf32> -> vector<4x16x32xf32>
    %319 = vector.extract_strided_slice %318 {offsets = [0, 0, 0], sizes = [2, 16, 32], strides = [1, 1, 1]} : vector<4x16x32xf32> to vector<2x16x32xf32>
    %320 = vector.extract_strided_slice %318 {offsets = [2, 0, 0], sizes = [2, 16, 32], strides = [1, 1, 1]} : vector<4x16x32xf32> to vector<2x16x32xf32>
    %321 = arith.addf %319, %320 : vector<2x16x32xf32>
    %322 = vector.shape_cast %321 : vector<2x16x32xf32> to vector<32x32xf32>
    %323 = arith.addf %53, %68 : vector<32x32xf32>
    %324 = vector.broadcast %4 : vector<1x32xf32> to vector<32x32xf32>
    %325 = arith.mulf %323, %324 : vector<32x32xf32>
    %326 = arith.addf %322, %325 : vector<32x32xf32>
    %327 = arith.mulf %326, %38 : vector<32x32xf32>
    %328 = arith.addf %327, %0 : vector<32x32xf32>
    %c0_38 = arith.constant 0 : index
    %c0_39 = arith.constant 0 : index
    %329 = vector.load %arg5[%c0_38, %c0_39] : memref<32x32xf32, #tpu.memory_space<vmem>>, vector<32x32xf32>
    tpu.vector_store %arg5[%c0_38, %c0_39], %328 {strides = array<i32>} : memref<32x32xf32, #tpu.memory_space<vmem>>, vector<32x32xf32>,
    return
  }
  func.func @transform_0(%arg0: i32) -> (i32, i32) {
    %c0_i32 = arith.constant 0 : i32
    %c0_i32_0 = arith.constant 0 : i32
    return %arg0, %c0_i32 : i32, i32
  }
  func.func @transform_1(%arg0: i32) -> (i32, i32) {
    %c0_i32 = arith.constant 0 : i32
    %c0_i32_0 = arith.constant 0 : i32
    %c0_i32_1 = arith.constant 0 : i32
    return %c0_i32, %c0_i32_0 : i32, i32
  }
  func.func @transform_2(%arg0: i32) -> (i32, i32) {
    %c0_i32 = arith.constant 0 : i32
    %c0_i32_0 = arith.constant 0 : i32
    %c0_i32_1 = arith.constant 0 : i32
    return %c0_i32, %c0_i32_0 : i32, i32
  }
  func.func @transform_3(%arg0: i32) -> (i32, i32) {
    %c0_i32 = arith.constant 0 : i32
    %c0_i32_0 = arith.constant 0 : i32
    %c0_i32_1 = arith.constant 0 : i32
    return %c0_i32, %c0_i32_0 : i32, i32
  }
  func.func @transform_4(%arg0: i32) -> (i32, i32) {
    %c0_i32 = arith.constant 0 : i32
    %c0_i32_0 = arith.constant 0 : i32
    return %arg0, %c0_i32 : i32, i32
  }
}

</mosaic_0001>

<llo_original>
// kernel: tpu_custom_call.1
$region0: #{tpu_custom_call.1}
  #allocation0 [shape = 'u32[]', space=smem, size = 0x4, offset = 0x4, fixed_abs, tag = 'smem constant byte address 0x4 - core index']
  #allocation1 [shape = 'u32[144,128]{1,0:T(1,128)}', space=vmem, size = 0x12000, scoped, tag = 'internal scratch']
  %s0 = inlined_call_operand.hbm [shape: f32[32,32], index: 0, kind: input, shape index: {}]
  %s1 = inlined_call_operand.hbm [shape: f32[32,256], index: 1, kind: input, shape index: {}]
  %s2 = inlined_call_operand.hbm [shape: f32[8,128], index: 2, kind: input, shape index: {}]
  %s3 = inlined_call_operand.hbm [shape: f32[16,32], index: 3, kind: input, shape index: {}]
  %s4 = inlined_call_operand.hbm [shape: f32[32,32], index: 4, kind: output, shape index: {}]
  %s5 = sld [smem:[#allocation0]]
  $region42: #{tpu_custom_call.1} parent=0
    _
  %s7 = ssub.s32 1, %s5
  %s8 = scalar_select 0, %s7, %s5
  $region1: #{tpu_custom_call.1} parent=0
    #allocation2 [shape = 'u8[16384]{0}', space=vmem, size = 0x4000, scoped, tag = 'input window, operand 0, single buffered']
    #allocation3 [shape = 's32[1]{0}', space=sflag, size = 0x4, scoped, tag = 'scoped memory for tpu_custom_call.1']
    #allocation4 [shape = 's32[1]{0}', space=sflag, size = 0x4, scoped, tag = 'scoped memory for tpu_custom_call.1']
    #allocation5 [shape = 'u8[32768]{0}', space=vmem, size = 0x8000, scoped, tag = 'input window, operand 1, single buffered']
    #allocation6 [shape = 's32[1]{0}', space=sflag, size = 0x4, scoped, tag = 'scoped memory for tpu_custom_call.1']
    #allocation7 [shape = 'u8[4096]{0}', space=vmem, size = 0x1000, scoped, tag = 'input window, operand 2, single buffered']
    #allocation8 [shape = 'u8[8192]{0}', space=vmem, size = 0x2000, scoped, tag = 'input window, operand 3, single buffered']
    #allocation9 [shape = 's32[1]{0}', space=sflag, size = 0x4, scoped, tag = 'scoped memory for tpu_custom_call.1']
    #allocation10 [shape = 'u8[16384]{0}', space=vmem, size = 0x4000, scoped, tag = 'output window, operand 0, single buffered']
    %9 = vsyncpa [#allocation3], 0
    %10 = vsyncpa [#allocation6], 0
    %11 = vsyncpa [#allocation9], 0
    %12 = vsyncpa [#allocation4], 0
    // Predicated region
    $region2: #{tpu_custom_call.1} parent=1 // pred_check
      _
    $region3: #{tpu_custom_call.1} parent=1 // pred_check_branch
      %14 = sbr.rel (0) target = $region5
    $region4: #{tpu_custom_call.1} parent=1 // pred_region
      %s16 = ssub.s32 512, 512
      %17 = vsyncadd [#allocation3], %s16
      %s18 = sshll.u32 [#allocation2], 4
      %s19 = int_to_ptr.vmem [resolvable:$true] %s18
      %24 = dma.hbm_to_vmem [thread:$0]  %s0, 512, %s19, [#allocation3], 128, 128, 8
    $region5: #{tpu_custom_call.1} parent=1 // pred_fallthru
      _
    // Predicated region
    $region6: #{tpu_custom_call.1} parent=1 // pred_check
      _
    $region7: #{tpu_custom_call.1} parent=1 // pred_check_branch
      %26 = sbr.rel (0) target = $region9
    $region8: #{tpu_custom_call.1} parent=1 // pred_region
      %s28 = ssub.s32 1024, 1024
      %29 = vsyncadd [#allocation6], %s28
      %s30 = sshll.u32 [#allocation5], 4
      %s31 = int_to_ptr.vmem [resolvable:$true] %s30
      %36 = dma.hbm_to_vmem [thread:$0]  %s1, 1024, %s31, [#allocation6], 256, 256, 16
    $region9: #{tpu_custom_call.1} parent=1 // pred_fallthru
      _
    // Predicated region
    $region10: #{tpu_custom_call.1} parent=1 // pred_check
      _
    $region11: #{tpu_custom_call.1} parent=1 // pred_check_branch
      %38 = sbr.rel (0) target = $region13
    $region12: #{tpu_custom_call.1} parent=1 // pred_region
      %s40 = ssub.s32 128, 128
      %41 = vsyncadd [#allocation6], %s40
      %s43 = sshll.u32 [#allocation7], 4
      %s44 = int_to_ptr.vmem [resolvable:$true] %s43
      %46 = dma.hbm_to_vmem [thread:$0]  %s2, 128, %s44, [#allocation6]
    $region13: #{tpu_custom_call.1} parent=1 // pred_fallthru
      _
    // Predicated region
    $region14: #{tpu_custom_call.1} parent=1 // pred_check
      _
    $region15: #{tpu_custom_call.1} parent=1 // pred_check_branch
      %48 = sbr.rel (0) target = $region17
    $region16: #{tpu_custom_call.1} parent=1 // pred_region
      %s50 = ssub.s32 256, 256
      %51 = vsyncadd [#allocation9], %s50
      %s52 = sshll.u32 [#allocation8], 4
      %s53 = int_to_ptr.vmem [resolvable:$true] %s52
      %58 = dma.hbm_to_vmem [thread:$0]  %s3, 256, %s53, [#allocation9], 128, 128, 8
    $region17: #{tpu_custom_call.1} parent=1 // pred_fallthru
      _
    // Predicated region
    $region18: #{tpu_custom_call.1} parent=1 // pred_check
      _
    $region19: #{tpu_custom_call.1} parent=1 // pred_check_branch
      %60 = sbr.rel (0) target = $region21
    $region20: #{tpu_custom_call.1} parent=1 // pred_region
      %61 = dma.done [#allocation3], 512
    $region21: #{tpu_custom_call.1} parent=1 // pred_fallthru
      _
    // Predicated region
    $region22: #{tpu_custom_call.1} parent=1 // pred_check
      _
    $region23: #{tpu_custom_call.1} parent=1 // pred_check_branch
      %63 = sbr.rel (0) target = $region25
    $region24: #{tpu_custom_call.1} parent=1 // pred_region
      %64 = dma.done [#allocation6], 1024
    $region25: #{tpu_custom_call.1} parent=1 // pred_fallthru
      _
    // Predicated region
    $region26: #{tpu_custom_call.1} parent=1 // pred_check
      _
    $region27: #{tpu_custom_call.1} parent=1 // pred_check_branch
      %66 = sbr.rel (0) target = $region29
    $region28: #{tpu_custom_call.1} parent=1 // pred_region
      %67 = dma.done [#allocation6], 128
    $region29: #{tpu_custom_call.1} parent=1 // pred_fallthru
      _
    // Predicated region
    $region30: #{tpu_custom_call.1} parent=1 // pred_check
      _
    $region31: #{tpu_custom_call.1} parent=1 // pred_check_branch
      %69 = sbr.rel (0) target = $region33
    $region32: #{tpu_custom_call.1} parent=1 // pred_region
      %70 = dma.done [#allocation9], 256
    $region33: #{tpu_custom_call.1} parent=1 // pred_fallthru
      _
    %v71 = vld [vmem:[#allocation2] sm:$0xff]
    %v72 = vld [vmem:[#allocation2 + $0x8] sm:$0xff]
    %v73 = vld [vmem:[#allocation2 + $0x10] sm:$0xff]
    %v74 = vld [vmem:[#allocation2 + $0x18] sm:$0xff]
    %v75 = vld [vmem:[#allocation7] sm:$0xff]
    %vm76 = vcmask 261120
    %v77 = vsel %vm76, %v71, 0.0
    %78 = vadd.xlane.f32.xlu0 %v77
    %v79 = vpop.xlane.xlu0 %78
    %v80 = vsel %vm76, %v72, 0.0
    %81 = vadd.xlane.f32.xlu0 %v80
    %v82 = vpop.xlane.xlu0 %81
    %v83 = vsel %vm76, %v73, 0.0
    %84 = vadd.xlane.f32.xlu0 %v83
    %v85 = vpop.xlane.xlu0 %84
    %v86 = vsel %vm76, %v74, 0.0
    %87 = vadd.xlane.f32.xlu0 %v86
    %v88 = vpop.xlane.xlu0 %87
    %v89 = vrcp.pop 32.0
    %v90 = vmul.f32 %v79, %v89
    %v91 = vmul.f32 %v82, %v89
    %v92 = vmul.f32 %v85, %v89
    %v93 = vmul.f32 %v88, %v89
    %v94 = vsub.f32 %v71, %v90
    %v95 = vsub.f32 %v72, %v91
    %v96 = vsub.f32 %v73, %v92
    %v97 = vsub.f32 %v74, %v93
    %v98 = vmul.f32 %v94, %v94
    %v99 = vmul.f32 %v95, %v95
    %v100 = vmul.f32 %v96, %v96
    %v101 = vmul.f32 %v97, %v97
    %v102 = vsel %vm76, %v98, 0.0
    %103 = vadd.xlane.f32.xlu0 %v102
    %v104 = vpop.xlane.xlu0 %103
    %v105 = vsel %vm76, %v99, 0.0
    %106 = vadd.xlane.f32.xlu0 %v105
    %v107 = vpop.xlane.xlu0 %106
    %v108 = vsel %vm76, %v100, 0.0
    %109 = vadd.xlane.f32.xlu0 %v108
    %v110 = vpop.xlane.xlu0 %109
    %v111 = vsel %vm76, %v101, 0.0
    %112 = vadd.xlane.f32.xlu0 %v111
    %v113 = vpop.xlane.xlu0 %112
    %v114 = vmul.f32 %v104, %v89
    %v115 = vmul.f32 %v107, %v89
    %v116 = vmul.f32 %v110, %v89
    %v117 = vmul.f32 %v113, %v89
    %v118 = vadd.f32 %v114, 1e-05
    %v119 = vadd.f32 %v115, 1e-05
    %v120 = vadd.f32 %v116, 1e-05
    %v121 = vadd.f32 %v117, 1e-05
    %v122 = vrsqrt.pop %v118
    %v123 = vrsqrt.pop %v119
    %v124 = vrsqrt.pop %v120
    %v125 = vrsqrt.pop %v121
    %v126 = vmul.f32 %v94, %v122
    %v127 = vmul.f32 %v95, %v123
    %v128 = vmul.f32 %v96, %v124
    %v129 = vmul.f32 %v97, %v125
    %v130 = vlaneseq
    %v131 = vshrl.u32 %v130, 7
    %v132 = vsub.s32 0, %v131
    %v133 = vrot.slane %v75, %v132
    %v134 = vmul.f32 %v126, %v133
    %v135 = vmul.f32 %v127, %v133
    %v136 = vmul.f32 %v128, %v133
    %v137 = vmul.f32 %v129, %v133
    %v138 = vlaneseq
    %v139 = vshrl.u32 %v138, 7
    %v140 = vsub.s32 1, %v139
    %v141 = vrot.slane %v75, %v140
    %v142 = vadd.f32 %v134, %v141
    %v143 = vadd.f32 %v135, %v141
    %v144 = vadd.f32 %v136, %v141
    %v145 = vadd.f32 %v137, %v141
    %v146 = vld [vmem:[#allocation5] sm:$0xff]
    %v147 = vld [vmem:[#allocation5 + $0x10] sm:$0xff]
    %v148 = vld [vmem:[#allocation5 + $0x20] sm:$0xff]
    %v149 = vld [vmem:[#allocation5 + $0x30] sm:$0xff]
    %v150 = vlaneseq
    %v151 = vshrl.u32 %v150, 7
    %v152 = vsub.s32 3, %v151
    %v153 = vrot.slane %v75, %v152
    %v155 = vsel %vm76, %v142, 0
    %v158 = vsel %vm76, %v143, 0
    %v161 = vsel %vm76, %v144, 0
    %v164 = vsel %vm76, %v145, 0
    %166 = vmatprep.subr.mxu0 0.0
    %167 = vmatpush1.msra.mxu0 %v146
    %168 = vmatprep.subr.mxu0 0.0
    %169 = vmatpush1.msra.mxu0 %v147
    %170 = vmatprep.subr.mxu0 0.0
    %171 = vmatpush1.msra.mxu0 %v148
    %172 = vmatprep.subr.mxu0 0.0
    %173 = vmatpush1.msra.mxu0 %v149
    %174 = vmatprep.subr.mxu0 0.0
    %175 = vmatpush1.msra.mxu0 0.0
    %176 = vmatprep.subr.mxu0 0.0
    %177 = vmatpush1.msra.mxu0 0.0
    %178 = vmatprep.subr.mxu0 0.0
    %179 = vmatpush1.msra.mxu0 0.0
    %180 = vmatprep.subr.mxu0 0.0
    %181 = vmatpush1.msra.mxu0 0.0
    %182 = vmatprep.subr.mxu0 0.0
    %183 = vmatpush1.msra.mxu0 0.0
    %184 = vmatprep.subr.mxu0 0.0
    %185 = vmatpush1.msra.mxu0 0.0
    %186 = vmatprep.subr.mxu0 0.0
    %187 = vmatpush1.msra.mxu0 0.0
    %188 = vmatprep.subr.mxu0 0.0
    %189 = vmatpush1.msra.mxu0 0.0
    %190 = vmatprep.subr.mxu0 0.0
    %191 = vmatpush1.msra.mxu0 0.0
    %192 = vmatprep.subr.mxu0 0.0
    %193 = vmatpush1.msra.mxu0 0.0
    %194 = vmatprep.subr.mxu0 0.0
    %195 = vmatpush1.msra.mxu0 0.0
    %196 = vmatprep.subr.mxu0 0.0
    %197 = vmatpush1.msra.mxu0 0.0
    %198 = vmatprep.subr.mxu0 0.0
    %199 = vmatpush1.msra.mxu0 0.0
    %200 = vmatprep.subr.mxu0 0.0
    %201 = vmatpush1.msra.mxu0 0.0
    %202 = vmatprep.subr.mxu0 0.0
    %203 = vmatpush1.msra.mxu0 0.0
    %204 = vmatprep.subr.mxu0 0.0
    %205 = vmatpush1.msra.mxu0 0.0
    %206 = vmatprep.subr.mxu0 0.0
    %207 = vmatpush1.msra.mxu0 0.0
    %208 = vmatprep.subr.mxu0 0.0
    %209 = vmatpush1.msra.mxu0 0.0
    %210 = vmatprep.subr.mxu0 0.0
    %211 = vmatpush1.msra.mxu0 0.0
    %212 = vmatprep.subr.mxu0 0.0
    %213 = vmatpush1.msra.mxu0 0.0
    %214 = vmatprep.subr.mxu0 0.0
    %215 = vmatpush1.msra.mxu0 0.0
    %216 = vmatprep.subr.mxu0 0.0
    %217 = vmatpush1.msra.mxu0 0.0
    %218 = vmatprep.subr.mxu0 0.0
    %219 = vmatpush1.msra.mxu0 0.0
    %220 = vmatprep.subr.mxu0 0.0
    %221 = vmatpush1.msra.mxu0 0.0
    %222 = vmatprep.subr.mxu0 0.0
    %223 = vmatpush1.msra.mxu0 0.0
    %224 = vmatprep.subr.mxu0 0.0
    %225 = vmatpush1.msra.mxu0 0.0
    %226 = vmatprep.subr.mxu0 0.0
    %227 = vmatpush1.msra.mxu0 0.0
    %228 = vmatprep.subr.mxu0 0.0
    %229 = vmatpush1.msra.mxu0 0.0
    %230 = vmatprep.mubr.f32.mxu0 0.0
    %231 = vmatmul.mubr.f32.gmra.mrb[0].mxu0 %v155
    %v232 = vpop.f32.mrb[0].mxu0
    %v233 = vadd.f32 %v153, %v232
    %v234 = vpop.f32.mrb[0].mxu0
    %235 = vmatprep.mubr.f32.mxu0 0.0
    %236 = vmatmul.mubr.f32.gmra.mrb[0].mxu0 %v158
    %v237 = vpop.f32.mrb[0].mxu0
    %v238 = vadd.f32 %v153, %v237
    %v239 = vpop.f32.mrb[0].mxu0
    %240 = vmatprep.mubr.f32.mxu0 0.0
    %241 = vmatmul.mubr.f32.gmra.mrb[0].mxu0 %v161
    %v242 = vpop.f32.mrb[0].mxu0
    %v243 = vadd.f32 %v153, %v242
    %v244 = vpop.f32.mrb[0].mxu0
    %245 = vmatprep.mubr.f32.mxu0 0.0
    %246 = vmatmul.mubr.f32.gmra.mrb[0].mxu0 %v164
    %v247 = vpop.f32.mrb[0].mxu0
    %v248 = vadd.f32 %v153, %v247
    %v249 = vpop.f32.mrb[0].mxu0
    %250 = vdwg.mxu0
    %v251 = vxor.u32 %v233, 2147483648
    %v252 = vxor.u32 %v238, 2147483648
    %v253 = vxor.u32 %v243, 2147483648
    %v254 = vxor.u32 %v248, 2147483648
    %v255 = vmul.f32 %v251, 1.442695
    %v256 = vpow.pop %v255
    %v257 = vmul.f32 %v252, 1.442695
    %v258 = vpow.pop %v257
    %v259 = vmul.f32 %v253, 1.442695
    %v260 = vpow.pop %v259
    %v261 = vmul.f32 %v254, 1.442695
    %v262 = vpow.pop %v261
    %v263 = vadd.f32 %v256, 1.0
    %v264 = vadd.f32 %v258, 1.0
    %v265 = vadd.f32 %v260, 1.0
    %v266 = vadd.f32 %v262, 1.0
    %v267 = vrcp.pop %v263
    %v268 = vmul.f32 1.0, %v267
    %v269 = vrcp.pop %v264
    %v270 = vmul.f32 1.0, %v269
    %v271 = vrcp.pop %v265
    %v272 = vmul.f32 1.0, %v271
    %v273 = vrcp.pop %v266
    %v274 = vmul.f32 1.0, %v273
    %v275 = vmul.f32 %v233, %v268
    %v276 = vmul.f32 %v238, %v270
    %v277 = vmul.f32 %v243, %v272
    %v278 = vmul.f32 %v248, %v274
    %v279 = vmax.f32 %v233, 0.0
    %v280 = vmax.f32 %v238, 0.0
    %v281 = vmax.f32 %v243, 0.0
    %v282 = vmax.f32 %v248, 0.0
    %vm283 = vcmp.ne.f32.partialorder %v233, %v233
    %vm284 = vcmp.ne.f32.partialorder %v238, %v238
    %vm285 = vcmp.ne.f32.partialorder %v243, %v243
    %vm286 = vcmp.ne.f32.partialorder %v248, %v248
    %v287 = vadd.f32 %v233, 0.0
    %v288 = vadd.f32 %v238, 0.0
    %v289 = vadd.f32 %v243, 0.0
    %v290 = vadd.f32 %v248, 0.0
    %v291 = vand.u32 2147483647, %v233
    %v292 = vand.u32 2147483647, %v238
    %v293 = vand.u32 2147483647, %v243
    %v294 = vand.u32 2147483647, %v248
    %v295 = vsub.f32 0.0, %v291
    %v296 = vsub.f32 0.0, %v292
    %v297 = vsub.f32 0.0, %v293
    %v298 = vsub.f32 0.0, %v294
    %v299 = vmul.f32 %v295, 1.442695
    %v300 = vpow.pop %v299
    %v301 = vmul.f32 %v296, 1.442695
    %v302 = vpow.pop %v301
    %v303 = vmul.f32 %v297, 1.442695
    %v304 = vpow.pop %v303
    %v305 = vmul.f32 %v298, 1.442695
    %v306 = vpow.pop %v305
    %v307 = vadd.f32 %v300, 1.0
    %v308 = vlog2.pop %v307
    %v309 = vmul.f32 %v308, 0.6931472
    %v310 = vmul.f32 -0.5, %v300
    %v311 = vadd.f32 %v310, 1.0
    %v312 = vmul.f32 %v311, %v300
    %v313 = vand.u32 2147483647, %v300
    %vm314 = vcmp.lt.f32.partialorder %v313, 0.0004427343
    %v315 = vsel %vm314, %v312, %v309
    %v316 = vadd.f32 %v302, 1.0
    %v317 = vlog2.pop %v316
    %v318 = vmul.f32 %v317, 0.6931472
    %v319 = vmul.f32 -0.5, %v302
    %v320 = vadd.f32 %v319, 1.0
    %v321 = vmul.f32 %v320, %v302
    %v322 = vand.u32 2147483647, %v302
    %vm323 = vcmp.lt.f32.partialorder %v322, 0.0004427343
    %v324 = vsel %vm323, %v321, %v318
    %v325 = vadd.f32 %v304, 1.0
    %v326 = vlog2.pop %v325
    %v327 = vmul.f32 %v326, 0.6931472
    %v328 = vmul.f32 -0.5, %v304
    %v329 = vadd.f32 %v328, 1.0
    %v330 = vmul.f32 %v329, %v304
    %v331 = vand.u32 2147483647, %v304
    %vm332 = vcmp.lt.f32.partialorder %v331, 0.0004427343
    %v333 = vsel %vm332, %v330, %v327
    %v334 = vadd.f32 %v306, 1.0
    %v335 = vlog2.pop %v334
    %v336 = vmul.f32 %v335, 0.6931472
    %v337 = vmul.f32 -0.5, %v306
    %v338 = vadd.f32 %v337, 1.0
    %v339 = vmul.f32 %v338, %v306
    %v340 = vand.u32 2147483647, %v306
    %vm341 = vcmp.lt.f32.partialorder %v340, 0.0004427343
    %v342 = vsel %vm341, %v339, %v336
    %v343 = vadd.f32 %v279, %v315
    %v344 = vadd.f32 %v280, %v324
    %v345 = vadd.f32 %v281, %v333
    %v346 = vadd.f32 %v282, %v342
    %v347 = vsel %vm283, %v287, %v343
    %v348 = vsel %vm284, %v288, %v344
    %v349 = vsel %vm285, %v289, %v345
    %v350 = vsel %vm286, %v290, %v346
    %355 = vrot.lane.b32.xlu0 %v347, 96
    %v356 = vpop.permute.xlu0 %355
    %357 = vrot.lane.b32.xlu0 %v348, 96
    %v358 = vpop.permute.xlu0 %357
    %359 = vrot.lane.b32.xlu0 %v349, 96
    %v360 = vpop.permute.xlu0 %359
    %361 = vrot.lane.b32.xlu0 %v350, 96
    %v362 = vpop.permute.xlu0 %361
    %v363 = vld [vmem:[#allocation5 + $0x8] sm:$0xff]
    %v364 = vld [vmem:[#allocation5 + $0x18] sm:$0xff]
    %v365 = vld [vmem:[#allocation5 + $0x28] sm:$0xff]
    %v366 = vld [vmem:[#allocation5 + $0x38] sm:$0xff]
    %v367 = vlaneseq
    %v368 = vshrl.u32 %v367, 7
    %v369 = vsub.s32 4, %v368
    %v370 = vrot.slane %v75, %v369
    %371 = vrot.lane.b32.xlu0 %v356, 96
    %v372 = vpop.permute.xlu0 %371
    %373 = vrot.lane.b32.xlu0 %v358, 96
    %v374 = vpop.permute.xlu0 %373
    %375 = vrot.lane.b32.xlu0 %v360, 96
    %v376 = vpop.permute.xlu0 %375
    %377 = vrot.lane.b32.xlu0 %v362, 96
    %v378 = vpop.permute.xlu0 %377
    %v379 = vsel %vm76, %v356, 0
    %v381 = vsel %vm76, %v358, 0
    %v383 = vsel %vm76, %v360, 0
    %v385 = vsel %vm76, %v362, 0
    %v387 = vsel %vm76, %v372, 0
    %v389 = vsel %vm76, %v374, 0
    %v391 = vsel %vm76, %v376, 0
    %v393 = vsel %vm76, %v378, 0
    %395 = vmatprep.subr.mxu0 0.0
    %396 = vmatpush1.msra.mxu0 %v363
    %397 = vmatprep.subr.mxu0 0.0
    %398 = vmatpush1.msra.mxu0 %v364
    %399 = vmatprep.subr.mxu0 0.0
    %400 = vmatpush1.msra.mxu0 %v365
    %401 = vmatprep.subr.mxu0 0.0
    %402 = vmatpush1.msra.mxu0 %v366
    %403 = vmatprep.subr.mxu0 0.0
    %404 = vmatpush1.msra.mxu0 0.0
    %405 = vmatprep.subr.mxu0 0.0
    %406 = vmatpush1.msra.mxu0 0.0
    %407 = vmatprep.subr.mxu0 0.0
    %408 = vmatpush1.msra.mxu0 0.0
    %409 = vmatprep.subr.mxu0 0.0
    %410 = vmatpush1.msra.mxu0 0.0
    %411 = vmatprep.subr.mxu0 0.0
    %412 = vmatpush1.msra.mxu0 0.0
    %413 = vmatprep.subr.mxu0 0.0
    %414 = vmatpush1.msra.mxu0 0.0
    %415 = vmatprep.subr.mxu0 0.0
    %416 = vmatpush1.msra.mxu0 0.0
    %417 = vmatprep.subr.mxu0 0.0
    %418 = vmatpush1.msra.mxu0 0.0
    %419 = vmatprep.subr.mxu0 0.0
    %420 = vmatpush1.msra.mxu0 0.0
    %421 = vmatprep.subr.mxu0 0.0
    %422 = vmatpush1.msra.mxu0 0.0
    %423 = vmatprep.subr.mxu0 0.0
    %424 = vmatpush1.msra.mxu0 0.0
    %425 = vmatprep.subr.mxu0 0.0
    %426 = vmatpush1.msra.mxu0 0.0
    %427 = vmatprep.subr.mxu0 0.0
    %428 = vmatpush1.msra.mxu0 0.0
    %429 = vmatprep.subr.mxu0 0.0
    %430 = vmatpush1.msra.mxu0 0.0
    %431 = vmatprep.subr.mxu0 0.0
    %432 = vmatpush1.msra.mxu0 0.0
    %433 = vmatprep.subr.mxu0 0.0
    %434 = vmatpush1.msra.mxu0 0.0
    %435 = vmatprep.subr.mxu0 0.0
    %436 = vmatpush1.msra.mxu0 0.0
    %437 = vmatprep.subr.mxu0 0.0
    %438 = vmatpush1.msra.mxu0 0.0
    %439 = vmatprep.subr.mxu0 0.0
    %440 = vmatpush1.msra.mxu0 0.0
    %441 = vmatprep.subr.mxu0 0.0
    %442 = vmatpush1.msra.mxu0 0.0
    %443 = vmatprep.subr.mxu0 0.0
    %444 = vmatpush1.msra.mxu0 0.0
    %445 = vmatprep.subr.mxu0 0.0
    %446 = vmatpush1.msra.mxu0 0.0
    %447 = vmatprep.subr.mxu0 0.0
    %448 = vmatpush1.msra.mxu0 0.0
    %449 = vmatprep.subr.mxu0 0.0
    %450 = vmatpush1.msra.mxu0 0.0
    %451 = vmatprep.subr.mxu0 0.0
    %452 = vmatpush1.msra.mxu0 0.0
    %453 = vmatprep.subr.mxu0 0.0
    %454 = vmatpush1.msra.mxu0 0.0
    %455 = vmatprep.subr.mxu0 0.0
    %456 = vmatpush1.msra.mxu0 0.0
    %457 = vmatprep.subr.mxu0 0.0
    %458 = vmatpush1.msra.mxu0 0.0
    %459 = vmatprep.mubr.f32.mxu0 0.0
    %460 = vmatmul.mubr.f32.gmra.mrb[0].mxu0 %v379
    %v461 = vpop.f32.mrb[0].mxu0
    %v462 = vadd.f32 %v370, %v461
    %v463 = vpop.f32.mrb[0].mxu0
    %464 = vmatprep.mubr.f32.mxu0 0.0
    %465 = vmatmul.mubr.f32.gmra.mrb[0].mxu0 %v381
    %v466 = vpop.f32.mrb[0].mxu0
    %v467 = vadd.f32 %v370, %v466
    %v468 = vpop.f32.mrb[0].mxu0
    %469 = vmatprep.mubr.f32.mxu0 0.0
    %470 = vmatmul.mubr.f32.gmra.mrb[0].mxu0 %v383
    %v471 = vpop.f32.mrb[0].mxu0
    %v472 = vadd.f32 %v370, %v471
    %v473 = vpop.f32.mrb[0].mxu0
    %474 = vmatprep.mubr.f32.mxu0 0.0
    %475 = vmatmul.mubr.f32.gmra.mrb[0].mxu0 %v385
    %v476 = vpop.f32.mrb[0].mxu0
    %v477 = vadd.f32 %v370, %v476
    %v478 = vpop.f32.mrb[0].mxu0
    %479 = vmatprep.mubr.f32.mxu0 0.0
    %480 = vmatmul.mubr.f32.gmra.mrb[0].mxu0 %v387
    %v481 = vpop.f32.mrb[0].mxu0
    %v482 = vadd.f32 %v370, %v481
    %v483 = vpop.f32.mrb[0].mxu0
    %484 = vmatprep.mubr.f32.mxu0 0.0
    %485 = vmatmul.mubr.f32.gmra.mrb[0].mxu0 %v389
    %v486 = vpop.f32.mrb[0].mxu0
    %v487 = vadd.f32 %v370, %v486
    %v488 = vpop.f32.mrb[0].mxu0
    %489 = vmatprep.mubr.f32.mxu0 0.0
    %490 = vmatmul.mubr.f32.gmra.mrb[0].mxu0 %v391
    %v491 = vpop.f32.mrb[0].mxu0
    %v492 = vadd.f32 %v370, %v491
    %v493 = vpop.f32.mrb[0].mxu0
    %494 = vmatprep.mubr.f32.mxu0 0.0
    %495 = vmatmul.mubr.f32.gmra.mrb[0].mxu0 %v393
    %v496 = vpop.f32.mrb[0].mxu0
    %v497 = vadd.f32 %v370, %v496
    %v498 = vpop.f32.mrb[0].mxu0
    %499 = vdwg.mxu0
    %v500 = vmax.f32 %v462, 0.0
    %v501 = vmax.f32 %v467, 0.0
    %v502 = vmax.f32 %v472, 0.0
    %v503 = vmax.f32 %v477, 0.0
    %v504 = vmax.f32 %v482, 0.0
    %v505 = vmax.f32 %v487, 0.0
    %v506 = vmax.f32 %v492, 0.0
    %v507 = vmax.f32 %v497, 0.0
    %vm508 = vcmp.ne.f32.partialorder %v462, %v462
    %vm509 = vcmp.ne.f32.partialorder %v467, %v467
    %vm510 = vcmp.ne.f32.partialorder %v472, %v472
    %vm511 = vcmp.ne.f32.partialorder %v477, %v477
    %vm512 = vcmp.ne.f32.partialorder %v482, %v482
    %vm513 = vcmp.ne.f32.partialorder %v487, %v487
    %vm514 = vcmp.ne.f32.partialorder %v492, %v492
    %vm515 = vcmp.ne.f32.partialorder %v497, %v497
    %v516 = vadd.f32 %v462, 0.0
    %v517 = vadd.f32 %v467, 0.0
    %v518 = vadd.f32 %v472, 0.0
    %v519 = vadd.f32 %v477, 0.0
    %v520 = vadd.f32 %v482, 0.0
    %v521 = vadd.f32 %v487, 0.0
    %v522 = vadd.f32 %v492, 0.0
    %v523 = vadd.f32 %v497, 0.0
    %v524 = vand.u32 2147483647, %v462
    %v525 = vand.u32 2147483647, %v467
    %v526 = vand.u32 2147483647, %v472
    %v527 = vand.u32 2147483647, %v477
    %v528 = vand.u32 2147483647, %v482
    %v529 = vand.u32 2147483647, %v487
    %v530 = vand.u32 2147483647, %v492
    %v531 = vand.u32 2147483647, %v497
    %v532 = vsub.f32 0.0, %v524
    %v533 = vsub.f32 0.0, %v525
    %v534 = vsub.f32 0.0, %v526
    %v535 = vsub.f32 0.0, %v527
    %v536 = vsub.f32 0.0, %v528
    %v537 = vsub.f32 0.0, %v529
    %v538 = vsub.f32 0.0, %v530
    %v539 = vsub.f32 0.0, %v531
    %v540 = vmul.f32 %v532, 1.442695
    %v541 = vpow.pop %v540
    %v542 = vmul.f32 %v533, 1.442695
    %v543 = vpow.pop %v542
    %v544 = vmul.f32 %v534, 1.442695
    %v545 = vpow.pop %v544
    %v546 = vmul.f32 %v535, 1.442695
    %v547 = vpow.pop %v546
    %v548 = vmul.f32 %v536, 1.442695
    %v549 = vpow.pop %v548
    %v550 = vmul.f32 %v537, 1.442695
    %v551 = vpow.pop %v550
    %v552 = vmul.f32 %v538, 1.442695
    %v553 = vpow.pop %v552
    %v554 = vmul.f32 %v539, 1.442695
    %v555 = vpow.pop %v554
    %v556 = vadd.f32 %v541, 1.0
    %v557 = vlog2.pop %v556
    %v558 = vmul.f32 %v557, 0.6931472
    %v559 = vmul.f32 -0.5, %v541
    %v560 = vadd.f32 %v559, 1.0
    %v561 = vmul.f32 %v560, %v541
    %v562 = vand.u32 2147483647, %v541
    %vm563 = vcmp.lt.f32.partialorder %v562, 0.0004427343
    %v564 = vsel %vm563, %v561, %v558
    %v565 = vadd.f32 %v543, 1.0
    %v566 = vlog2.pop %v565
    %v567 = vmul.f32 %v566, 0.6931472
    %v568 = vmul.f32 -0.5, %v543
    %v569 = vadd.f32 %v568, 1.0
    %v570 = vmul.f32 %v569, %v543
    %v571 = vand.u32 2147483647, %v543
    %vm572 = vcmp.lt.f32.partialorder %v571, 0.0004427343
    %v573 = vsel %vm572, %v570, %v567
    %v574 = vadd.f32 %v545, 1.0
    %v575 = vlog2.pop %v574
    %v576 = vmul.f32 %v575, 0.6931472
    %v577 = vmul.f32 -0.5, %v545
    %v578 = vadd.f32 %v577, 1.0
    %v579 = vmul.f32 %v578, %v545
    %v580 = vand.u32 2147483647, %v545
    %vm581 = vcmp.lt.f32.partialorder %v580, 0.0004427343
    %v582 = vsel %vm581, %v579, %v576
    %v583 = vadd.f32 %v547, 1.0
    %v584 = vlog2.pop %v583
    %v585 = vmul.f32 %v584, 0.6931472
    %v586 = vmul.f32 -0.5, %v547
    %v587 = vadd.f32 %v586, 1.0
    %v588 = vmul.f32 %v587, %v547
    %v589 = vand.u32 2147483647, %v547
    %vm590 = vcmp.lt.f32.partialorder %v589, 0.0004427343
    %v591 = vsel %vm590, %v588, %v585
    %v592 = vadd.f32 %v549, 1.0
    %v593 = vlog2.pop %v592
    %v594 = vmul.f32 %v593, 0.6931472
    %v595 = vmul.f32 -0.5, %v549
    %v596 = vadd.f32 %v595, 1.0
    %v597 = vmul.f32 %v596, %v549
    %v598 = vand.u32 2147483647, %v549
    %vm599 = vcmp.lt.f32.partialorder %v598, 0.0004427343
    %v600 = vsel %vm599, %v597, %v594
    %v601 = vadd.f32 %v551, 1.0
    %v602 = vlog2.pop %v601
    %v603 = vmul.f32 %v602, 0.6931472
    %v604 = vmul.f32 -0.5, %v551
    %v605 = vadd.f32 %v604, 1.0
    %v606 = vmul.f32 %v605, %v551
    %v607 = vand.u32 2147483647, %v551
    %vm608 = vcmp.lt.f32.partialorder %v607, 0.0004427343
    %v609 = vsel %vm608, %v606, %v603
    %v610 = vadd.f32 %v553, 1.0
    %v611 = vlog2.pop %v610
    %v612 = vmul.f32 %v611, 0.6931472
    %v613 = vmul.f32 -0.5, %v553
    %v614 = vadd.f32 %v613, 1.0
    %v615 = vmul.f32 %v614, %v553
    %v616 = vand.u32 2147483647, %v553
    %vm617 = vcmp.lt.f32.partialorder %v616, 0.0004427343
    %v618 = vsel %vm617, %v615, %v612
    %v619 = vadd.f32 %v555, 1.0
    %v620 = vlog2.pop %v619
    %v621 = vmul.f32 %v620, 0.6931472
    %v622 = vmul.f32 -0.5, %v555
    %v623 = vadd.f32 %v622, 1.0
    %v624 = vmul.f32 %v623, %v555
    %v625 = vand.u32 2147483647, %v555
    %vm626 = vcmp.lt.f32.partialorder %v625, 0.0004427343
    %v627 = vsel %vm626, %v624, %v621
    %v628 = vadd.f32 %v500, %v564
    %v629 = vadd.f32 %v501, %v573
    %v630 = vadd.f32 %v502, %v582
    %v631 = vadd.f32 %v503, %v591
    %v632 = vadd.f32 %v504, %v600
    %v633 = vadd.f32 %v505, %v609
    %v634 = vadd.f32 %v506, %v618
    %v635 = vadd.f32 %v507, %v627
    %v636 = vsel %vm508, %v516, %v628
    %v637 = vsel %vm509, %v517, %v629
    %v638 = vsel %vm510, %v518, %v630
    %v639 = vsel %vm511, %v519, %v631
    %v640 = vsel %vm512, %v520, %v632
    %v641 = vsel %vm513, %v521, %v633
    %v642 = vsel %vm514, %v522, %v634
    %v643 = vsel %vm515, %v523, %v635
    %v644 = vld [vmem:[#allocation8] sm:$0xff]
    %v645 = vld [vmem:[#allocation8 + $0x8] sm:$0xff]
    %v654 = vcombine.high %v636, %v636
    %v656 = vunpack.c.l.s4 1966171168
    %v657 = vunpack.c.0.s8 %v656
    %v658 = vlaneseq
    %v659 = vshrl.u32 %v658, 7
    %v660 = vsub.s32 %v657, %v659
    %v661 = vrot.slane %v636, %v660
    %v663 = vunpack.c.l.s4 1966171168
    %v664 = vunpack.c.0.s8 %v663
    %v665 = vlaneseq
    %v666 = vshrl.u32 %v665, 7
    %v667 = vsub.s32 %v664, %v666
    %v668 = vrot.slane %v654, %v667
    %v669 = vcombine.high %v661, %v661
    %v670 = vcombine.high %v668, %v668
    %v672 = vunpack.c.l.s4 1966171168
    %v673 = vunpack.c.0.s8 %v672
    %v674 = vlaneseq
    %v675 = vshrl.u32 %v674, 7
    %v676 = vsub.s32 %v673, %v675
    %v677 = vrot.slane %v661, %v676
    %v679 = vunpack.c.l.s4 1966171168
    %v680 = vunpack.c.0.s8 %v679
    %v681 = vlaneseq
    %v682 = vshrl.u32 %v681, 7
    %v683 = vsub.s32 %v680, %v682
    %v684 = vrot.slane %v668, %v683
    %v686 = vunpack.c.l.s4 1966171168
    %v687 = vunpack.c.0.s8 %v686
    %v688 = vlaneseq
    %v689 = vshrl.u32 %v688, 7
    %v690 = vsub.s32 %v687, %v689
    %v691 = vrot.slane %v669, %v690
    %v693 = vunpack.c.l.s4 1966171168
    %v694 = vunpack.c.0.s8 %v693
    %v695 = vlaneseq
    %v696 = vshrl.u32 %v695, 7
    %v697 = vsub.s32 %v694, %v696
    %v698 = vrot.slane %v670, %v697
    %v699 = vcombine.high %v677, %v677
    %v700 = vcombine.high %v684, %v684
    %v701 = vcombine.high %v691, %v691
    %v702 = vcombine.high %v698, %v698
    %v703 = vcombine.high %v637, %v637
    %v705 = vunpack.c.l.s4 1966171168
    %v706 = vunpack.c.0.s8 %v705
    %v707 = vlaneseq
    %v708 = vshrl.u32 %v707, 7
    %v709 = vsub.s32 %v706, %v708
    %v710 = vrot.slane %v637, %v709
    %v712 = vunpack.c.l.s4 1966171168
    %v713 = vunpack.c.0.s8 %v712
    %v714 = vlaneseq
    %v715 = vshrl.u32 %v714, 7
    %v716 = vsub.s32 %v713, %v715
    %v717 = vrot.slane %v703, %v716
    %v718 = vcombine.high %v710, %v710
    %v719 = vcombine.high %v717, %v717
    %v721 = vunpack.c.l.s4 1966171168
    %v722 = vunpack.c.0.s8 %v721
    %v723 = vlaneseq
    %v724 = vshrl.u32 %v723, 7
    %v725 = vsub.s32 %v722, %v724
    %v726 = vrot.slane %v710, %v725
    %v728 = vunpack.c.l.s4 1966171168
    %v729 = vunpack.c.0.s8 %v728
    %v730 = vlaneseq
    %v731 = vshrl.u32 %v730, 7
    %v732 = vsub.s32 %v729, %v731
    %v733 = vrot.slane %v717, %v732
    %v735 = vunpack.c.l.s4 1966171168
    %v736 = vunpack.c.0.s8 %v735
    %v737 = vlaneseq
    %v738 = vshrl.u32 %v737, 7
    %v739 = vsub.s32 %v736, %v738
    %v740 = vrot.slane %v718, %v739
    %v742 = vunpack.c.l.s4 1966171168
    %v743 = vunpack.c.0.s8 %v742
    %v744 = vlaneseq
    %v745 = vshrl.u32 %v744, 7
    %v746 = vsub.s32 %v743, %v745
    %v747 = vrot.slane %v719, %v746
    %v748 = vcombine.high %v726, %v726
    %v749 = vcombine.high %v733, %v733
    %v750 = vcombine.high %v740, %v740
    %v751 = vcombine.high %v747, %v747
    %v752 = vcombine.high %v638, %v638
    %v754 = vunpack.c.l.s4 1966171168
    %v755 = vunpack.c.0.s8 %v754
    %v756 = vlaneseq
    %v757 = vshrl.u32 %v756, 7
    %v758 = vsub.s32 %v755, %v757
    %v759 = vrot.slane %v638, %v758
    %v761 = vunpack.c.l.s4 1966171168
    %v762 = vunpack.c.0.s8 %v761
    %v763 = vlaneseq
    %v764 = vshrl.u32 %v763, 7
    %v765 = vsub.s32 %v762, %v764
    %v766 = vrot.slane %v752, %v765
    %v767 = vcombine.high %v759, %v759
    %v768 = vcombine.high %v766, %v766
    %v770 = vunpack.c.l.s4 1966171168
    %v771 = vunpack.c.0.s8 %v770
    %v772 = vlaneseq
    %v773 = vshrl.u32 %v772, 7
    %v774 = vsub.s32 %v771, %v773
    %v775 = vrot.slane %v759, %v774
    %v777 = vunpack.c.l.s4 1966171168
    %v778 = vunpack.c.0.s8 %v777
    %v779 = vlaneseq
    %v780 = vshrl.u32 %v779, 7
    %v781 = vsub.s32 %v778, %v780
    %v782 = vrot.slane %v766, %v781
    %v784 = vunpack.c.l.s4 1966171168
    %v785 = vunpack.c.0.s8 %v784
    %v786 = vlaneseq
    %v787 = vshrl.u32 %v786, 7
    %v788 = vsub.s32 %v785, %v787
    %v789 = vrot.slane %v767, %v788
    %v791 = vunpack.c.l.s4 1966171168
    %v792 = vunpack.c.0.s8 %v791
    %v793 = vlaneseq
    %v794 = vshrl.u32 %v793, 7
    %v795 = vsub.s32 %v792, %v794
    %v796 = vrot.slane %v768, %v795
    %v797 = vcombine.high %v775, %v775
    %v798 = vcombine.high %v782, %v782
    %v799 = vcombine.high %v789, %v789
    %v800 = vcombine.high %v796, %v796
    %v801 = vcombine.high %v639, %v639
    %v803 = vunpack.c.l.s4 1966171168
    %v804 = vunpack.c.0.s8 %v803
    %v805 = vlaneseq
    %v806 = vshrl.u32 %v805, 7
    %v807 = vsub.s32 %v804, %v806
    %v808 = vrot.slane %v639, %v807
    %v810 = vunpack.c.l.s4 1966171168
    %v811 = vunpack.c.0.s8 %v810
    %v812 = vlaneseq
    %v813 = vshrl.u32 %v812, 7
    %v814 = vsub.s32 %v811, %v813
    %v815 = vrot.slane %v801, %v814
    %v816 = vcombine.high %v808, %v808
    %v817 = vcombine.high %v815, %v815
    %v819 = vunpack.c.l.s4 1966171168
    %v820 = vunpack.c.0.s8 %v819
    %v821 = vlaneseq
    %v822 = vshrl.u32 %v821, 7
    %v823 = vsub.s32 %v820, %v822
    %v824 = vrot.slane %v808, %v823
    %v826 = vunpack.c.l.s4 1966171168
    %v827 = vunpack.c.0.s8 %v826
    %v828 = vlaneseq
    %v829 = vshrl.u32 %v828, 7
    %v830 = vsub.s32 %v827, %v829
    %v831 = vrot.slane %v815, %v830
    %v833 = vunpack.c.l.s4 1966171168
    %v834 = vunpack.c.0.s8 %v833
    %v835 = vlaneseq
    %v836 = vshrl.u32 %v835, 7
    %v837 = vsub.s32 %v834, %v836
    %v838 = vrot.slane %v816, %v837
    %v840 = vunpack.c.l.s4 1966171168
    %v841 = vunpack.c.0.s8 %v840
    %v842 = vlaneseq
    %v843 = vshrl.u32 %v842, 7
    %v844 = vsub.s32 %v841, %v843
    %v845 = vrot.slane %v817, %v844
    %v846 = vcombine.high %v824, %v824
    %v847 = vcombine.high %v831, %v831
    %v848 = vcombine.high %v838, %v838
    %v849 = vcombine.high %v845, %v845
    %v850 = vcombine.high %v640, %v640
    %v852 = vunpack.c.l.s4 1966171168
    %v853 = vunpack.c.0.s8 %v852
    %v854 = vlaneseq
    %v855 = vshrl.u32 %v854, 7
    %v856 = vsub.s32 %v853, %v855
    %v857 = vrot.slane %v640, %v856
    %v859 = vunpack.c.l.s4 1966171168
    %v860 = vunpack.c.0.s8 %v859
    %v861 = vlaneseq
    %v862 = vshrl.u32 %v861, 7
    %v863 = vsub.s32 %v860, %v862
    %v864 = vrot.slane %v850, %v863
    %v865 = vcombine.high %v857, %v857
    %v866 = vcombine.high %v864, %v864
    %v868 = vunpack.c.l.s4 1966171168
    %v869 = vunpack.c.0.s8 %v868
    %v870 = vlaneseq
    %v871 = vshrl.u32 %v870, 7
    %v872 = vsub.s32 %v869, %v871
    %v873 = vrot.slane %v857, %v872
    %v875 = vunpack.c.l.s4 1966171168
    %v876 = vunpack.c.0.s8 %v875
    %v877 = vlaneseq
    %v878 = vshrl.u32 %v877, 7
    %v879 = vsub.s32 %v876, %v878
    %v880 = vrot.slane %v864, %v879
    %v882 = vunpack.c.l.s4 1966171168
    %v883 = vunpack.c.0.s8 %v882
    %v884 = vlaneseq
    %v885 = vshrl.u32 %v884, 7
    %v886 = vsub.s32 %v883, %v885
    %v887 = vrot.slane %v865, %v886
    %v889 = vunpack.c.l.s4 1966171168
    %v890 = vunpack.c.0.s8 %v889
    %v891 = vlaneseq
    %v892 = vshrl.u32 %v891, 7
    %v893 = vsub.s32 %v890, %v892
    %v894 = vrot.slane %v866, %v893
    %v895 = vcombine.high %v873, %v873
    %v896 = vcombine.high %v880, %v880
    %v897 = vcombine.high %v887, %v887
    %v898 = vcombine.high %v894, %v894
    %v899 = vcombine.high %v641, %v641
    %v901 = vunpack.c.l.s4 1966171168
    %v902 = vunpack.c.0.s8 %v901
    %v903 = vlaneseq
    %v904 = vshrl.u32 %v903, 7
    %v905 = vsub.s32 %v902, %v904
    %v906 = vrot.slane %v641, %v905
    %v908 = vunpack.c.l.s4 1966171168
    %v909 = vunpack.c.0.s8 %v908
    %v910 = vlaneseq
    %v911 = vshrl.u32 %v910, 7
    %v912 = vsub.s32 %v909, %v911
    %v913 = vrot.slane %v899, %v912
    %v914 = vcombine.high %v906, %v906
    %v915 = vcombine.high %v913, %v913
    %v917 = vunpack.c.l.s4 1966171168
    %v918 = vunpack.c.0.s8 %v917
    %v919 = vlaneseq
    %v920 = vshrl.u32 %v919, 7
    %v921 = vsub.s32 %v918, %v920
    %v922 = vrot.slane %v906, %v921
    %v924 = vunpack.c.l.s4 1966171168
    %v925 = vunpack.c.0.s8 %v924
    %v926 = vlaneseq
    %v927 = vshrl.u32 %v926, 7
    %v928 = vsub.s32 %v925, %v927
    %v929 = vrot.slane %v913, %v928
    %v931 = vunpack.c.l.s4 1966171168
    %v932 = vunpack.c.0.s8 %v931
    %v933 = vlaneseq
    %v934 = vshrl.u32 %v933, 7
    %v935 = vsub.s32 %v932, %v934
    %v936 = vrot.slane %v914, %v935
    %v938 = vunpack.c.l.s4 1966171168
    %v939 = vunpack.c.0.s8 %v938
    %v940 = vlaneseq
    %v941 = vshrl.u32 %v940, 7
    %v942 = vsub.s32 %v939, %v941
    %v943 = vrot.slane %v915, %v942
    %v944 = vcombine.high %v922, %v922
    %v945 = vcombine.high %v929, %v929
    %v946 = vcombine.high %v936, %v936
    %v947 = vcombine.high %v943, %v943
    %v948 = vcombine.high %v642, %v642
    %v950 = vunpack.c.l.s4 1966171168
    %v951 = vunpack.c.0.s8 %v950
    %v952 = vlaneseq
    %v953 = vshrl.u32 %v952, 7
    %v954 = vsub.s32 %v951, %v953
    %v955 = vrot.slane %v642, %v954
    %v957 = vunpack.c.l.s4 1966171168
    %v958 = vunpack.c.0.s8 %v957
    %v959 = vlaneseq
    %v960 = vshrl.u32 %v959, 7
    %v961 = vsub.s32 %v958, %v960
    %v962 = vrot.slane %v948, %v961
    %v963 = vcombine.high %v955, %v955
    %v964 = vcombine.high %v962, %v962
    %v966 = vunpack.c.l.s4 1966171168
    %v967 = vunpack.c.0.s8 %v966
    %v968 = vlaneseq
    %v969 = vshrl.u32 %v968, 7
    %v970 = vsub.s32 %v967, %v969
    %v971 = vrot.slane %v955, %v970
    %v973 = vunpack.c.l.s4 1966171168
    %v974 = vunpack.c.0.s8 %v973
    %v975 = vlaneseq
    %v976 = vshrl.u32 %v975, 7
    %v977 = vsub.s32 %v974, %v976
    %v978 = vrot.slane %v962, %v977
    %v980 = vunpack.c.l.s4 1966171168
    %v981 = vunpack.c.0.s8 %v980
    %v982 = vlaneseq
    %v983 = vshrl.u32 %v982, 7
    %v984 = vsub.s32 %v981, %v983
    %v985 = vrot.slane %v963, %v984
    %v987 = vunpack.c.l.s4 1966171168
    %v988 = vunpack.c.0.s8 %v987
    %v989 = vlaneseq
    %v990 = vshrl.u32 %v989, 7
    %v991 = vsub.s32 %v988, %v990
    %v992 = vrot.slane %v964, %v991
    %v993 = vcombine.high %v971, %v971
    %v994 = vcombine.high %v978, %v978
    %v995 = vcombine.high %v985, %v985
    %v996 = vcombine.high %v992, %v992
    %v997 = vcombine.high %v643, %v643
    %v999 = vunpack.c.l.s4 1966171168
    %v1000 = vunpack.c.0.s8 %v999
    %v1001 = vlaneseq
    %v1002 = vshrl.u32 %v1001, 7
    %v1003 = vsub.s32 %v1000, %v1002
    %v1004 = vrot.slane %v643, %v1003
    %v1006 = vunpack.c.l.s4 1966171168
    %v1007 = vunpack.c.0.s8 %v1006
    %v1008 = vlaneseq
    %v1009 = vshrl.u32 %v1008, 7
    %v1010 = vsub.s32 %v1007, %v1009
    %v1011 = vrot.slane %v997, %v1010
    %v1012 = vcombine.high %v1004, %v1004
    %v1013 = vcombine.high %v1011, %v1011
    %v1015 = vunpack.c.l.s4 1966171168
    %v1016 = vunpack.c.0.s8 %v1015
    %v1017 = vlaneseq
    %v1018 = vshrl.u32 %v1017, 7
    %v1019 = vsub.s32 %v1016, %v1018
    %v1020 = vrot.slane %v1004, %v1019
    %v1022 = vunpack.c.l.s4 1966171168
    %v1023 = vunpack.c.0.s8 %v1022
    %v1024 = vlaneseq
    %v1025 = vshrl.u32 %v1024, 7
    %v1026 = vsub.s32 %v1023, %v1025
    %v1027 = vrot.slane %v1011, %v1026
    %v1029 = vunpack.c.l.s4 1966171168
    %v1030 = vunpack.c.0.s8 %v1029
    %v1031 = vlaneseq
    %v1032 = vshrl.u32 %v1031, 7
    %v1033 = vsub.s32 %v1030, %v1032
    %v1034 = vrot.slane %v1012, %v1033
    %v1036 = vunpack.c.l.s4 1966171168
    %v1037 = vunpack.c.0.s8 %v1036
    %v1038 = vlaneseq
    %v1039 = vshrl.u32 %v1038, 7
    %v1040 = vsub.s32 %v1037, %v1039
    %v1041 = vrot.slane %v1013, %v1040
    %v1042 = vcombine.high %v1020, %v1020
    %v1043 = vcombine.high %v1027, %v1027
    %v1044 = vcombine.high %v1034, %v1034
    %v1045 = vcombine.high %v1041, %v1041
    %v1046 = vlaneseq
    %v1047 = vshrl.u32 %v1046, 7
    %v1048 = vsub.s32 0, %v1047
    %v1049 = vrot.slane %v677, %v1048
    %v1050 = vlaneseq
    %v1051 = vshrl.u32 %v1050, 7
    %v1052 = vsub.s32 0, %v1051
    %v1053 = vrot.slane %v691, %v1052
    %v1054 = vlaneseq
    %v1055 = vshrl.u32 %v1054, 7
    %v1056 = vsub.s32 0, %v1055
    %v1057 = vrot.slane %v699, %v1056
    %v1058 = vlaneseq
    %v1059 = vshrl.u32 %v1058, 7
    %v1060 = vsub.s32 0, %v1059
    %v1061 = vrot.slane %v701, %v1060
    %v1062 = vlaneseq
    %v1063 = vshrl.u32 %v1062, 7
    %v1064 = vsub.s32 0, %v1063
    %v1065 = vrot.slane %v684, %v1064
    %v1066 = vlaneseq
    %v1067 = vshrl.u32 %v1066, 7
    %v1068 = vsub.s32 0, %v1067
    %v1069 = vrot.slane %v698, %v1068
    %v1070 = vlaneseq
    %v1071 = vshrl.u32 %v1070, 7
    %v1072 = vsub.s32 0, %v1071
    %v1073 = vrot.slane %v700, %v1072
    %v1074 = vlaneseq
    %v1075 = vshrl.u32 %v1074, 7
    %v1076 = vsub.s32 0, %v1075
    %v1077 = vrot.slane %v702, %v1076
    %v1078 = vlaneseq
    %v1079 = vshrl.u32 %v1078, 7
    %v1080 = vsub.s32 0, %v1079
    %v1081 = vrot.slane %v726, %v1080
    %v1082 = vlaneseq
    %v1083 = vshrl.u32 %v1082, 7
    %v1084 = vsub.s32 0, %v1083
    %v1085 = vrot.slane %v740, %v1084
    %v1086 = vlaneseq
    %v1087 = vshrl.u32 %v1086, 7
    %v1088 = vsub.s32 0, %v1087
    %v1089 = vrot.slane %v748, %v1088
    %v1090 = vlaneseq
    %v1091 = vshrl.u32 %v1090, 7
    %v1092 = vsub.s32 0, %v1091
    %v1093 = vrot.slane %v750, %v1092
    %v1094 = vlaneseq
    %v1095 = vshrl.u32 %v1094, 7
    %v1096 = vsub.s32 0, %v1095
    %v1097 = vrot.slane %v733, %v1096
    %v1098 = vlaneseq
    %v1099 = vshrl.u32 %v1098, 7
    %v1100 = vsub.s32 0, %v1099
    %v1101 = vrot.slane %v747, %v1100
    %v1102 = vlaneseq
    %v1103 = vshrl.u32 %v1102, 7
    %v1104 = vsub.s32 0, %v1103
    %v1105 = vrot.slane %v749, %v1104
    %v1106 = vlaneseq
    %v1107 = vshrl.u32 %v1106, 7
    %v1108 = vsub.s32 0, %v1107
    %v1109 = vrot.slane %v751, %v1108
    %v1110 = vlaneseq
    %v1111 = vshrl.u32 %v1110, 7
    %v1112 = vsub.s32 0, %v1111
    %v1113 = vrot.slane %v775, %v1112
    %v1114 = vlaneseq
    %v1115 = vshrl.u32 %v1114, 7
    %v1116 = vsub.s32 0, %v1115
    %v1117 = vrot.slane %v789, %v1116
    %v1118 = vlaneseq
    %v1119 = vshrl.u32 %v1118, 7
    %v1120 = vsub.s32 0, %v1119
    %v1121 = vrot.slane %v797, %v1120
    %v1122 = vlaneseq
    %v1123 = vshrl.u32 %v1122, 7
    %v1124 = vsub.s32 0, %v1123
    %v1125 = vrot.slane %v799, %v1124
    %v1126 = vlaneseq
    %v1127 = vshrl.u32 %v1126, 7
    %v1128 = vsub.s32 0, %v1127
    %v1129 = vrot.slane %v782, %v1128
    %v1130 = vlaneseq
    %v1131 = vshrl.u32 %v1130, 7
    %v1132 = vsub.s32 0, %v1131
    %v1133 = vrot.slane %v796, %v1132
    %v1134 = vlaneseq
    %v1135 = vshrl.u32 %v1134, 7
    %v1136 = vsub.s32 0, %v1135
    %v1137 = vrot.slane %v798, %v1136
    %v1138 = vlaneseq
    %v1139 = vshrl.u32 %v1138, 7
    %v1140 = vsub.s32 0, %v1139
    %v1141 = vrot.slane %v800, %v1140
    %v1142 = vlaneseq
    %v1143 = vshrl.u32 %v1142, 7
    %v1144 = vsub.s32 0, %v1143
    %v1145 = vrot.slane %v824, %v1144
    %v1146 = vlaneseq
    %v1147 = vshrl.u32 %v1146, 7
    %v1148 = vsub.s32 0, %v1147
    %v1149 = vrot.slane %v838, %v1148
    %v1150 = vlaneseq
    %v1151 = vshrl.u32 %v1150, 7
    %v1152 = vsub.s32 0, %v1151
    %v1153 = vrot.slane %v846, %v1152
    %v1154 = vlaneseq
    %v1155 = vshrl.u32 %v1154, 7
    %v1156 = vsub.s32 0, %v1155
    %v1157 = vrot.slane %v848, %v1156
    %v1158 = vlaneseq
    %v1159 = vshrl.u32 %v1158, 7
    %v1160 = vsub.s32 0, %v1159
    %v1161 = vrot.slane %v831, %v1160
    %v1162 = vlaneseq
    %v1163 = vshrl.u32 %v1162, 7
    %v1164 = vsub.s32 0, %v1163
    %v1165 = vrot.slane %v845, %v1164
    %v1166 = vlaneseq
    %v1167 = vshrl.u32 %v1166, 7
    %v1168 = vsub.s32 0, %v1167
    %v1169 = vrot.slane %v847, %v1168
    %v1170 = vlaneseq
    %v1171 = vshrl.u32 %v1170, 7
    %v1172 = vsub.s32 0, %v1171
    %v1173 = vrot.slane %v849, %v1172
    %v1174 = vlaneseq
    %v1175 = vshrl.u32 %v1174, 7
    %v1176 = vsub.s32 0, %v1175
    %v1177 = vrot.slane %v873, %v1176
    %v1178 = vlaneseq
    %v1179 = vshrl.u32 %v1178, 7
    %v1180 = vsub.s32 0, %v1179
    %v1181 = vrot.slane %v887, %v1180
    %v1182 = vlaneseq
    %v1183 = vshrl.u32 %v1182, 7
    %v1184 = vsub.s32 0, %v1183
    %v1185 = vrot.slane %v895, %v1184
    %v1186 = vlaneseq
    %v1187 = vshrl.u32 %v1186, 7
    %v1188 = vsub.s32 0, %v1187
    %v1189 = vrot.slane %v897, %v1188
    %v1190 = vlaneseq
    %v1191 = vshrl.u32 %v1190, 7
    %v1192 = vsub.s32 0, %v1191
    %v1193 = vrot.slane %v880, %v1192
    %v1194 = vlaneseq
    %v1195 = vshrl.u32 %v1194, 7
    %v1196 = vsub.s32 0, %v1195
    %v1197 = vrot.slane %v894, %v1196
    %v1198 = vlaneseq
    %v1199 = vshrl.u32 %v1198, 7
    %v1200 = vsub.s32 0, %v1199
    %v1201 = vrot.slane %v896, %v1200
    %v1202 = vlaneseq
    %v1203 = vshrl.u32 %v1202, 7
    %v1204 = vsub.s32 0, %v1203
    %v1205 = vrot.slane %v898, %v1204
    %v1206 = vlaneseq
    %v1207 = vshrl.u32 %v1206, 7
    %v1208 = vsub.s32 0, %v1207
    %v1209 = vrot.slane %v922, %v1208
    %v1210 = vlaneseq
    %v1211 = vshrl.u32 %v1210, 7
    %v1212 = vsub.s32 0, %v1211
    %v1213 = vrot.slane %v936, %v1212
    %v1214 = vlaneseq
    %v1215 = vshrl.u32 %v1214, 7
    %v1216 = vsub.s32 0, %v1215
    %v1217 = vrot.slane %v944, %v1216
    %v1218 = vlaneseq
    %v1219 = vshrl.u32 %v1218, 7
    %v1220 = vsub.s32 0, %v1219
    %v1221 = vrot.slane %v946, %v1220
    %v1222 = vlaneseq
    %v1223 = vshrl.u32 %v1222, 7
    %v1224 = vsub.s32 0, %v1223
    %v1225 = vrot.slane %v929, %v1224
    %v1226 = vlaneseq
    %v1227 = vshrl.u32 %v1226, 7
    %v1228 = vsub.s32 0, %v1227
    %v1229 = vrot.slane %v943, %v1228
    %v1230 = vlaneseq
    %v1231 = vshrl.u32 %v1230, 7
    %v1232 = vsub.s32 0, %v1231
    %v1233 = vrot.slane %v945, %v1232
    %v1234 = vlaneseq
    %v1235 = vshrl.u32 %v1234, 7
    %v1236 = vsub.s32 0, %v1235
    %v1237 = vrot.slane %v947, %v1236
    %v1238 = vlaneseq
    %v1239 = vshrl.u32 %v1238, 7
    %v1240 = vsub.s32 0, %v1239
    %v1241 = vrot.slane %v971, %v1240
    %v1242 = vlaneseq
    %v1243 = vshrl.u32 %v1242, 7
    %v1244 = vsub.s32 0, %v1243
    %v1245 = vrot.slane %v985, %v1244
    %v1246 = vlaneseq
    %v1247 = vshrl.u32 %v1246, 7
    %v1248 = vsub.s32 0, %v1247
    %v1249 = vrot.slane %v993, %v1248
    %v1250 = vlaneseq
    %v1251 = vshrl.u32 %v1250, 7
    %v1252 = vsub.s32 0, %v1251
    %v1253 = vrot.slane %v995, %v1252
    %v1254 = vlaneseq
    %v1255 = vshrl.u32 %v1254, 7
    %v1256 = vsub.s32 0, %v1255
    %v1257 = vrot.slane %v978, %v1256
    %v1258 = vlaneseq
    %v1259 = vshrl.u32 %v1258, 7
    %v1260 = vsub.s32 0, %v1259
    %v1261 = vrot.slane %v992, %v1260
    %v1262 = vlaneseq
    %v1263 = vshrl.u32 %v1262, 7
    %v1264 = vsub.s32 0, %v1263
    %v1265 = vrot.slane %v994, %v1264
    %v1266 = vlaneseq
    %v1267 = vshrl.u32 %v1266, 7
    %v1268 = vsub.s32 0, %v1267
    %v1269 = vrot.slane %v996, %v1268
    %v1270 = vlaneseq
    %v1271 = vshrl.u32 %v1270, 7
    %v1272 = vsub.s32 0, %v1271
    %v1273 = vrot.slane %v1020, %v1272
    %v1274 = vlaneseq
    %v1275 = vshrl.u32 %v1274, 7
    %v1276 = vsub.s32 0, %v1275
    %v1277 = vrot.slane %v1034, %v1276
    %v1278 = vlaneseq
    %v1279 = vshrl.u32 %v1278, 7
    %v1280 = vsub.s32 0, %v1279
    %v1281 = vrot.slane %v1042, %v1280
    %v1282 = vlaneseq
    %v1283 = vshrl.u32 %v1282, 7
    %v1284 = vsub.s32 0, %v1283
    %v1285 = vrot.slane %v1044, %v1284
    %v1286 = vlaneseq
    %v1287 = vshrl.u32 %v1286, 7
    %v1288 = vsub.s32 0, %v1287
    %v1289 = vrot.slane %v1027, %v1288
    %v1290 = vlaneseq
    %v1291 = vshrl.u32 %v1290, 7
    %v1292 = vsub.s32 0, %v1291
    %v1293 = vrot.slane %v1041, %v1292
    %v1294 = vlaneseq
    %v1295 = vshrl.u32 %v1294, 7
    %v1296 = vsub.s32 0, %v1295
    %v1297 = vrot.slane %v1043, %v1296
    %v1298 = vlaneseq
    %v1299 = vshrl.u32 %v1298, 7
    %v1300 = vsub.s32 0, %v1299
    %v1301 = vrot.slane %v1045, %v1300
    %v1366 = vmul.f32 %v1049, %v644
    %v1367 = vmul.f32 %v1049, %v645
    %v1368 = vmul.f32 %v1053, %v644
    %v1369 = vmul.f32 %v1053, %v645
    %v1370 = vmul.f32 %v1057, %v644
    %v1371 = vmul.f32 %v1057, %v645
    %v1372 = vmul.f32 %v1061, %v644
    %v1373 = vmul.f32 %v1061, %v645
    %v1374 = vmul.f32 %v1065, %v644
    %v1375 = vmul.f32 %v1065, %v645
    %v1376 = vmul.f32 %v1069, %v644
    %v1377 = vmul.f32 %v1069, %v645
    %v1378 = vmul.f32 %v1073, %v644
    %v1379 = vmul.f32 %v1073, %v645
    %v1380 = vmul.f32 %v1077, %v644
    %v1381 = vmul.f32 %v1077, %v645
    %v1382 = vmul.f32 %v1081, %v644
    %v1383 = vmul.f32 %v1081, %v645
    %v1384 = vmul.f32 %v1085, %v644
    %v1385 = vmul.f32 %v1085, %v645
    %v1386 = vmul.f32 %v1089, %v644
    %v1387 = vmul.f32 %v1089, %v645
    %v1388 = vmul.f32 %v1093, %v644
    %v1389 = vmul.f32 %v1093, %v645
    %v1390 = vmul.f32 %v1097, %v644
    %v1391 = vmul.f32 %v1097, %v645
    %v1392 = vmul.f32 %v1101, %v644
    %v1393 = vmul.f32 %v1101, %v645
    %v1394 = vmul.f32 %v1105, %v644
    %v1395 = vmul.f32 %v1105, %v645
    %v1396 = vmul.f32 %v1109, %v644
    %v1397 = vmul.f32 %v1109, %v645
    %v1398 = vmul.f32 %v1113, %v644
    %v1399 = vmul.f32 %v1113, %v645
    %v1400 = vmul.f32 %v1117, %v644
    %v1401 = vmul.f32 %v1117, %v645
    %v1402 = vmul.f32 %v1121, %v644
    %v1403 = vmul.f32 %v1121, %v645
    %v1404 = vmul.f32 %v1125, %v644
    %v1405 = vmul.f32 %v1125, %v645
    %v1406 = vmul.f32 %v1129, %v644
    %v1407 = vmul.f32 %v1129, %v645
    %v1408 = vmul.f32 %v1133, %v644
    %v1409 = vmul.f32 %v1133, %v645
    %v1410 = vmul.f32 %v1137, %v644
    %v1411 = vmul.f32 %v1137, %v645
    %v1412 = vmul.f32 %v1141, %v644
    %v1413 = vmul.f32 %v1141, %v645
    %v1414 = vmul.f32 %v1145, %v644
    %v1415 = vmul.f32 %v1145, %v645
    %v1416 = vmul.f32 %v1149, %v644
    %v1417 = vmul.f32 %v1149, %v645
    %v1418 = vmul.f32 %v1153, %v644
    %v1419 = vmul.f32 %v1153, %v645
    %v1420 = vmul.f32 %v1157, %v644
    %v1421 = vmul.f32 %v1157, %v645
    %v1422 = vmul.f32 %v1161, %v644
    %v1423 = vmul.f32 %v1161, %v645
    %v1424 = vmul.f32 %v1165, %v644
    %v1425 = vmul.f32 %v1165, %v645
    %v1426 = vmul.f32 %v1169, %v644
    %v1427 = vmul.f32 %v1169, %v645
    %v1428 = vmul.f32 %v1173, %v644
    %v1429 = vmul.f32 %v1173, %v645
    %v1430 = vmul.f32 %v1177, %v644
    %v1431 = vmul.f32 %v1177, %v645
    %v1432 = vmul.f32 %v1181, %v644
    %v1433 = vmul.f32 %v1181, %v645
    %v1434 = vmul.f32 %v1185, %v644
    %v1435 = vmul.f32 %v1185, %v645
    %v1436 = vmul.f32 %v1189, %v644
    %v1437 = vmul.f32 %v1189, %v645
    %v1438 = vmul.f32 %v1193, %v644
    %v1439 = vmul.f32 %v1193, %v645
    %v1440 = vmul.f32 %v1197, %v644
    %v1441 = vmul.f32 %v1197, %v645
    %v1442 = vmul.f32 %v1201, %v644
    %v1443 = vmul.f32 %v1201, %v645
    %v1444 = vmul.f32 %v1205, %v644
    %v1445 = vmul.f32 %v1205, %v645
    %v1446 = vmul.f32 %v1209, %v644
    %v1447 = vmul.f32 %v1209, %v645
    %v1448 = vmul.f32 %v1213, %v644
    %v1449 = vmul.f32 %v1213, %v645
    %v1450 = vmul.f32 %v1217, %v644
    %v1451 = vmul.f32 %v1217, %v645
    %v1452 = vmul.f32 %v1221, %v644
    %v1453 = vmul.f32 %v1221, %v645
    %v1454 = vmul.f32 %v1225, %v644
    %v1455 = vmul.f32 %v1225, %v645
    %v1456 = vmul.f32 %v1229, %v644
    %v1457 = vmul.f32 %v1229, %v645
    %v1458 = vmul.f32 %v1233, %v644
    %v1459 = vmul.f32 %v1233, %v645
    %v1460 = vmul.f32 %v1237, %v644
    %v1461 = vmul.f32 %v1237, %v645
    %v1462 = vmul.f32 %v1241, %v644
    %v1463 = vmul.f32 %v1241, %v645
    %v1464 = vmul.f32 %v1245, %v644
    %v1465 = vmul.f32 %v1245, %v645
    %v1466 = vmul.f32 %v1249, %v644
    %v1467 = vmul.f32 %v1249, %v645
    %v1468 = vmul.f32 %v1253, %v644
    %v1469 = vmul.f32 %v1253, %v645
    %v1470 = vmul.f32 %v1257, %v644
    %v1471 = vmul.f32 %v1257, %v645
    %v1472 = vmul.f32 %v1261, %v644
    %v1473 = vmul.f32 %v1261, %v645
    %v1474 = vmul.f32 %v1265, %v644
    %v1475 = vmul.f32 %v1265, %v645
    %v1476 = vmul.f32 %v1269, %v644
    %v1477 = vmul.f32 %v1269, %v645
    %v1478 = vmul.f32 %v1273, %v644
    %v1479 = vmul.f32 %v1273, %v645
    %v1480 = vmul.f32 %v1277, %v644
    %v1481 = vmul.f32 %v1277, %v645
    %v1482 = vmul.f32 %v1281, %v644
    %v1483 = vmul.f32 %v1281, %v645
    %v1484 = vmul.f32 %v1285, %v644
    %v1485 = vmul.f32 %v1285, %v645
    %v1486 = vmul.f32 %v1289, %v644
    %v1487 = vmul.f32 %v1289, %v645
    %v1488 = vmul.f32 %v1293, %v644
    %v1489 = vmul.f32 %v1293, %v645
    %v1490 = vmul.f32 %v1297, %v644
    %v1491 = vmul.f32 %v1297, %v645
    %v1492 = vmul.f32 %v1301, %v644
    %v1493 = vmul.f32 %v1301, %v645
    %v1494 = vmul.f32 %v1366, 1.442695
    %v1495 = vpow.pop %v1494
    %v1496 = vmul.f32 %v1367, 1.442695
    %v1497 = vpow.pop %v1496
    %v1498 = vmul.f32 %v1368, 1.442695
    %v1499 = vpow.pop %v1498
    %v1500 = vmul.f32 %v1369, 1.442695
    %v1501 = vpow.pop %v1500
    %v1502 = vmul.f32 %v1370, 1.442695
    %v1503 = vpow.pop %v1502
    %v1504 = vmul.f32 %v1371, 1.442695
    %v1505 = vpow.pop %v1504
    %v1506 = vmul.f32 %v1372, 1.442695
    %v1507 = vpow.pop %v1506
    %v1508 = vmul.f32 %v1373, 1.442695
    %v1509 = vpow.pop %v1508
    %v1510 = vmul.f32 %v1374, 1.442695
    %v1511 = vpow.pop %v1510
    %v1512 = vmul.f32 %v1375, 1.442695
    %v1513 = vpow.pop %v1512
    %v1514 = vmul.f32 %v1376, 1.442695
    %v1515 = vpow.pop %v1514
    %v1516 = vmul.f32 %v1377, 1.442695
    %v1517 = vpow.pop %v1516
    %v1518 = vmul.f32 %v1378, 1.442695
    %v1519 = vpow.pop %v1518
    %v1520 = vmul.f32 %v1379, 1.442695
    %v1521 = vpow.pop %v1520
    %v1522 = vmul.f32 %v1380, 1.442695
    %v1523 = vpow.pop %v1522
    %v1524 = vmul.f32 %v1381, 1.442695
    %v1525 = vpow.pop %v1524
    %v1526 = vmul.f32 %v1382, 1.442695
    %v1527 = vpow.pop %v1526
    %v1528 = vmul.f32 %v1383, 1.442695
    %v1529 = vpow.pop %v1528
    %v1530 = vmul.f32 %v1384, 1.442695
    %v1531 = vpow.pop %v1530
    %v1532 = vmul.f32 %v1385, 1.442695
    %v1533 = vpow.pop %v1532
    %v1534 = vmul.f32 %v1386, 1.442695
    %v1535 = vpow.pop %v1534
    %v1536 = vmul.f32 %v1387, 1.442695
    %v1537 = vpow.pop %v1536
    %v1538 = vmul.f32 %v1388, 1.442695
    %v1539 = vpow.pop %v1538
    %v1540 = vmul.f32 %v1389, 1.442695
    %v1541 = vpow.pop %v1540
    %v1542 = vmul.f32 %v1390, 1.442695
    %v1543 = vpow.pop %v1542
    %v1544 = vmul.f32 %v1391, 1.442695
    %v1545 = vpow.pop %v1544
    %v1546 = vmul.f32 %v1392, 1.442695
    %v1547 = vpow.pop %v1546
    %v1548 = vmul.f32 %v1393, 1.442695
    %v1549 = vpow.pop %v1548
    %v1550 = vmul.f32 %v1394, 1.442695
    %v1551 = vpow.pop %v1550
    %v1552 = vmul.f32 %v1395, 1.442695
    %v1553 = vpow.pop %v1552
    %v1554 = vmul.f32 %v1396, 1.442695
    %v1555 = vpow.pop %v1554
    %v1556 = vmul.f32 %v1397, 1.442695
    %v1557 = vpow.pop %v1556
    %v1558 = vmul.f32 %v1398, 1.442695
    %v1559 = vpow.pop %v1558
    %v1560 = vmul.f32 %v1399, 1.442695
    %v1561 = vpow.pop %v1560
    %v1562 = vmul.f32 %v1400, 1.442695
    %v1563 = vpow.pop %v1562
    %v1564 = vmul.f32 %v1401, 1.442695
    %v1565 = vpow.pop %v1564
    %v1566 = vmul.f32 %v1402, 1.442695
    %v1567 = vpow.pop %v1566
    %v1568 = vmul.f32 %v1403, 1.442695
    %v1569 = vpow.pop %v1568
    %v1570 = vmul.f32 %v1404, 1.442695
    %v1571 = vpow.pop %v1570
    %v1572 = vmul.f32 %v1405, 1.442695
    %v1573 = vpow.pop %v1572
    %v1574 = vmul.f32 %v1406, 1.442695
    %v1575 = vpow.pop %v1574
    %v1576 = vmul.f32 %v1407, 1.442695
    %v1577 = vpow.pop %v1576
    %v1578 = vmul.f32 %v1408, 1.442695
    %v1579 = vpow.pop %v1578
    %v1580 = vmul.f32 %v1409, 1.442695
    %v1581 = vpow.pop %v1580
    %v1582 = vmul.f32 %v1410, 1.442695
    %v1583 = vpow.pop %v1582
    %v1584 = vmul.f32 %v1411, 1.442695
    %v1585 = vpow.pop %v1584
    %v1586 = vmul.f32 %v1412, 1.442695
    %v1587 = vpow.pop %v1586
    %v1588 = vmul.f32 %v1413, 1.442695
    %v1589 = vpow.pop %v1588
    %v1590 = vmul.f32 %v1414, 1.442695
    %v1591 = vpow.pop %v1590
    %v1592 = vmul.f32 %v1415, 1.442695
    %v1593 = vpow.pop %v1592
    %v1594 = vmul.f32 %v1416, 1.442695
    %v1595 = vpow.pop %v1594
    %v1596 = vmul.f32 %v1417, 1.442695
    %v1597 = vpow.pop %v1596
    %v1598 = vmul.f32 %v1418, 1.442695
    %v1599 = vpow.pop %v1598
    %v1600 = vmul.f32 %v1419, 1.442695
    %v1601 = vpow.pop %v1600
    %v1602 = vmul.f32 %v1420, 1.442695
    %v1603 = vpow.pop %v1602
    %v1604 = vmul.f32 %v1421, 1.442695
    %v1605 = vpow.pop %v1604
    %v1606 = vmul.f32 %v1422, 1.442695
    %v1607 = vpow.pop %v1606
    %v1608 = vmul.f32 %v1423, 1.442695
    %v1609 = vpow.pop %v1608
    %v1610 = vmul.f32 %v1424, 1.442695
    %v1611 = vpow.pop %v1610
    %v1612 = vmul.f32 %v1425, 1.442695
    %v1613 = vpow.pop %v1612
    %v1614 = vmul.f32 %v1426, 1.442695
    %v1615 = vpow.pop %v1614
    %v1616 = vmul.f32 %v1427, 1.442695
    %v1617 = vpow.pop %v1616
    %v1618 = vmul.f32 %v1428, 1.442695
    %v1619 = vpow.pop %v1618
    %v1620 = vmul.f32 %v1429, 1.442695
    %v1621 = vpow.pop %v1620
    %v1622 = vmul.f32 %v1430, 1.442695
    %v1623 = vpow.pop %v1622
    %v1624 = vmul.f32 %v1431, 1.442695
    %v1625 = vpow.pop %v1624
    %v1626 = vmul.f32 %v1432, 1.442695
    %v1627 = vpow.pop %v1626
    %v1628 = vmul.f32 %v1433, 1.442695
    %v1629 = vpow.pop %v1628
    %v1630 = vmul.f32 %v1434, 1.442695
    %v1631 = vpow.pop %v1630
    %v1632 = vmul.f32 %v1435, 1.442695
    %v1633 = vpow.pop %v1632
    %v1634 = vmul.f32 %v1436, 1.442695
    %v1635 = vpow.pop %v1634
    %v1636 = vmul.f32 %v1437, 1.442695
    %v1637 = vpow.pop %v1636
    %v1638 = vmul.f32 %v1438, 1.442695
    %v1639 = vpow.pop %v1638
    %v1640 = vmul.f32 %v1439, 1.442695
    %v1641 = vpow.pop %v1640
    %v1642 = vmul.f32 %v1440, 1.442695
    %v1643 = vpow.pop %v1642
    %v1644 = vmul.f32 %v1441, 1.442695
    %v1645 = vpow.pop %v1644
    %v1646 = vmul.f32 %v1442, 1.442695
    %v1647 = vpow.pop %v1646
    %v1648 = vmul.f32 %v1443, 1.442695
    %v1649 = vpow.pop %v1648
    %v1650 = vmul.f32 %v1444, 1.442695
    %v1651 = vpow.pop %v1650
    %v1652 = vmul.f32 %v1445, 1.442695
    %v1653 = vpow.pop %v1652
    %v1654 = vmul.f32 %v1446, 1.442695
    %v1655 = vpow.pop %v1654
    %v1656 = vmul.f32 %v1447, 1.442695
    %v1657 = vpow.pop %v1656
    %v1658 = vmul.f32 %v1448, 1.442695
    %v1659 = vpow.pop %v1658
    %v1660 = vmul.f32 %v1449, 1.442695
    %v1661 = vpow.pop %v1660
    %v1662 = vmul.f32 %v1450, 1.442695
    %v1663 = vpow.pop %v1662
    %v1664 = vmul.f32 %v1451, 1.442695
    %v1665 = vpow.pop %v1664
    %v1666 = vmul.f32 %v1452, 1.442695
    %v1667 = vpow.pop %v1666
    %v1668 = vmul.f32 %v1453, 1.442695
    %v1669 = vpow.pop %v1668
    %v1670 = vmul.f32 %v1454, 1.442695
    %v1671 = vpow.pop %v1670
    %v1672 = vmul.f32 %v1455, 1.442695
    %v1673 = vpow.pop %v1672
    %v1674 = vmul.f32 %v1456, 1.442695
    %v1675 = vpow.pop %v1674
    %v1676 = vmul.f32 %v1457, 1.442695
    %v1677 = vpow.pop %v1676
    %v1678 = vmul.f32 %v1458, 1.442695
    %v1679 = vpow.pop %v1678
    %v1680 = vmul.f32 %v1459, 1.442695
    %v1681 = vpow.pop %v1680
    %v1682 = vmul.f32 %v1460, 1.442695
    %v1683 = vpow.pop %v1682
    %v1684 = vmul.f32 %v1461, 1.442695
    %v1685 = vpow.pop %v1684
    %v1686 = vmul.f32 %v1462, 1.442695
    %v1687 = vpow.pop %v1686
    %v1688 = vmul.f32 %v1463, 1.442695
    %v1689 = vpow.pop %v1688
    %v1690 = vmul.f32 %v1464, 1.442695
    %v1691 = vpow.pop %v1690
    %v1692 = vmul.f32 %v1465, 1.442695
    %v1693 = vpow.pop %v1692
    %v1694 = vmul.f32 %v1466, 1.442695
    %v1695 = vpow.pop %v1694
    %v1696 = vmul.f32 %v1467, 1.442695
    %v1697 = vpow.pop %v1696
    %v1698 = vmul.f32 %v1468, 1.442695
    %v1699 = vpow.pop %v1698
    %v1700 = vmul.f32 %v1469, 1.442695
    %v1701 = vpow.pop %v1700
    %v1702 = vmul.f32 %v1470, 1.442695
    %v1703 = vpow.pop %v1702
    %v1704 = vmul.f32 %v1471, 1.442695
    %v1705 = vpow.pop %v1704
    %v1706 = vmul.f32 %v1472, 1.442695
    %v1707 = vpow.pop %v1706
    %v1708 = vmul.f32 %v1473, 1.442695
    %v1709 = vpow.pop %v1708
    %v1710 = vmul.f32 %v1474, 1.442695
    %v1711 = vpow.pop %v1710
    %v1712 = vmul.f32 %v1475, 1.442695
    %v1713 = vpow.pop %v1712
    %v1714 = vmul.f32 %v1476, 1.442695
    %v1715 = vpow.pop %v1714
    %v1716 = vmul.f32 %v1477, 1.442695
    %v1717 = vpow.pop %v1716
    %v1718 = vmul.f32 %v1478, 1.442695
    %v1719 = vpow.pop %v1718
    %v1720 = vmul.f32 %v1479, 1.442695
    %v1721 = vpow.pop %v1720
    %v1722 = vmul.f32 %v1480, 1.442695
    %v1723 = vpow.pop %v1722
    %v1724 = vmul.f32 %v1481, 1.442695
    %v1725 = vpow.pop %v1724
    %v1726 = vmul.f32 %v1482, 1.442695
    %v1727 = vpow.pop %v1726
    %v1728 = vmul.f32 %v1483, 1.442695
    %v1729 = vpow.pop %v1728
    %v1730 = vmul.f32 %v1484, 1.442695
    %v1731 = vpow.pop %v1730
    %v1732 = vmul.f32 %v1485, 1.442695
    %v1733 = vpow.pop %v1732
    %v1734 = vmul.f32 %v1486, 1.442695
    %v1735 = vpow.pop %v1734
    %v1736 = vmul.f32 %v1487, 1.442695
    %v1737 = vpow.pop %v1736
    %v1738 = vmul.f32 %v1488, 1.442695
    %v1739 = vpow.pop %v1738
    %v1740 = vmul.f32 %v1489, 1.442695
    %v1741 = vpow.pop %v1740
    %v1742 = vmul.f32 %v1490, 1.442695
    %v1743 = vpow.pop %v1742
    %v1744 = vmul.f32 %v1491, 1.442695
    %v1745 = vpow.pop %v1744
    %v1746 = vmul.f32 %v1492, 1.442695
    %v1747 = vpow.pop %v1746
    %v1748 = vmul.f32 %v1493, 1.442695
    %v1749 = vpow.pop %v1748
    %v1758 = vmul.f32 %v636, %v356
    %v1759 = vmul.f32 %v637, %v358
    %v1760 = vmul.f32 %v638, %v360
    %v1761 = vmul.f32 %v639, %v362
    %v1762 = vmul.f32 %v640, %v372
    %v1763 = vmul.f32 %v641, %v374
    %v1764 = vmul.f32 %v642, %v376
    %v1765 = vmul.f32 %v643, %v378
    %v1774 = vcombine.high %v1758, %v1758
    %v1776 = vunpack.c.l.s4 1966171168
    %v1777 = vunpack.c.0.s8 %v1776
    %v1778 = vlaneseq
    %v1779 = vshrl.u32 %v1778, 7
    %v1780 = vsub.s32 %v1777, %v1779
    %v1781 = vrot.slane %v1758, %v1780
    %v1783 = vunpack.c.l.s4 1966171168
    %v1784 = vunpack.c.0.s8 %v1783
    %v1785 = vlaneseq
    %v1786 = vshrl.u32 %v1785, 7
    %v1787 = vsub.s32 %v1784, %v1786
    %v1788 = vrot.slane %v1774, %v1787
    %v1789 = vcombine.high %v1781, %v1781
    %v1790 = vcombine.high %v1788, %v1788
    %v1792 = vunpack.c.l.s4 1966171168
    %v1793 = vunpack.c.0.s8 %v1792
    %v1794 = vlaneseq
    %v1795 = vshrl.u32 %v1794, 7
    %v1796 = vsub.s32 %v1793, %v1795
    %v1797 = vrot.slane %v1781, %v1796
    %v1799 = vunpack.c.l.s4 1966171168
    %v1800 = vunpack.c.0.s8 %v1799
    %v1801 = vlaneseq
    %v1802 = vshrl.u32 %v1801, 7
    %v1803 = vsub.s32 %v1800, %v1802
    %v1804 = vrot.slane %v1788, %v1803
    %v1806 = vunpack.c.l.s4 1966171168
    %v1807 = vunpack.c.0.s8 %v1806
    %v1808 = vlaneseq
    %v1809 = vshrl.u32 %v1808, 7
    %v1810 = vsub.s32 %v1807, %v1809
    %v1811 = vrot.slane %v1789, %v1810
    %v1813 = vunpack.c.l.s4 1966171168
    %v1814 = vunpack.c.0.s8 %v1813
    %v1815 = vlaneseq
    %v1816 = vshrl.u32 %v1815, 7
    %v1817 = vsub.s32 %v1814, %v1816
    %v1818 = vrot.slane %v1790, %v1817
    %v1819 = vcombine.high %v1797, %v1797
    %v1820 = vcombine.high %v1804, %v1804
    %v1821 = vcombine.high %v1811, %v1811
    %v1822 = vcombine.high %v1818, %v1818
    %v1823 = vcombine.high %v1759, %v1759
    %v1825 = vunpack.c.l.s4 1966171168
    %v1826 = vunpack.c.0.s8 %v1825
    %v1827 = vlaneseq
    %v1828 = vshrl.u32 %v1827, 7
    %v1829 = vsub.s32 %v1826, %v1828
    %v1830 = vrot.slane %v1759, %v1829
    %v1832 = vunpack.c.l.s4 1966171168
    %v1833 = vunpack.c.0.s8 %v1832
    %v1834 = vlaneseq
    %v1835 = vshrl.u32 %v1834, 7
    %v1836 = vsub.s32 %v1833, %v1835
    %v1837 = vrot.slane %v1823, %v1836
    %v1838 = vcombine.high %v1830, %v1830
    %v1839 = vcombine.high %v1837, %v1837
    %v1841 = vunpack.c.l.s4 1966171168
    %v1842 = vunpack.c.0.s8 %v1841
    %v1843 = vlaneseq
    %v1844 = vshrl.u32 %v1843, 7
    %v1845 = vsub.s32 %v1842, %v1844
    %v1846 = vrot.slane %v1830, %v1845
    %v1848 = vunpack.c.l.s4 1966171168
    %v1849 = vunpack.c.0.s8 %v1848
    %v1850 = vlaneseq
    %v1851 = vshrl.u32 %v1850, 7
    %v1852 = vsub.s32 %v1849, %v1851
    %v1853 = vrot.slane %v1837, %v1852
    %v1855 = vunpack.c.l.s4 1966171168
    %v1856 = vunpack.c.0.s8 %v1855
    %v1857 = vlaneseq
    %v1858 = vshrl.u32 %v1857, 7
    %v1859 = vsub.s32 %v1856, %v1858
    %v1860 = vrot.slane %v1838, %v1859
    %v1862 = vunpack.c.l.s4 1966171168
    %v1863 = vunpack.c.0.s8 %v1862
    %v1864 = vlaneseq
    %v1865 = vshrl.u32 %v1864, 7
    %v1866 = vsub.s32 %v1863, %v1865
    %v1867 = vrot.slane %v1839, %v1866
    %v1868 = vcombine.high %v1846, %v1846
    %v1869 = vcombine.high %v1853, %v1853
    %v1870 = vcombine.high %v1860, %v1860
    %v1871 = vcombine.high %v1867, %v1867
    %v1872 = vcombine.high %v1760, %v1760
    %v1874 = vunpack.c.l.s4 1966171168
    %v1875 = vunpack.c.0.s8 %v1874
    %v1876 = vlaneseq
    %v1877 = vshrl.u32 %v1876, 7
    %v1878 = vsub.s32 %v1875, %v1877
    %v1879 = vrot.slane %v1760, %v1878
    %v1881 = vunpack.c.l.s4 1966171168
    %v1882 = vunpack.c.0.s8 %v1881
    %v1883 = vlaneseq
    %v1884 = vshrl.u32 %v1883, 7
    %v1885 = vsub.s32 %v1882, %v1884
    %v1886 = vrot.slane %v1872, %v1885
    %v1887 = vcombine.high %v1879, %v1879
    %v1888 = vcombine.high %v1886, %v1886
    %v1890 = vunpack.c.l.s4 1966171168
    %v1891 = vunpack.c.0.s8 %v1890
    %v1892 = vlaneseq
    %v1893 = vshrl.u32 %v1892, 7
    %v1894 = vsub.s32 %v1891, %v1893
    %v1895 = vrot.slane %v1879, %v1894
    %v1897 = vunpack.c.l.s4 1966171168
    %v1898 = vunpack.c.0.s8 %v1897
    %v1899 = vlaneseq
    %v1900 = vshrl.u32 %v1899, 7
    %v1901 = vsub.s32 %v1898, %v1900
    %v1902 = vrot.slane %v1886, %v1901
    %v1904 = vunpack.c.l.s4 1966171168
    %v1905 = vunpack.c.0.s8 %v1904
    %v1906 = vlaneseq
    %v1907 = vshrl.u32 %v1906, 7
    %v1908 = vsub.s32 %v1905, %v1907
    %v1909 = vrot.slane %v1887, %v1908
    %v1911 = vunpack.c.l.s4 1966171168
    %v1912 = vunpack.c.0.s8 %v1911
    %v1913 = vlaneseq
    %v1914 = vshrl.u32 %v1913, 7
    %v1915 = vsub.s32 %v1912, %v1914
    %v1916 = vrot.slane %v1888, %v1915
    %v1917 = vcombine.high %v1895, %v1895
    %v1918 = vcombine.high %v1902, %v1902
    %v1919 = vcombine.high %v1909, %v1909
    %v1920 = vcombine.high %v1916, %v1916
    %v1921 = vcombine.high %v1761, %v1761
    %v1923 = vunpack.c.l.s4 1966171168
    %v1924 = vunpack.c.0.s8 %v1923
    %v1925 = vlaneseq
    %v1926 = vshrl.u32 %v1925, 7
    %v1927 = vsub.s32 %v1924, %v1926
    %v1928 = vrot.slane %v1761, %v1927
    %v1930 = vunpack.c.l.s4 1966171168
    %v1931 = vunpack.c.0.s8 %v1930
    %v1932 = vlaneseq
    %v1933 = vshrl.u32 %v1932, 7
    %v1934 = vsub.s32 %v1931, %v1933
    %v1935 = vrot.slane %v1921, %v1934
    %v1936 = vcombine.high %v1928, %v1928
    %v1937 = vcombine.high %v1935, %v1935
    %v1939 = vunpack.c.l.s4 1966171168
    %v1940 = vunpack.c.0.s8 %v1939
    %v1941 = vlaneseq
    %v1942 = vshrl.u32 %v1941, 7
    %v1943 = vsub.s32 %v1940, %v1942
    %v1944 = vrot.slane %v1928, %v1943
    %v1946 = vunpack.c.l.s4 1966171168
    %v1947 = vunpack.c.0.s8 %v1946
    %v1948 = vlaneseq
    %v1949 = vshrl.u32 %v1948, 7
    %v1950 = vsub.s32 %v1947, %v1949
    %v1951 = vrot.slane %v1935, %v1950
    %v1953 = vunpack.c.l.s4 1966171168
    %v1954 = vunpack.c.0.s8 %v1953
    %v1955 = vlaneseq
    %v1956 = vshrl.u32 %v1955, 7
    %v1957 = vsub.s32 %v1954, %v1956
    %v1958 = vrot.slane %v1936, %v1957
    %v1960 = vunpack.c.l.s4 1966171168
    %v1961 = vunpack.c.0.s8 %v1960
    %v1962 = vlaneseq
    %v1963 = vshrl.u32 %v1962, 7
    %v1964 = vsub.s32 %v1961, %v1963
    %v1965 = vrot.slane %v1937, %v1964
    %v1966 = vcombine.high %v1944, %v1944
    %v1967 = vcombine.high %v1951, %v1951
    %v1968 = vcombine.high %v1958, %v1958
    %v1969 = vcombine.high %v1965, %v1965
    %v1970 = vcombine.high %v1762, %v1762
    %v1972 = vunpack.c.l.s4 1966171168
    %v1973 = vunpack.c.0.s8 %v1972
    %v1974 = vlaneseq
    %v1975 = vshrl.u32 %v1974, 7
    %v1976 = vsub.s32 %v1973, %v1975
    %v1977 = vrot.slane %v1762, %v1976
    %v1979 = vunpack.c.l.s4 1966171168
    %v1980 = vunpack.c.0.s8 %v1979
    %v1981 = vlaneseq
    %v1982 = vshrl.u32 %v1981, 7
    %v1983 = vsub.s32 %v1980, %v1982
    %v1984 = vrot.slane %v1970, %v1983
    %v1985 = vcombine.high %v1977, %v1977
    %v1986 = vcombine.high %v1984, %v1984
    %v1988 = vunpack.c.l.s4 1966171168
    %v1989 = vunpack.c.0.s8 %v1988
    %v1990 = vlaneseq
    %v1991 = vshrl.u32 %v1990, 7
    %v1992 = vsub.s32 %v1989, %v1991
    %v1993 = vrot.slane %v1977, %v1992
    %v1995 = vunpack.c.l.s4 1966171168
    %v1996 = vunpack.c.0.s8 %v1995
    %v1997 = vlaneseq
    %v1998 = vshrl.u32 %v1997, 7
    %v1999 = vsub.s32 %v1996, %v1998
    %v2000 = vrot.slane %v1984, %v1999
    %v2002 = vunpack.c.l.s4 1966171168
    %v2003 = vunpack.c.0.s8 %v2002
    %v2004 = vlaneseq
    %v2005 = vshrl.u32 %v2004, 7
    %v2006 = vsub.s32 %v2003, %v2005
    %v2007 = vrot.slane %v1985, %v2006
    %v2009 = vunpack.c.l.s4 1966171168
    %v2010 = vunpack.c.0.s8 %v2009
    %v2011 = vlaneseq
    %v2012 = vshrl.u32 %v2011, 7
    %v2013 = vsub.s32 %v2010, %v2012
    %v2014 = vrot.slane %v1986, %v2013
    %v2015 = vcombine.high %v1993, %v1993
    %v2016 = vcombine.high %v2000, %v2000
    %v2017 = vcombine.high %v2007, %v2007
    %v2018 = vcombine.high %v2014, %v2014
    %v2019 = vcombine.high %v1763, %v1763
    %v2021 = vunpack.c.l.s4 1966171168
    %v2022 = vunpack.c.0.s8 %v2021
    %v2023 = vlaneseq
    %v2024 = vshrl.u32 %v2023, 7
    %v2025 = vsub.s32 %v2022, %v2024
    %v2026 = vrot.slane %v1763, %v2025
    %v2028 = vunpack.c.l.s4 1966171168
    %v2029 = vunpack.c.0.s8 %v2028
    %v2030 = vlaneseq
    %v2031 = vshrl.u32 %v2030, 7
    %v2032 = vsub.s32 %v2029, %v2031
    %v2033 = vrot.slane %v2019, %v2032
    %v2034 = vcombine.high %v2026, %v2026
    %v2035 = vcombine.high %v2033, %v2033
    %v2037 = vunpack.c.l.s4 1966171168
    %v2038 = vunpack.c.0.s8 %v2037
    %v2039 = vlaneseq
    %v2040 = vshrl.u32 %v2039, 7
    %v2041 = vsub.s32 %v2038, %v2040
    %v2042 = vrot.slane %v2026, %v2041
    %v2044 = vunpack.c.l.s4 1966171168
    %v2045 = vunpack.c.0.s8 %v2044
    %v2046 = vlaneseq
    %v2047 = vshrl.u32 %v2046, 7
    %v2048 = vsub.s32 %v2045, %v2047
    %v2049 = vrot.slane %v2033, %v2048
    %v2051 = vunpack.c.l.s4 1966171168
    %v2052 = vunpack.c.0.s8 %v2051
    %v2053 = vlaneseq
    %v2054 = vshrl.u32 %v2053, 7
    %v2055 = vsub.s32 %v2052, %v2054
    %v2056 = vrot.slane %v2034, %v2055
    %v2058 = vunpack.c.l.s4 1966171168
    %v2059 = vunpack.c.0.s8 %v2058
    %v2060 = vlaneseq
    %v2061 = vshrl.u32 %v2060, 7
    %v2062 = vsub.s32 %v2059, %v2061
    %v2063 = vrot.slane %v2035, %v2062
    %v2064 = vcombine.high %v2042, %v2042
    %v2065 = vcombine.high %v2049, %v2049
    %v2066 = vcombine.high %v2056, %v2056
    %v2067 = vcombine.high %v2063, %v2063
    %v2068 = vcombine.high %v1764, %v1764
    %v2070 = vunpack.c.l.s4 1966171168
    %v2071 = vunpack.c.0.s8 %v2070
    %v2072 = vlaneseq
    %v2073 = vshrl.u32 %v2072, 7
    %v2074 = vsub.s32 %v2071, %v2073
    %v2075 = vrot.slane %v1764, %v2074
    %v2077 = vunpack.c.l.s4 1966171168
    %v2078 = vunpack.c.0.s8 %v2077
    %v2079 = vlaneseq
    %v2080 = vshrl.u32 %v2079, 7
    %v2081 = vsub.s32 %v2078, %v2080
    %v2082 = vrot.slane %v2068, %v2081
    %v2083 = vcombine.high %v2075, %v2075
    %v2084 = vcombine.high %v2082, %v2082
    %v2086 = vunpack.c.l.s4 1966171168
    %v2087 = vunpack.c.0.s8 %v2086
    %v2088 = vlaneseq
    %v2089 = vshrl.u32 %v2088, 7
    %v2090 = vsub.s32 %v2087, %v2089
    %v2091 = vrot.slane %v2075, %v2090
    %v2093 = vunpack.c.l.s4 1966171168
    %v2094 = vunpack.c.0.s8 %v2093
    %v2095 = vlaneseq
    %v2096 = vshrl.u32 %v2095, 7
    %v2097 = vsub.s32 %v2094, %v2096
    %v2098 = vrot.slane %v2082, %v2097
    %v2100 = vunpack.c.l.s4 1966171168
    %v2101 = vunpack.c.0.s8 %v2100
    %v2102 = vlaneseq
    %v2103 = vshrl.u32 %v2102, 7
    %v2104 = vsub.s32 %v2101, %v2103
    %v2105 = vrot.slane %v2083, %v2104
    %v2107 = vunpack.c.l.s4 1966171168
    %v2108 = vunpack.c.0.s8 %v2107
    %v2109 = vlaneseq
    %v2110 = vshrl.u32 %v2109, 7
    %v2111 = vsub.s32 %v2108, %v2110
    %v2112 = vrot.slane %v2084, %v2111
    %v2113 = vcombine.high %v2091, %v2091
    %v2114 = vcombine.high %v2098, %v2098
    %v2115 = vcombine.high %v2105, %v2105
    %v2116 = vcombine.high %v2112, %v2112
    %v2117 = vcombine.high %v1765, %v1765
    %v2119 = vunpack.c.l.s4 1966171168
    %v2120 = vunpack.c.0.s8 %v2119
    %v2121 = vlaneseq
    %v2122 = vshrl.u32 %v2121, 7
    %v2123 = vsub.s32 %v2120, %v2122
    %v2124 = vrot.slane %v1765, %v2123
    %v2126 = vunpack.c.l.s4 1966171168
    %v2127 = vunpack.c.0.s8 %v2126
    %v2128 = vlaneseq
    %v2129 = vshrl.u32 %v2128, 7
    %v2130 = vsub.s32 %v2127, %v2129
    %v2131 = vrot.slane %v2117, %v2130
    %v2132 = vcombine.high %v2124, %v2124
    %v2133 = vcombine.high %v2131, %v2131
    %v2135 = vunpack.c.l.s4 1966171168
    %v2136 = vunpack.c.0.s8 %v2135
    %v2137 = vlaneseq
    %v2138 = vshrl.u32 %v2137, 7
    %v2139 = vsub.s32 %v2136, %v2138
    %v2140 = vrot.slane %v2124, %v2139
    %v2142 = vunpack.c.l.s4 1966171168
    %v2143 = vunpack.c.0.s8 %v2142
    %v2144 = vlaneseq
    %v2145 = vshrl.u32 %v2144, 7
    %v2146 = vsub.s32 %v2143, %v2145
    %v2147 = vrot.slane %v2131, %v2146
    %v2149 = vunpack.c.l.s4 1966171168
    %v2150 = vunpack.c.0.s8 %v2149
    %v2151 = vlaneseq
    %v2152 = vshrl.u32 %v2151, 7
    %v2153 = vsub.s32 %v2150, %v2152
    %v2154 = vrot.slane %v2132, %v2153
    %v2156 = vunpack.c.l.s4 1966171168
    %v2157 = vunpack.c.0.s8 %v2156
    %v2158 = vlaneseq
    %v2159 = vshrl.u32 %v2158, 7
    %v2160 = vsub.s32 %v2157, %v2159
    %v2161 = vrot.slane %v2133, %v2160
    %v2162 = vcombine.high %v2140, %v2140
    %v2163 = vcombine.high %v2147, %v2147
    %v2164 = vcombine.high %v2154, %v2154
    %v2165 = vcombine.high %v2161, %v2161
    %v2166 = vlaneseq
    %v2167 = vshrl.u32 %v2166, 7
    %v2168 = vsub.s32 0, %v2167
    %v2169 = vrot.slane %v462, %v2168
    %s2171 = sor.u32 256, 32
    %2172 = vbcast.lane.b32.xlu0 %v2169, %s2171
    %v2173 = vpop.permute.xlu0 %2172
    %s2175 = sor.u32 256, 40
    %2176 = vbcast.lane.b32.xlu0 %v2169, %s2175
    %v2177 = vpop.permute.xlu0 %2176
    %v2178 = vlaneseq
    %v2179 = vshrl.u32 %v2178, 7
    %v2180 = vsub.s32 1, %v2179
    %v2181 = vrot.slane %v462, %v2180
    %s2183 = sor.u32 256, 32
    %2184 = vbcast.lane.b32.xlu0 %v2181, %s2183
    %v2185 = vpop.permute.xlu0 %2184
    %s2187 = sor.u32 256, 40
    %2188 = vbcast.lane.b32.xlu0 %v2181, %s2187
    %v2189 = vpop.permute.xlu0 %2188
    %v2190 = vlaneseq
    %v2191 = vshrl.u32 %v2190, 7
    %v2192 = vsub.s32 2, %v2191
    %v2193 = vrot.slane %v462, %v2192
    %s2195 = sor.u32 256, 32
    %2196 = vbcast.lane.b32.xlu0 %v2193, %s2195
    %v2197 = vpop.permute.xlu0 %2196
    %s2199 = sor.u32 256, 40
    %2200 = vbcast.lane.b32.xlu0 %v2193, %s2199
    %v2201 = vpop.permute.xlu0 %2200
    %v2202 = vlaneseq
    %v2203 = vshrl.u32 %v2202, 7
    %v2204 = vsub.s32 3, %v2203
    %v2205 = vrot.slane %v462, %v2204
    %s2207 = sor.u32 256, 32
    %2208 = vbcast.lane.b32.xlu0 %v2205, %s2207
    %v2209 = vpop.permute.xlu0 %2208
    %s2211 = sor.u32 256, 40
    %2212 = vbcast.lane.b32.xlu0 %v2205, %s2211
    %v2213 = vpop.permute.xlu0 %2212
    %v2214 = vlaneseq
    %v2215 = vshrl.u32 %v2214, 7
    %v2216 = vsub.s32 4, %v2215
    %v2217 = vrot.slane %v462, %v2216
    %s2219 = sor.u32 256, 32
    %2220 = vbcast.lane.b32.xlu0 %v2217, %s2219
    %v2221 = vpop.permute.xlu0 %2220
    %s2223 = sor.u32 256, 40
    %2224 = vbcast.lane.b32.xlu0 %v2217, %s2223
    %v2225 = vpop.permute.xlu0 %2224
    %v2226 = vlaneseq
    %v2227 = vshrl.u32 %v2226, 7
    %v2228 = vsub.s32 5, %v2227
    %v2229 = vrot.slane %v462, %v2228
    %s2231 = sor.u32 256, 32
    %2232 = vbcast.lane.b32.xlu0 %v2229, %s2231
    %v2233 = vpop.permute.xlu0 %2232
    %s2235 = sor.u32 256, 40
    %2236 = vbcast.lane.b32.xlu0 %v2229, %s2235
    %v2237 = vpop.permute.xlu0 %2236
    %v2238 = vlaneseq
    %v2239 = vshrl.u32 %v2238, 7
    %v2240 = vsub.s32 6, %v2239
    %v2241 = vrot.slane %v462, %v2240
    %s2243 = sor.u32 256, 32
    %2244 = vbcast.lane.b32.xlu0 %v2241, %s2243
    %v2245 = vpop.permute.xlu0 %2244
    %s2247 = sor.u32 256, 40
    %2248 = vbcast.lane.b32.xlu0 %v2241, %s2247
    %v2249 = vpop.permute.xlu0 %2248
    %v2250 = vlaneseq
    %v2251 = vshrl.u32 %v2250, 7
    %v2252 = vsub.s32 7, %v2251
    %v2253 = vrot.slane %v462, %v2252
    %s2255 = sor.u32 256, 32
    %2256 = vbcast.lane.b32.xlu0 %v2253, %s2255
    %v2257 = vpop.permute.xlu0 %2256
    %s2259 = sor.u32 256, 40
    %2260 = vbcast.lane.b32.xlu0 %v2253, %s2259
    %v2261 = vpop.permute.xlu0 %2260
    %v2262 = vlaneseq
    %v2263 = vshrl.u32 %v2262, 7
    %v2264 = vsub.s32 0, %v2263
    %v2265 = vrot.slane %v467, %v2264
    %s2267 = sor.u32 256, 32
    %2268 = vbcast.lane.b32.xlu0 %v2265, %s2267
    %v2269 = vpop.permute.xlu0 %2268
    %s2271 = sor.u32 256, 40
    %2272 = vbcast.lane.b32.xlu0 %v2265, %s2271
    %v2273 = vpop.permute.xlu0 %2272
    %v2274 = vlaneseq
    %v2275 = vshrl.u32 %v2274, 7
    %v2276 = vsub.s32 1, %v2275
    %v2277 = vrot.slane %v467, %v2276
    %s2279 = sor.u32 256, 32
    %2280 = vbcast.lane.b32.xlu0 %v2277, %s2279
    %v2281 = vpop.permute.xlu0 %2280
    %s2283 = sor.u32 256, 40
    %2284 = vbcast.lane.b32.xlu0 %v2277, %s2283
    %v2285 = vpop.permute.xlu0 %2284
    %v2286 = vlaneseq
    %v2287 = vshrl.u32 %v2286, 7
    %v2288 = vsub.s32 2, %v2287
    %v2289 = vrot.slane %v467, %v2288
    %s2291 = sor.u32 256, 32
    %2292 = vbcast.lane.b32.xlu0 %v2289, %s2291
    %v2293 = vpop.permute.xlu0 %2292
    %s2295 = sor.u32 256, 40
    %2296 = vbcast.lane.b32.xlu0 %v2289, %s2295
    %v2297 = vpop.permute.xlu0 %2296
    %v2298 = vlaneseq
    %v2299 = vshrl.u32 %v2298, 7
    %v2300 = vsub.s32 3, %v2299
    %v2301 = vrot.slane %v467, %v2300
    %s2303 = sor.u32 256, 32
    %2304 = vbcast.lane.b32.xlu0 %v2301, %s2303
    %v2305 = vpop.permute.xlu0 %2304
    %s2307 = sor.u32 256, 40
    %2308 = vbcast.lane.b32.xlu0 %v2301, %s2307
    %v2309 = vpop.permute.xlu0 %2308
    %v2310 = vlaneseq
    %v2311 = vshrl.u32 %v2310, 7
    %v2312 = vsub.s32 4, %v2311
    %v2313 = vrot.slane %v467, %v2312
    %s2315 = sor.u32 256, 32
    %2316 = vbcast.lane.b32.xlu0 %v2313, %s2315
    %v2317 = vpop.permute.xlu0 %2316
    %s2319 = sor.u32 256, 40
    %2320 = vbcast.lane.b32.xlu0 %v2313, %s2319
    %v2321 = vpop.permute.xlu0 %2320
    %v2322 = vlaneseq
    %v2323 = vshrl.u32 %v2322, 7
    %v2324 = vsub.s32 5, %v2323
    %v2325 = vrot.slane %v467, %v2324
    %s2327 = sor.u32 256, 32
    %2328 = vbcast.lane.b32.xlu0 %v2325, %s2327
    %v2329 = vpop.permute.xlu0 %2328
    %s2331 = sor.u32 256, 40
    %2332 = vbcast.lane.b32.xlu0 %v2325, %s2331
    %v2333 = vpop.permute.xlu0 %2332
    %v2334 = vlaneseq
    %v2335 = vshrl.u32 %v2334, 7
    %v2336 = vsub.s32 6, %v2335
    %v2337 = vrot.slane %v467, %v2336
    %s2339 = sor.u32 256, 32
    %2340 = vbcast.lane.b32.xlu0 %v2337, %s2339
    %v2341 = vpop.permute.xlu0 %2340
    %s2343 = sor.u32 256, 40
    %2344 = vbcast.lane.b32.xlu0 %v2337, %s2343
    %v2345 = vpop.permute.xlu0 %2344
    %v2346 = vlaneseq
    %v2347 = vshrl.u32 %v2346, 7
    %v2348 = vsub.s32 7, %v2347
    %v2349 = vrot.slane %v467, %v2348
    %s2351 = sor.u32 256, 32
    %2352 = vbcast.lane.b32.xlu0 %v2349, %s2351
    %v2353 = vpop.permute.xlu0 %2352
    %s2355 = sor.u32 256, 40
    %2356 = vbcast.lane.b32.xlu0 %v2349, %s2355
    %v2357 = vpop.permute.xlu0 %2356
    %v2358 = vlaneseq
    %v2359 = vshrl.u32 %v2358, 7
    %v2360 = vsub.s32 0, %v2359
    %v2361 = vrot.slane %v472, %v2360
    %s2363 = sor.u32 256, 32
    %2364 = vbcast.lane.b32.xlu0 %v2361, %s2363
    %v2365 = vpop.permute.xlu0 %2364
    %s2367 = sor.u32 256, 40
    %2368 = vbcast.lane.b32.xlu0 %v2361, %s2367
    %v2369 = vpop.permute.xlu0 %2368
    %v2370 = vlaneseq
    %v2371 = vshrl.u32 %v2370, 7
    %v2372 = vsub.s32 1, %v2371
    %v2373 = vrot.slane %v472, %v2372
    %s2375 = sor.u32 256, 32
    %2376 = vbcast.lane.b32.xlu0 %v2373, %s2375
    %v2377 = vpop.permute.xlu0 %2376
    %s2379 = sor.u32 256, 40
    %2380 = vbcast.lane.b32.xlu0 %v2373, %s2379
    %v2381 = vpop.permute.xlu0 %2380
    %v2382 = vlaneseq
    %v2383 = vshrl.u32 %v2382, 7
    %v2384 = vsub.s32 2, %v2383
    %v2385 = vrot.slane %v472, %v2384
    %s2387 = sor.u32 256, 32
    %2388 = vbcast.lane.b32.xlu0 %v2385, %s2387
    %v2389 = vpop.permute.xlu0 %2388
    %s2391 = sor.u32 256, 40
    %2392 = vbcast.lane.b32.xlu0 %v2385, %s2391
    %v2393 = vpop.permute.xlu0 %2392
    %v2394 = vlaneseq
    %v2395 = vshrl.u32 %v2394, 7
    %v2396 = vsub.s32 3, %v2395
    %v2397 = vrot.slane %v472, %v2396
    %s2399 = sor.u32 256, 32
    %2400 = vbcast.lane.b32.xlu0 %v2397, %s2399
    %v2401 = vpop.permute.xlu0 %2400
    %s2403 = sor.u32 256, 40
    %2404 = vbcast.lane.b32.xlu0 %v2397, %s2403
    %v2405 = vpop.permute.xlu0 %2404
    %v2406 = vlaneseq
    %v2407 = vshrl.u32 %v2406, 7
    %v2408 = vsub.s32 4, %v2407
    %v2409 = vrot.slane %v472, %v2408
    %s2411 = sor.u32 256, 32
    %2412 = vbcast.lane.b32.xlu0 %v2409, %s2411
    %v2413 = vpop.permute.xlu0 %2412
    %s2415 = sor.u32 256, 40
    %2416 = vbcast.lane.b32.xlu0 %v2409, %s2415
    %v2417 = vpop.permute.xlu0 %2416
    %v2418 = vlaneseq
    %v2419 = vshrl.u32 %v2418, 7
    %v2420 = vsub.s32 5, %v2419
    %v2421 = vrot.slane %v472, %v2420
    %s2423 = sor.u32 256, 32
    %2424 = vbcast.lane.b32.xlu0 %v2421, %s2423
    %v2425 = vpop.permute.xlu0 %2424
    %s2427 = sor.u32 256, 40
    %2428 = vbcast.lane.b32.xlu0 %v2421, %s2427
    %v2429 = vpop.permute.xlu0 %2428
    %v2430 = vlaneseq
    %v2431 = vshrl.u32 %v2430, 7
    %v2432 = vsub.s32 6, %v2431
    %v2433 = vrot.slane %v472, %v2432
    %s2435 = sor.u32 256, 32
    %2436 = vbcast.lane.b32.xlu0 %v2433, %s2435
    %v2437 = vpop.permute.xlu0 %2436
    %s2439 = sor.u32 256, 40
    %2440 = vbcast.lane.b32.xlu0 %v2433, %s2439
    %v2441 = vpop.permute.xlu0 %2440
    %v2442 = vlaneseq
    %v2443 = vshrl.u32 %v2442, 7
    %v2444 = vsub.s32 7, %v2443
    %v2445 = vrot.slane %v472, %v2444
    %s2447 = sor.u32 256, 32
    %2448 = vbcast.lane.b32.xlu0 %v2445, %s2447
    %v2449 = vpop.permute.xlu0 %2448
    %s2451 = sor.u32 256, 40
    %2452 = vbcast.lane.b32.xlu0 %v2445, %s2451
    %v2453 = vpop.permute.xlu0 %2452
    %v2454 = vlaneseq
    %v2455 = vshrl.u32 %v2454, 7
    %v2456 = vsub.s32 0, %v2455
    %v2457 = vrot.slane %v477, %v2456
    %s2459 = sor.u32 256, 32
    %2460 = vbcast.lane.b32.xlu0 %v2457, %s2459
    %v2461 = vpop.permute.xlu0 %2460
    %s2463 = sor.u32 256, 40
    %2464 = vbcast.lane.b32.xlu0 %v2457, %s2463
    %v2465 = vpop.permute.xlu0 %2464
    %v2466 = vlaneseq
    %v2467 = vshrl.u32 %v2466, 7
    %v2468 = vsub.s32 1, %v2467
    %v2469 = vrot.slane %v477, %v2468
    %s2471 = sor.u32 256, 32
    %2472 = vbcast.lane.b32.xlu0 %v2469, %s2471
    %v2473 = vpop.permute.xlu0 %2472
    %s2475 = sor.u32 256, 40
    %2476 = vbcast.lane.b32.xlu0 %v2469, %s2475
    %v2477 = vpop.permute.xlu0 %2476
    %v2478 = vlaneseq
    %v2479 = vshrl.u32 %v2478, 7
    %v2480 = vsub.s32 2, %v2479
    %v2481 = vrot.slane %v477, %v2480
    %s2483 = sor.u32 256, 32
    %2484 = vbcast.lane.b32.xlu0 %v2481, %s2483
    %v2485 = vpop.permute.xlu0 %2484
    %s2487 = sor.u32 256, 40
    %2488 = vbcast.lane.b32.xlu0 %v2481, %s2487
    %v2489 = vpop.permute.xlu0 %2488
    %v2490 = vlaneseq
    %v2491 = vshrl.u32 %v2490, 7
    %v2492 = vsub.s32 3, %v2491
    %v2493 = vrot.slane %v477, %v2492
    %s2495 = sor.u32 256, 32
    %2496 = vbcast.lane.b32.xlu0 %v2493, %s2495
    %v2497 = vpop.permute.xlu0 %2496
    %s2499 = sor.u32 256, 40
    %2500 = vbcast.lane.b32.xlu0 %v2493, %s2499
    %v2501 = vpop.permute.xlu0 %2500
    %v2502 = vlaneseq
    %v2503 = vshrl.u32 %v2502, 7
    %v2504 = vsub.s32 4, %v2503
    %v2505 = vrot.slane %v477, %v2504
    %s2507 = sor.u32 256, 32
    %2508 = vbcast.lane.b32.xlu0 %v2505, %s2507
    %v2509 = vpop.permute.xlu0 %2508
    %s2511 = sor.u32 256, 40
    %2512 = vbcast.lane.b32.xlu0 %v2505, %s2511
    %v2513 = vpop.permute.xlu0 %2512
    %v2514 = vlaneseq
    %v2515 = vshrl.u32 %v2514, 7
    %v2516 = vsub.s32 5, %v2515
    %v2517 = vrot.slane %v477, %v2516
    %s2519 = sor.u32 256, 32
    %2520 = vbcast.lane.b32.xlu0 %v2517, %s2519
    %v2521 = vpop.permute.xlu0 %2520
    %s2523 = sor.u32 256, 40
    %2524 = vbcast.lane.b32.xlu0 %v2517, %s2523
    %v2525 = vpop.permute.xlu0 %2524
    %v2526 = vlaneseq
    %v2527 = vshrl.u32 %v2526, 7
    %v2528 = vsub.s32 6, %v2527
    %v2529 = vrot.slane %v477, %v2528
    %s2531 = sor.u32 256, 32
    %2532 = vbcast.lane.b32.xlu0 %v2529, %s2531
    %v2533 = vpop.permute.xlu0 %2532
    %s2535 = sor.u32 256, 40
    %2536 = vbcast.lane.b32.xlu0 %v2529, %s2535
    %v2537 = vpop.permute.xlu0 %2536
    %v2538 = vlaneseq
    %v2539 = vshrl.u32 %v2538, 7
    %v2540 = vsub.s32 7, %v2539
    %v2541 = vrot.slane %v477, %v2540
    %s2543 = sor.u32 256, 32
    %2544 = vbcast.lane.b32.xlu0 %v2541, %s2543
    %v2545 = vpop.permute.xlu0 %2544
    %s2547 = sor.u32 256, 40
    %2548 = vbcast.lane.b32.xlu0 %v2541, %s2547
    %v2549 = vpop.permute.xlu0 %2548
    %v2550 = vlaneseq
    %v2551 = vshrl.u32 %v2550, 7
    %v2552 = vsub.s32 0, %v2551
    %v2553 = vrot.slane %v482, %v2552
    %s2555 = sor.u32 256, 32
    %2556 = vbcast.lane.b32.xlu0 %v2553, %s2555
    %v2557 = vpop.permute.xlu0 %2556
    %s2559 = sor.u32 256, 40
    %2560 = vbcast.lane.b32.xlu0 %v2553, %s2559
    %v2561 = vpop.permute.xlu0 %2560
    %v2562 = vlaneseq
    %v2563 = vshrl.u32 %v2562, 7
    %v2564 = vsub.s32 1, %v2563
    %v2565 = vrot.slane %v482, %v2564
    %s2567 = sor.u32 256, 32
    %2568 = vbcast.lane.b32.xlu0 %v2565, %s2567
    %v2569 = vpop.permute.xlu0 %2568
    %s2571 = sor.u32 256, 40
    %2572 = vbcast.lane.b32.xlu0 %v2565, %s2571
    %v2573 = vpop.permute.xlu0 %2572
    %v2574 = vlaneseq
    %v2575 = vshrl.u32 %v2574, 7
    %v2576 = vsub.s32 2, %v2575
    %v2577 = vrot.slane %v482, %v2576
    %s2579 = sor.u32 256, 32
    %2580 = vbcast.lane.b32.xlu0 %v2577, %s2579
    %v2581 = vpop.permute.xlu0 %2580
    %s2583 = sor.u32 256, 40
    %2584 = vbcast.lane.b32.xlu0 %v2577, %s2583
    %v2585 = vpop.permute.xlu0 %2584
    %v2586 = vlaneseq
    %v2587 = vshrl.u32 %v2586, 7
    %v2588 = vsub.s32 3, %v2587
    %v2589 = vrot.slane %v482, %v2588
    %s2591 = sor.u32 256, 32
    %2592 = vbcast.lane.b32.xlu0 %v2589, %s2591
    %v2593 = vpop.permute.xlu0 %2592
    %s2595 = sor.u32 256, 40
    %2596 = vbcast.lane.b32.xlu0 %v2589, %s2595
    %v2597 = vpop.permute.xlu0 %2596
    %v2598 = vlaneseq
    %v2599 = vshrl.u32 %v2598, 7
    %v2600 = vsub.s32 4, %v2599
    %v2601 = vrot.slane %v482, %v2600
    %s2603 = sor.u32 256, 32
    %2604 = vbcast.lane.b32.xlu0 %v2601, %s2603
    %v2605 = vpop.permute.xlu0 %2604
    %s2607 = sor.u32 256, 40
    %2608 = vbcast.lane.b32.xlu0 %v2601, %s2607
    %v2609 = vpop.permute.xlu0 %2608
    %v2610 = vlaneseq
    %v2611 = vshrl.u32 %v2610, 7
    %v2612 = vsub.s32 5, %v2611
    %v2613 = vrot.slane %v482, %v2612
    %s2615 = sor.u32 256, 32
    %2616 = vbcast.lane.b32.xlu0 %v2613, %s2615
    %v2617 = vpop.permute.xlu0 %2616
    %s2619 = sor.u32 256, 40
    %2620 = vbcast.lane.b32.xlu0 %v2613, %s2619
    %v2621 = vpop.permute.xlu0 %2620
    %v2622 = vlaneseq
    %v2623 = vshrl.u32 %v2622, 7
    %v2624 = vsub.s32 6, %v2623
    %v2625 = vrot.slane %v482, %v2624
    %s2627 = sor.u32 256, 32
    %2628 = vbcast.lane.b32.xlu0 %v2625, %s2627
    %v2629 = vpop.permute.xlu0 %2628
    %s2631 = sor.u32 256, 40
    %2632 = vbcast.lane.b32.xlu0 %v2625, %s2631
    %v2633 = vpop.permute.xlu0 %2632
    %v2634 = vlaneseq
    %v2635 = vshrl.u32 %v2634, 7
    %v2636 = vsub.s32 7, %v2635
    %v2637 = vrot.slane %v482, %v2636
    %s2639 = sor.u32 256, 32
    %2640 = vbcast.lane.b32.xlu0 %v2637, %s2639
    %v2641 = vpop.permute.xlu0 %2640
    %s2643 = sor.u32 256, 40
    %2644 = vbcast.lane.b32.xlu0 %v2637, %s2643
    %v2645 = vpop.permute.xlu0 %2644
    %v2646 = vlaneseq
    %v2647 = vshrl.u32 %v2646, 7
    %v2648 = vsub.s32 0, %v2647
    %v2649 = vrot.slane %v487, %v2648
    %s2651 = sor.u32 256, 32
    %2652 = vbcast.lane.b32.xlu0 %v2649, %s2651
    %v2653 = vpop.permute.xlu0 %2652
    %s2655 = sor.u32 256, 40
    %2656 = vbcast.lane.b32.xlu0 %v2649, %s2655
    %v2657 = vpop.permute.xlu0 %2656
    %v2658 = vlaneseq
    %v2659 = vshrl.u32 %v2658, 7
    %v2660 = vsub.s32 1, %v2659
    %v2661 = vrot.slane %v487, %v2660
    %s2663 = sor.u32 256, 32
    %2664 = vbcast.lane.b32.xlu0 %v2661, %s2663
    %v2665 = vpop.permute.xlu0 %2664
    %s2667 = sor.u32 256, 40
    %2668 = vbcast.lane.b32.xlu0 %v2661, %s2667
    %v2669 = vpop.permute.xlu0 %2668
    %v2670 = vlaneseq
    %v2671 = vshrl.u32 %v2670, 7
    %v2672 = vsub.s32 2, %v2671
    %v2673 = vrot.slane %v487, %v2672
    %s2675 = sor.u32 256, 32
    %2676 = vbcast.lane.b32.xlu0 %v2673, %s2675
    %v2677 = vpop.permute.xlu0 %2676
    %s2679 = sor.u32 256, 40
    %2680 = vbcast.lane.b32.xlu0 %v2673, %s2679
    %v2681 = vpop.permute.xlu0 %2680
    %v2682 = vlaneseq
    %v2683 = vshrl.u32 %v2682, 7
    %v2684 = vsub.s32 3, %v2683
    %v2685 = vrot.slane %v487, %v2684
    %s2687 = sor.u32 256, 32
    %2688 = vbcast.lane.b32.xlu0 %v2685, %s2687
    %v2689 = vpop.permute.xlu0 %2688
    %s2691 = sor.u32 256, 40
    %2692 = vbcast.lane.b32.xlu0 %v2685, %s2691
    %v2693 = vpop.permute.xlu0 %2692
    %v2694 = vlaneseq
    %v2695 = vshrl.u32 %v2694, 7
    %v2696 = vsub.s32 4, %v2695
    %v2697 = vrot.slane %v487, %v2696
    %s2699 = sor.u32 256, 32
    %2700 = vbcast.lane.b32.xlu0 %v2697, %s2699
    %v2701 = vpop.permute.xlu0 %2700
    %s2703 = sor.u32 256, 40
    %2704 = vbcast.lane.b32.xlu0 %v2697, %s2703
    %v2705 = vpop.permute.xlu0 %2704
    %v2706 = vlaneseq
    %v2707 = vshrl.u32 %v2706, 7
    %v2708 = vsub.s32 5, %v2707
    %v2709 = vrot.slane %v487, %v2708
    %s2711 = sor.u32 256, 32
    %2712 = vbcast.lane.b32.xlu0 %v2709, %s2711
    %v2713 = vpop.permute.xlu0 %2712
    %s2715 = sor.u32 256, 40
    %2716 = vbcast.lane.b32.xlu0 %v2709, %s2715
    %v2717 = vpop.permute.xlu0 %2716
    %v2718 = vlaneseq
    %v2719 = vshrl.u32 %v2718, 7
    %v2720 = vsub.s32 6, %v2719
    %v2721 = vrot.slane %v487, %v2720
    %s2723 = sor.u32 256, 32
    %2724 = vbcast.lane.b32.xlu0 %v2721, %s2723
    %v2725 = vpop.permute.xlu0 %2724
    %s2727 = sor.u32 256, 40
    %2728 = vbcast.lane.b32.xlu0 %v2721, %s2727
    %v2729 = vpop.permute.xlu0 %2728
    %v2730 = vlaneseq
    %v2731 = vshrl.u32 %v2730, 7
    %v2732 = vsub.s32 7, %v2731
    %v2733 = vrot.slane %v487, %v2732
    %s2735 = sor.u32 256, 32
    %2736 = vbcast.lane.b32.xlu0 %v2733, %s2735
    %v2737 = vpop.permute.xlu0 %2736
    %s2739 = sor.u32 256, 40
    %2740 = vbcast.lane.b32.xlu0 %v2733, %s2739
    %v2741 = vpop.permute.xlu0 %2740
    %v2742 = vlaneseq
    %v2743 = vshrl.u32 %v2742, 7
    %v2744 = vsub.s32 0, %v2743
    %v2745 = vrot.slane %v492, %v2744
    %s2747 = sor.u32 256, 32
    %2748 = vbcast.lane.b32.xlu0 %v2745, %s2747
    %v2749 = vpop.permute.xlu0 %2748
    %s2751 = sor.u32 256, 40
    %2752 = vbcast.lane.b32.xlu0 %v2745, %s2751
    %v2753 = vpop.permute.xlu0 %2752
    %v2754 = vlaneseq
    %v2755 = vshrl.u32 %v2754, 7
    %v2756 = vsub.s32 1, %v2755
    %v2757 = vrot.slane %v492, %v2756
    %s2759 = sor.u32 256, 32
    %2760 = vbcast.lane.b32.xlu0 %v2757, %s2759
    %v2761 = vpop.permute.xlu0 %2760
    %s2763 = sor.u32 256, 40
    %2764 = vbcast.lane.b32.xlu0 %v2757, %s2763
    %v2765 = vpop.permute.xlu0 %2764
    %v2766 = vlaneseq
    %v2767 = vshrl.u32 %v2766, 7
    %v2768 = vsub.s32 2, %v2767
    %v2769 = vrot.slane %v492, %v2768
    %s2771 = sor.u32 256, 32
    %2772 = vbcast.lane.b32.xlu0 %v2769, %s2771
    %v2773 = vpop.permute.xlu0 %2772
    %s2775 = sor.u32 256, 40
    %2776 = vbcast.lane.b32.xlu0 %v2769, %s2775
    %v2777 = vpop.permute.xlu0 %2776
    %v2778 = vlaneseq
    %v2779 = vshrl.u32 %v2778, 7
    %v2780 = vsub.s32 3, %v2779
    %v2781 = vrot.slane %v492, %v2780
    %s2783 = sor.u32 256, 32
    %2784 = vbcast.lane.b32.xlu0 %v2781, %s2783
    %v2785 = vpop.permute.xlu0 %2784
    %s2787 = sor.u32 256, 40
    %2788 = vbcast.lane.b32.xlu0 %v2781, %s2787
    %v2789 = vpop.permute.xlu0 %2788
    %v2790 = vlaneseq
    %v2791 = vshrl.u32 %v2790, 7
    %v2792 = vsub.s32 4, %v2791
    %v2793 = vrot.slane %v492, %v2792
    %s2795 = sor.u32 256, 32
    %2796 = vbcast.lane.b32.xlu0 %v2793, %s2795
    %v2797 = vpop.permute.xlu0 %2796
    %s2799 = sor.u32 256, 40
    %2800 = vbcast.lane.b32.xlu0 %v2793, %s2799
    %v2801 = vpop.permute.xlu0 %2800
    %v2802 = vlaneseq
    %v2803 = vshrl.u32 %v2802, 7
    %v2804 = vsub.s32 5, %v2803
    %v2805 = vrot.slane %v492, %v2804
    %s2807 = sor.u32 256, 32
    %2808 = vbcast.lane.b32.xlu0 %v2805, %s2807
    %v2809 = vpop.permute.xlu0 %2808
    %s2811 = sor.u32 256, 40
    %2812 = vbcast.lane.b32.xlu0 %v2805, %s2811
    %v2813 = vpop.permute.xlu0 %2812
    %v2814 = vlaneseq
    %v2815 = vshrl.u32 %v2814, 7
    %v2816 = vsub.s32 6, %v2815
    %v2817 = vrot.slane %v492, %v2816
    %s2819 = sor.u32 256, 32
    %2820 = vbcast.lane.b32.xlu0 %v2817, %s2819
    %v2821 = vpop.permute.xlu0 %2820
    %s2823 = sor.u32 256, 40
    %2824 = vbcast.lane.b32.xlu0 %v2817, %s2823
    %v2825 = vpop.permute.xlu0 %2824
    %v2826 = vlaneseq
    %v2827 = vshrl.u32 %v2826, 7
    %v2828 = vsub.s32 7, %v2827
    %v2829 = vrot.slane %v492, %v2828
    %s2831 = sor.u32 256, 32
    %2832 = vbcast.lane.b32.xlu0 %v2829, %s2831
    %v2833 = vpop.permute.xlu0 %2832
    %s2835 = sor.u32 256, 40
    %2836 = vbcast.lane.b32.xlu0 %v2829, %s2835
    %v2837 = vpop.permute.xlu0 %2836
    %v2838 = vlaneseq
    %v2839 = vshrl.u32 %v2838, 7
    %v2840 = vsub.s32 0, %v2839
    %v2841 = vrot.slane %v497, %v2840
    %s2843 = sor.u32 256, 32
    %2844 = vbcast.lane.b32.xlu0 %v2841, %s2843
    %v2845 = vpop.permute.xlu0 %2844
    %s2847 = sor.u32 256, 40
    %2848 = vbcast.lane.b32.xlu0 %v2841, %s2847
    %v2849 = vpop.permute.xlu0 %2848
    %v2850 = vlaneseq
    %v2851 = vshrl.u32 %v2850, 7
    %v2852 = vsub.s32 1, %v2851
    %v2853 = vrot.slane %v497, %v2852
    %s2855 = sor.u32 256, 32
    %2856 = vbcast.lane.b32.xlu0 %v2853, %s2855
    %v2857 = vpop.permute.xlu0 %2856
    %s2859 = sor.u32 256, 40
    %2860 = vbcast.lane.b32.xlu0 %v2853, %s2859
    %v2861 = vpop.permute.xlu0 %2860
    %v2862 = vlaneseq
    %v2863 = vshrl.u32 %v2862, 7
    %v2864 = vsub.s32 2, %v2863
    %v2865 = vrot.slane %v497, %v2864
    %s2867 = sor.u32 256, 32
    %2868 = vbcast.lane.b32.xlu0 %v2865, %s2867
    %v2869 = vpop.permute.xlu0 %2868
    %s2871 = sor.u32 256, 40
    %2872 = vbcast.lane.b32.xlu0 %v2865, %s2871
    %v2873 = vpop.permute.xlu0 %2872
    %v2874 = vlaneseq
    %v2875 = vshrl.u32 %v2874, 7
    %v2876 = vsub.s32 3, %v2875
    %v2877 = vrot.slane %v497, %v2876
    %s2879 = sor.u32 256, 32
    %2880 = vbcast.lane.b32.xlu0 %v2877, %s2879
    %v2881 = vpop.permute.xlu0 %2880
    %s2883 = sor.u32 256, 40
    %2884 = vbcast.lane.b32.xlu0 %v2877, %s2883
    %v2885 = vpop.permute.xlu0 %2884
    %v2886 = vlaneseq
    %v2887 = vshrl.u32 %v2886, 7
    %v2888 = vsub.s32 4, %v2887
    %v2889 = vrot.slane %v497, %v2888
    %s2891 = sor.u32 256, 32
    %2892 = vbcast.lane.b32.xlu0 %v2889, %s2891
    %v2893 = vpop.permute.xlu0 %2892
    %s2895 = sor.u32 256, 40
    %2896 = vbcast.lane.b32.xlu0 %v2889, %s2895
    %v2897 = vpop.permute.xlu0 %2896
    %v2898 = vlaneseq
    %v2899 = vshrl.u32 %v2898, 7
    %v2900 = vsub.s32 5, %v2899
    %v2901 = vrot.slane %v497, %v2900
    %s2903 = sor.u32 256, 32
    %2904 = vbcast.lane.b32.xlu0 %v2901, %s2903
    %v2905 = vpop.permute.xlu0 %2904
    %s2907 = sor.u32 256, 40
    %2908 = vbcast.lane.b32.xlu0 %v2901, %s2907
    %v2909 = vpop.permute.xlu0 %2908
    %v2910 = vlaneseq
    %v2911 = vshrl.u32 %v2910, 7
    %v2912 = vsub.s32 6, %v2911
    %v2913 = vrot.slane %v497, %v2912
    %s2915 = sor.u32 256, 32
    %2916 = vbcast.lane.b32.xlu0 %v2913, %s2915
    %v2917 = vpop.permute.xlu0 %2916
    %s2919 = sor.u32 256, 40
    %2920 = vbcast.lane.b32.xlu0 %v2913, %s2919
    %v2921 = vpop.permute.xlu0 %2920
    %v2922 = vlaneseq
    %v2923 = vshrl.u32 %v2922, 7
    %v2924 = vsub.s32 7, %v2923
    %v2925 = vrot.slane %v497, %v2924
    %s2927 = sor.u32 256, 32
    %2928 = vbcast.lane.b32.xlu0 %v2925, %s2927
    %v2929 = vpop.permute.xlu0 %2928
    %s2931 = sor.u32 256, 40
    %2932 = vbcast.lane.b32.xlu0 %v2925, %s2931
    %v2933 = vpop.permute.xlu0 %2932
    %v2934 = vlaneseq
    %v2935 = vshrl.u32 %v2934, 7
    %v2936 = vsub.s32 0, %v2935
    %v2937 = vrot.slane %v1797, %v2936
    %v2938 = vlaneseq
    %v2939 = vshrl.u32 %v2938, 7
    %v2940 = vsub.s32 0, %v2939
    %v2941 = vrot.slane %v1811, %v2940
    %v2942 = vlaneseq
    %v2943 = vshrl.u32 %v2942, 7
    %v2944 = vsub.s32 0, %v2943
    %v2945 = vrot.slane %v1819, %v2944
    %v2946 = vlaneseq
    %v2947 = vshrl.u32 %v2946, 7
    %v2948 = vsub.s32 0, %v2947
    %v2949 = vrot.slane %v1821, %v2948
    %v2950 = vlaneseq
    %v2951 = vshrl.u32 %v2950, 7
    %v2952 = vsub.s32 0, %v2951
    %v2953 = vrot.slane %v1804, %v2952
    %v2954 = vlaneseq
    %v2955 = vshrl.u32 %v2954, 7
    %v2956 = vsub.s32 0, %v2955
    %v2957 = vrot.slane %v1818, %v2956
    %v2958 = vlaneseq
    %v2959 = vshrl.u32 %v2958, 7
    %v2960 = vsub.s32 0, %v2959
    %v2961 = vrot.slane %v1820, %v2960
    %v2962 = vlaneseq
    %v2963 = vshrl.u32 %v2962, 7
    %v2964 = vsub.s32 0, %v2963
    %v2965 = vrot.slane %v1822, %v2964
    %v2966 = vlaneseq
    %v2967 = vshrl.u32 %v2966, 7
    %v2968 = vsub.s32 0, %v2967
    %v2969 = vrot.slane %v1846, %v2968
    %v2970 = vlaneseq
    %v2971 = vshrl.u32 %v2970, 7
    %v2972 = vsub.s32 0, %v2971
    %v2973 = vrot.slane %v1860, %v2972
    %v2974 = vlaneseq
    %v2975 = vshrl.u32 %v2974, 7
    %v2976 = vsub.s32 0, %v2975
    %v2977 = vrot.slane %v1868, %v2976
    %v2978 = vlaneseq
    %v2979 = vshrl.u32 %v2978, 7
    %v2980 = vsub.s32 0, %v2979
    %v2981 = vrot.slane %v1870, %v2980
    %v2982 = vlaneseq
    %v2983 = vshrl.u32 %v2982, 7
    %v2984 = vsub.s32 0, %v2983
    %v2985 = vrot.slane %v1853, %v2984
    %v2986 = vlaneseq
    %v2987 = vshrl.u32 %v2986, 7
    %v2988 = vsub.s32 0, %v2987
    %v2989 = vrot.slane %v1867, %v2988
    %v2990 = vlaneseq
    %v2991 = vshrl.u32 %v2990, 7
    %v2992 = vsub.s32 0, %v2991
    %v2993 = vrot.slane %v1869, %v2992
    %v2994 = vlaneseq
    %v2995 = vshrl.u32 %v2994, 7
    %v2996 = vsub.s32 0, %v2995
    %v2997 = vrot.slane %v1871, %v2996
    %v2998 = vlaneseq
    %v2999 = vshrl.u32 %v2998, 7
    %v3000 = vsub.s32 0, %v2999
    %v3001 = vrot.slane %v1895, %v3000
    %v3002 = vlaneseq
    %v3003 = vshrl.u32 %v3002, 7
    %v3004 = vsub.s32 0, %v3003
    %v3005 = vrot.slane %v1909, %v3004
    %v3006 = vlaneseq
    %v3007 = vshrl.u32 %v3006, 7
    %v3008 = vsub.s32 0, %v3007
    %v3009 = vrot.slane %v1917, %v3008
    %v3010 = vlaneseq
    %v3011 = vshrl.u32 %v3010, 7
    %v3012 = vsub.s32 0, %v3011
    %v3013 = vrot.slane %v1919, %v3012
    %v3014 = vlaneseq
    %v3015 = vshrl.u32 %v3014, 7
    %v3016 = vsub.s32 0, %v3015
    %v3017 = vrot.slane %v1902, %v3016
    %v3018 = vlaneseq
    %v3019 = vshrl.u32 %v3018, 7
    %v3020 = vsub.s32 0, %v3019
    %v3021 = vrot.slane %v1916, %v3020
    %v3022 = vlaneseq
    %v3023 = vshrl.u32 %v3022, 7
    %v3024 = vsub.s32 0, %v3023
    %v3025 = vrot.slane %v1918, %v3024
    %v3026 = vlaneseq
    %v3027 = vshrl.u32 %v3026, 7
    %v3028 = vsub.s32 0, %v3027
    %v3029 = vrot.slane %v1920, %v3028
    %v3030 = vlaneseq
    %v3031 = vshrl.u32 %v3030, 7
    %v3032 = vsub.s32 0, %v3031
    %v3033 = vrot.slane %v1944, %v3032
    %v3034 = vlaneseq
    %v3035 = vshrl.u32 %v3034, 7
    %v3036 = vsub.s32 0, %v3035
    %v3037 = vrot.slane %v1958, %v3036
    %v3038 = vlaneseq
    %v3039 = vshrl.u32 %v3038, 7
    %v3040 = vsub.s32 0, %v3039
    %v3041 = vrot.slane %v1966, %v3040
    %v3042 = vlaneseq
    %v3043 = vshrl.u32 %v3042, 7
    %v3044 = vsub.s32 0, %v3043
    %v3045 = vrot.slane %v1968, %v3044
    %v3046 = vlaneseq
    %v3047 = vshrl.u32 %v3046, 7
    %v3048 = vsub.s32 0, %v3047
    %v3049 = vrot.slane %v1951, %v3048
    %v3050 = vlaneseq
    %v3051 = vshrl.u32 %v3050, 7
    %v3052 = vsub.s32 0, %v3051
    %v3053 = vrot.slane %v1965, %v3052
    %v3054 = vlaneseq
    %v3055 = vshrl.u32 %v3054, 7
    %v3056 = vsub.s32 0, %v3055
    %v3057 = vrot.slane %v1967, %v3056
    %v3058 = vlaneseq
    %v3059 = vshrl.u32 %v3058, 7
    %v3060 = vsub.s32 0, %v3059
    %v3061 = vrot.slane %v1969, %v3060
    %v3062 = vlaneseq
    %v3063 = vshrl.u32 %v3062, 7
    %v3064 = vsub.s32 0, %v3063
    %v3065 = vrot.slane %v1993, %v3064
    %v3066 = vlaneseq
    %v3067 = vshrl.u32 %v3066, 7
    %v3068 = vsub.s32 0, %v3067
    %v3069 = vrot.slane %v2007, %v3068
    %v3070 = vlaneseq
    %v3071 = vshrl.u32 %v3070, 7
    %v3072 = vsub.s32 0, %v3071
    %v3073 = vrot.slane %v2015, %v3072
    %v3074 = vlaneseq
    %v3075 = vshrl.u32 %v3074, 7
    %v3076 = vsub.s32 0, %v3075
    %v3077 = vrot.slane %v2017, %v3076
    %v3078 = vlaneseq
    %v3079 = vshrl.u32 %v3078, 7
    %v3080 = vsub.s32 0, %v3079
    %v3081 = vrot.slane %v2000, %v3080
    %v3082 = vlaneseq
    %v3083 = vshrl.u32 %v3082, 7
    %v3084 = vsub.s32 0, %v3083
    %v3085 = vrot.slane %v2014, %v3084
    %v3086 = vlaneseq
    %v3087 = vshrl.u32 %v3086, 7
    %v3088 = vsub.s32 0, %v3087
    %v3089 = vrot.slane %v2016, %v3088
    %v3090 = vlaneseq
    %v3091 = vshrl.u32 %v3090, 7
    %v3092 = vsub.s32 0, %v3091
    %v3093 = vrot.slane %v2018, %v3092
    %v3094 = vlaneseq
    %v3095 = vshrl.u32 %v3094, 7
    %v3096 = vsub.s32 0, %v3095
    %v3097 = vrot.slane %v2042, %v3096
    %v3098 = vlaneseq
    %v3099 = vshrl.u32 %v3098, 7
    %v3100 = vsub.s32 0, %v3099
    %v3101 = vrot.slane %v2056, %v3100
    %v3102 = vlaneseq
    %v3103 = vshrl.u32 %v3102, 7
    %v3104 = vsub.s32 0, %v3103
    %v3105 = vrot.slane %v2064, %v3104
    %v3106 = vlaneseq
    %v3107 = vshrl.u32 %v3106, 7
    %v3108 = vsub.s32 0, %v3107
    %v3109 = vrot.slane %v2066, %v3108
    %v3110 = vlaneseq
    %v3111 = vshrl.u32 %v3110, 7
    %v3112 = vsub.s32 0, %v3111
    %v3113 = vrot.slane %v2049, %v3112
    %v3114 = vlaneseq
    %v3115 = vshrl.u32 %v3114, 7
    %v3116 = vsub.s32 0, %v3115
    %v3117 = vrot.slane %v2063, %v3116
    %v3118 = vlaneseq
    %v3119 = vshrl.u32 %v3118, 7
    %v3120 = vsub.s32 0, %v3119
    %v3121 = vrot.slane %v2065, %v3120
    %v3122 = vlaneseq
    %v3123 = vshrl.u32 %v3122, 7
    %v3124 = vsub.s32 0, %v3123
    %v3125 = vrot.slane %v2067, %v3124
    %v3126 = vlaneseq
    %v3127 = vshrl.u32 %v3126, 7
    %v3128 = vsub.s32 0, %v3127
    %v3129 = vrot.slane %v2091, %v3128
    %v3130 = vlaneseq
    %v3131 = vshrl.u32 %v3130, 7
    %v3132 = vsub.s32 0, %v3131
    %v3133 = vrot.slane %v2105, %v3132
    %v3134 = vlaneseq
    %v3135 = vshrl.u32 %v3134, 7
    %v3136 = vsub.s32 0, %v3135
    %v3137 = vrot.slane %v2113, %v3136
    %v3138 = vlaneseq
    %v3139 = vshrl.u32 %v3138, 7
    %v3140 = vsub.s32 0, %v3139
    %v3141 = vrot.slane %v2115, %v3140
    %v3142 = vlaneseq
    %v3143 = vshrl.u32 %v3142, 7
    %v3144 = vsub.s32 0, %v3143
    %v3145 = vrot.slane %v2098, %v3144
    %v3146 = vlaneseq
    %v3147 = vshrl.u32 %v3146, 7
    %v3148 = vsub.s32 0, %v3147
    %v3149 = vrot.slane %v2112, %v3148
    %v3150 = vlaneseq
    %v3151 = vshrl.u32 %v3150, 7
    %v3152 = vsub.s32 0, %v3151
    %v3153 = vrot.slane %v2114, %v3152
    %v3154 = vlaneseq
    %v3155 = vshrl.u32 %v3154, 7
    %v3156 = vsub.s32 0, %v3155
    %v3157 = vrot.slane %v2116, %v3156
    %v3158 = vlaneseq
    %v3159 = vshrl.u32 %v3158, 7
    %v3160 = vsub.s32 0, %v3159
    %v3161 = vrot.slane %v2140, %v3160
    %v3162 = vlaneseq
    %v3163 = vshrl.u32 %v3162, 7
    %v3164 = vsub.s32 0, %v3163
    %v3165 = vrot.slane %v2154, %v3164
    %v3166 = vlaneseq
    %v3167 = vshrl.u32 %v3166, 7
    %v3168 = vsub.s32 0, %v3167
    %v3169 = vrot.slane %v2162, %v3168
    %v3170 = vlaneseq
    %v3171 = vshrl.u32 %v3170, 7
    %v3172 = vsub.s32 0, %v3171
    %v3173 = vrot.slane %v2164, %v3172
    %v3174 = vlaneseq
    %v3175 = vshrl.u32 %v3174, 7
    %v3176 = vsub.s32 0, %v3175
    %v3177 = vrot.slane %v2147, %v3176
    %v3178 = vlaneseq
    %v3179 = vshrl.u32 %v3178, 7
    %v3180 = vsub.s32 0, %v3179
    %v3181 = vrot.slane %v2161, %v3180
    %v3182 = vlaneseq
    %v3183 = vshrl.u32 %v3182, 7
    %v3184 = vsub.s32 0, %v3183
    %v3185 = vrot.slane %v2163, %v3184
    %v3186 = vlaneseq
    %v3187 = vshrl.u32 %v3186, 7
    %v3188 = vsub.s32 0, %v3187
    %v3189 = vrot.slane %v2165, %v3188
    %v3254 = vmul.f32 %v2937, %v2173
    %v3255 = vmul.f32 %v2937, %v2177
    %v3256 = vmul.f32 %v2941, %v2185
    %v3257 = vmul.f32 %v2941, %v2189
    %v3258 = vmul.f32 %v2945, %v2197
    %v3259 = vmul.f32 %v2945, %v2201
    %v3260 = vmul.f32 %v2949, %v2209
    %v3261 = vmul.f32 %v2949, %v2213
    %v3262 = vmul.f32 %v2953, %v2221
    %v3263 = vmul.f32 %v2953, %v2225
    %v3264 = vmul.f32 %v2957, %v2233
    %v3265 = vmul.f32 %v2957, %v2237
    %v3266 = vmul.f32 %v2961, %v2245
    %v3267 = vmul.f32 %v2961, %v2249
    %v3268 = vmul.f32 %v2965, %v2257
    %v3269 = vmul.f32 %v2965, %v2261
    %v3270 = vmul.f32 %v2969, %v2269
    %v3271 = vmul.f32 %v2969, %v2273
    %v3272 = vmul.f32 %v2973, %v2281
    %v3273 = vmul.f32 %v2973, %v2285
    %v3274 = vmul.f32 %v2977, %v2293
    %v3275 = vmul.f32 %v2977, %v2297
    %v3276 = vmul.f32 %v2981, %v2305
    %v3277 = vmul.f32 %v2981, %v2309
    %v3278 = vmul.f32 %v2985, %v2317
    %v3279 = vmul.f32 %v2985, %v2321
    %v3280 = vmul.f32 %v2989, %v2329
    %v3281 = vmul.f32 %v2989, %v2333
    %v3282 = vmul.f32 %v2993, %v2341
    %v3283 = vmul.f32 %v2993, %v2345
    %v3284 = vmul.f32 %v2997, %v2353
    %v3285 = vmul.f32 %v2997, %v2357
    %v3286 = vmul.f32 %v3001, %v2365
    %v3287 = vmul.f32 %v3001, %v2369
    %v3288 = vmul.f32 %v3005, %v2377
    %v3289 = vmul.f32 %v3005, %v2381
    %v3290 = vmul.f32 %v3009, %v2389
    %v3291 = vmul.f32 %v3009, %v2393
    %v3292 = vmul.f32 %v3013, %v2401
    %v3293 = vmul.f32 %v3013, %v2405
    %v3294 = vmul.f32 %v3017, %v2413
    %v3295 = vmul.f32 %v3017, %v2417
    %v3296 = vmul.f32 %v3021, %v2425
    %v3297 = vmul.f32 %v3021, %v2429
    %v3298 = vmul.f32 %v3025, %v2437
    %v3299 = vmul.f32 %v3025, %v2441
    %v3300 = vmul.f32 %v3029, %v2449
    %v3301 = vmul.f32 %v3029, %v2453
    %v3302 = vmul.f32 %v3033, %v2461
    %v3303 = vmul.f32 %v3033, %v2465
    %v3304 = vmul.f32 %v3037, %v2473
    %v3305 = vmul.f32 %v3037, %v2477
    %v3306 = vmul.f32 %v3041, %v2485
    %v3307 = vmul.f32 %v3041, %v2489
    %v3308 = vmul.f32 %v3045, %v2497
    %v3309 = vmul.f32 %v3045, %v2501
    %v3310 = vmul.f32 %v3049, %v2509
    %v3311 = vmul.f32 %v3049, %v2513
    %v3312 = vmul.f32 %v3053, %v2521
    %v3313 = vmul.f32 %v3053, %v2525
    %v3314 = vmul.f32 %v3057, %v2533
    %v3315 = vmul.f32 %v3057, %v2537
    %v3316 = vmul.f32 %v3061, %v2545
    %v3317 = vmul.f32 %v3061, %v2549
    %v3318 = vmul.f32 %v3065, %v2557
    %v3319 = vmul.f32 %v3065, %v2561
    %v3320 = vmul.f32 %v3069, %v2569
    %v3321 = vmul.f32 %v3069, %v2573
    %v3322 = vmul.f32 %v3073, %v2581
    %v3323 = vmul.f32 %v3073, %v2585
    %v3324 = vmul.f32 %v3077, %v2593
    %v3325 = vmul.f32 %v3077, %v2597
    %v3326 = vmul.f32 %v3081, %v2605
    %v3327 = vmul.f32 %v3081, %v2609
    %v3328 = vmul.f32 %v3085, %v2617
    %v3329 = vmul.f32 %v3085, %v2621
    %v3330 = vmul.f32 %v3089, %v2629
    %v3331 = vmul.f32 %v3089, %v2633
    %v3332 = vmul.f32 %v3093, %v2641
    %v3333 = vmul.f32 %v3093, %v2645
    %v3334 = vmul.f32 %v3097, %v2653
    %v3335 = vmul.f32 %v3097, %v2657
    %v3336 = vmul.f32 %v3101, %v2665
    %v3337 = vmul.f32 %v3101, %v2669
    %v3338 = vmul.f32 %v3105, %v2677
    %v3339 = vmul.f32 %v3105, %v2681
    %v3340 = vmul.f32 %v3109, %v2689
    %v3341 = vmul.f32 %v3109, %v2693
    %v3342 = vmul.f32 %v3113, %v2701
    %v3343 = vmul.f32 %v3113, %v2705
    %v3344 = vmul.f32 %v3117, %v2713
    %v3345 = vmul.f32 %v3117, %v2717
    %v3346 = vmul.f32 %v3121, %v2725
    %v3347 = vmul.f32 %v3121, %v2729
    %v3348 = vmul.f32 %v3125, %v2737
    %v3349 = vmul.f32 %v3125, %v2741
    %v3350 = vmul.f32 %v3129, %v2749
    %v3351 = vmul.f32 %v3129, %v2753
    %v3352 = vmul.f32 %v3133, %v2761
    %v3353 = vmul.f32 %v3133, %v2765
    %v3354 = vmul.f32 %v3137, %v2773
    %v3355 = vmul.f32 %v3137, %v2777
    %v3356 = vmul.f32 %v3141, %v2785
    %v3357 = vmul.f32 %v3141, %v2789
    %v3358 = vmul.f32 %v3145, %v2797
    %v3359 = vmul.f32 %v3145, %v2801
    %v3360 = vmul.f32 %v3149, %v2809
    %v3361 = vmul.f32 %v3149, %v2813
    %v3362 = vmul.f32 %v3153, %v2821
    %v3363 = vmul.f32 %v3153, %v2825
    %v3364 = vmul.f32 %v3157, %v2833
    %v3365 = vmul.f32 %v3157, %v2837
    %v3366 = vmul.f32 %v3161, %v2845
    %v3367 = vmul.f32 %v3161, %v2849
    %v3368 = vmul.f32 %v3165, %v2857
    %v3369 = vmul.f32 %v3165, %v2861
    %v3370 = vmul.f32 %v3169, %v2869
    %v3371 = vmul.f32 %v3169, %v2873
    %v3372 = vmul.f32 %v3173, %v2881
    %v3373 = vmul.f32 %v3173, %v2885
    %v3374 = vmul.f32 %v3177, %v2893
    %v3375 = vmul.f32 %v3177, %v2897
    %v3376 = vmul.f32 %v3181, %v2905
    %v3377 = vmul.f32 %v3181, %v2909
    %v3378 = vmul.f32 %v3185, %v2917
    %v3379 = vmul.f32 %v3185, %v2921
    %v3380 = vmul.f32 %v3189, %v2929
    %v3381 = vmul.f32 %v3189, %v2933
    %v3382 = vmul.f32 %v1495, 0.0
    %v3383 = vmul.f32 %v1497, 0.0
    %v3384 = vmul.f32 %v1559, 0.0
    %v3385 = vmul.f32 %v1561, 0.0
    %v3386 = vmul.f32 %v1623, 0.0
    %v3387 = vmul.f32 %v1625, 0.0
    %v3388 = vmul.f32 %v1687, 0.0
    %v3389 = vmul.f32 %v1689, 0.0
    %v3390 = vadd.f32 %v3382, %v3254
    %v3391 = vadd.f32 %v3383, %v3255
    %v3392 = vadd.f32 %v3384, %v3286
    %v3393 = vadd.f32 %v3385, %v3287
    %v3394 = vadd.f32 %v3386, %v3318
    %v3395 = vadd.f32 %v3387, %v3319
    %v3396 = vadd.f32 %v3388, %v3350
    %v3397 = vadd.f32 %v3389, %v3351
    %s3399 = sor.u32 256, 48
    %3400 = vbcast.lane.b32.xlu0 %v2169, %s3399
    %v3401 = vpop.permute.xlu0 %3400
    %s3403 = sor.u32 256, 56
    %3404 = vbcast.lane.b32.xlu0 %v2169, %s3403
    %v3405 = vpop.permute.xlu0 %3404
    %s3407 = sor.u32 256, 48
    %3408 = vbcast.lane.b32.xlu0 %v2361, %s3407
    %v3409 = vpop.permute.xlu0 %3408
    %s3411 = sor.u32 256, 56
    %3412 = vbcast.lane.b32.xlu0 %v2361, %s3411
    %v3413 = vpop.permute.xlu0 %3412
    %s3415 = sor.u32 256, 48
    %3416 = vbcast.lane.b32.xlu0 %v2553, %s3415
    %v3417 = vpop.permute.xlu0 %3416
    %s3419 = sor.u32 256, 56
    %3420 = vbcast.lane.b32.xlu0 %v2553, %s3419
    %v3421 = vpop.permute.xlu0 %3420
    %s3423 = sor.u32 256, 48
    %3424 = vbcast.lane.b32.xlu0 %v2745, %s3423
    %v3425 = vpop.permute.xlu0 %3424
    %s3427 = sor.u32 256, 56
    %3428 = vbcast.lane.b32.xlu0 %v2745, %s3427
    %v3429 = vpop.permute.xlu0 %3428
    %v3430 = vmul.f32 %v3390, %v3401
    %v3431 = vmul.f32 %v3391, %v3405
    %v3432 = vmul.f32 %v3392, %v3409
    %v3433 = vmul.f32 %v3393, %v3413
    %v3434 = vmul.f32 %v3394, %v3417
    %v3435 = vmul.f32 %v3395, %v3421
    %v3436 = vmul.f32 %v3396, %v3425
    %v3437 = vmul.f32 %v3397, %v3429
    %v3438 = vsel %vm76, %v3430, 0.0
    %v3439 = vsel %vm76, %v3431, 0.0
    %v3440 = vadd.f32 %v3438, %v3439
    %v3441 = vrot.slane %v3440, 4
    %v3442 = vadd.f32 %v3440, %v3441
    %v3443 = vrot.slane %v3442, 2
    %v3444 = vadd.f32 %v3442, %v3443
    %v3445 = vrot.slane %v3444, 1
    %v3446 = vadd.f32 %v3444, %v3445
    %v3447 = vsel %vm76, %v3432, 0.0
    %v3448 = vsel %vm76, %v3433, 0.0
    %v3449 = vadd.f32 %v3447, %v3448
    %v3450 = vrot.slane %v3449, 4
    %v3451 = vadd.f32 %v3449, %v3450
    %v3452 = vrot.slane %v3451, 2
    %v3453 = vadd.f32 %v3451, %v3452
    %v3454 = vrot.slane %v3453, 1
    %v3455 = vadd.f32 %v3453, %v3454
    %v3456 = vsel %vm76, %v3434, 0.0
    %v3457 = vsel %vm76, %v3435, 0.0
    %v3458 = vadd.f32 %v3456, %v3457
    %v3459 = vrot.slane %v3458, 4
    %v3460 = vadd.f32 %v3458, %v3459
    %v3461 = vrot.slane %v3460, 2
    %v3462 = vadd.f32 %v3460, %v3461
    %v3463 = vrot.slane %v3462, 1
    %v3464 = vadd.f32 %v3462, %v3463
    %v3465 = vsel %vm76, %v3436, 0.0
    %v3466 = vsel %vm76, %v3437, 0.0
    %v3467 = vadd.f32 %v3465, %v3466
    %v3468 = vrot.slane %v3467, 4
    %v3469 = vadd.f32 %v3467, %v3468
    %v3470 = vrot.slane %v3469, 2
    %v3471 = vadd.f32 %v3469, %v3470
    %v3472 = vrot.slane %v3471, 1
    %v3473 = vadd.f32 %v3471, %v3472
    %v3474 = vmul.f32 %v1499, %v3390
    %v3475 = vmul.f32 %v1501, %v3391
    %v3476 = vmul.f32 %v1563, %v3392
    %v3477 = vmul.f32 %v1565, %v3393
    %v3478 = vmul.f32 %v1627, %v3394
    %v3479 = vmul.f32 %v1629, %v3395
    %v3480 = vmul.f32 %v1691, %v3396
    %v3481 = vmul.f32 %v1693, %v3397
    %v3482 = vadd.f32 %v3474, %v3256
    %v3483 = vadd.f32 %v3475, %v3257
    %v3484 = vadd.f32 %v3476, %v3288
    %v3485 = vadd.f32 %v3477, %v3289
    %v3486 = vadd.f32 %v3478, %v3320
    %v3487 = vadd.f32 %v3479, %v3321
    %v3488 = vadd.f32 %v3480, %v3352
    %v3489 = vadd.f32 %v3481, %v3353
    %s3491 = sor.u32 256, 48
    %3492 = vbcast.lane.b32.xlu0 %v2181, %s3491
    %v3493 = vpop.permute.xlu0 %3492
    %s3495 = sor.u32 256, 56
    %3496 = vbcast.lane.b32.xlu0 %v2181, %s3495
    %v3497 = vpop.permute.xlu0 %3496
    %s3499 = sor.u32 256, 48
    %3500 = vbcast.lane.b32.xlu0 %v2373, %s3499
    %v3501 = vpop.permute.xlu0 %3500
    %s3503 = sor.u32 256, 56
    %3504 = vbcast.lane.b32.xlu0 %v2373, %s3503
    %v3505 = vpop.permute.xlu0 %3504
    %s3507 = sor.u32 256, 48
    %3508 = vbcast.lane.b32.xlu0 %v2565, %s3507
    %v3509 = vpop.permute.xlu0 %3508
    %s3511 = sor.u32 256, 56
    %3512 = vbcast.lane.b32.xlu0 %v2565, %s3511
    %v3513 = vpop.permute.xlu0 %3512
    %s3515 = sor.u32 256, 48
    %3516 = vbcast.lane.b32.xlu0 %v2757, %s3515
    %v3517 = vpop.permute.xlu0 %3516
    %s3519 = sor.u32 256, 56
    %3520 = vbcast.lane.b32.xlu0 %v2757, %s3519
    %v3521 = vpop.permute.xlu0 %3520
    %v3522 = vmul.f32 %v3482, %v3493
    %v3523 = vmul.f32 %v3483, %v3497
    %v3524 = vmul.f32 %v3484, %v3501
    %v3525 = vmul.f32 %v3485, %v3505
    %v3526 = vmul.f32 %v3486, %v3509
    %v3527 = vmul.f32 %v3487, %v3513
    %v3528 = vmul.f32 %v3488, %v3517
    %v3529 = vmul.f32 %v3489, %v3521
    %v3530 = vsel %vm76, %v3522, 0.0
    %v3531 = vsel %vm76, %v3523, 0.0
    %v3532 = vadd.f32 %v3530, %v3531
    %v3533 = vrot.slane %v3532, 4
    %v3534 = vadd.f32 %v3532, %v3533
    %v3535 = vrot.slane %v3534, 2
    %v3536 = vadd.f32 %v3534, %v3535
    %v3537 = vrot.slane %v3536, 1
    %v3538 = vadd.f32 %v3536, %v3537
    %v3539 = vsel %vm76, %v3524, 0.0
    %v3540 = vsel %vm76, %v3525, 0.0
    %v3541 = vadd.f32 %v3539, %v3540
    %v3542 = vrot.slane %v3541, 4
    %v3543 = vadd.f32 %v3541, %v3542
    %v3544 = vrot.slane %v3543, 2
    %v3545 = vadd.f32 %v3543, %v3544
    %v3546 = vrot.slane %v3545, 1
    %v3547 = vadd.f32 %v3545, %v3546
    %v3548 = vsel %vm76, %v3526, 0.0
    %v3549 = vsel %vm76, %v3527, 0.0
    %v3550 = vadd.f32 %v3548, %v3549
    %v3551 = vrot.slane %v3550, 4
    %v3552 = vadd.f32 %v3550, %v3551
    %v3553 = vrot.slane %v3552, 2
    %v3554 = vadd.f32 %v3552, %v3553
    %v3555 = vrot.slane %v3554, 1
    %v3556 = vadd.f32 %v3554, %v3555
    %v3557 = vsel %vm76, %v3528, 0.0
    %v3558 = vsel %vm76, %v3529, 0.0
    %v3559 = vadd.f32 %v3557, %v3558
    %v3560 = vrot.slane %v3559, 4
    %v3561 = vadd.f32 %v3559, %v3560
    %v3562 = vrot.slane %v3561, 2
    %v3563 = vadd.f32 %v3561, %v3562
    %v3564 = vrot.slane %v3563, 1
    %v3565 = vadd.f32 %v3563, %v3564
    %v3566 = vmul.f32 %v1503, %v3482
    %v3567 = vmul.f32 %v1505, %v3483
    %v3568 = vmul.f32 %v1567, %v3484
    %v3569 = vmul.f32 %v1569, %v3485
    %v3570 = vmul.f32 %v1631, %v3486
    %v3571 = vmul.f32 %v1633, %v3487
    %v3572 = vmul.f32 %v1695, %v3488
    %v3573 = vmul.f32 %v1697, %v3489
    %v3574 = vadd.f32 %v3566, %v3258
    %v3575 = vadd.f32 %v3567, %v3259
    %v3576 = vadd.f32 %v3568, %v3290
    %v3577 = vadd.f32 %v3569, %v3291
    %v3578 = vadd.f32 %v3570, %v3322
    %v3579 = vadd.f32 %v3571, %v3323
    %v3580 = vadd.f32 %v3572, %v3354
    %v3581 = vadd.f32 %v3573, %v3355
    %s3583 = sor.u32 256, 48
    %3584 = vbcast.lane.b32.xlu0 %v2193, %s3583
    %v3585 = vpop.permute.xlu0 %3584
    %s3587 = sor.u32 256, 56
    %3588 = vbcast.lane.b32.xlu0 %v2193, %s3587
    %v3589 = vpop.permute.xlu0 %3588
    %s3591 = sor.u32 256, 48
    %3592 = vbcast.lane.b32.xlu0 %v2385, %s3591
    %v3593 = vpop.permute.xlu0 %3592
    %s3595 = sor.u32 256, 56
    %3596 = vbcast.lane.b32.xlu0 %v2385, %s3595
    %v3597 = vpop.permute.xlu0 %3596
    %s3599 = sor.u32 256, 48
    %3600 = vbcast.lane.b32.xlu0 %v2577, %s3599
    %v3601 = vpop.permute.xlu0 %3600
    %s3603 = sor.u32 256, 56
    %3604 = vbcast.lane.b32.xlu0 %v2577, %s3603
    %v3605 = vpop.permute.xlu0 %3604
    %s3607 = sor.u32 256, 48
    %3608 = vbcast.lane.b32.xlu0 %v2769, %s3607
    %v3609 = vpop.permute.xlu0 %3608
    %s3611 = sor.u32 256, 56
    %3612 = vbcast.lane.b32.xlu0 %v2769, %s3611
    %v3613 = vpop.permute.xlu0 %3612
    %v3614 = vmul.f32 %v3574, %v3585
    %v3615 = vmul.f32 %v3575, %v3589
    %v3616 = vmul.f32 %v3576, %v3593
    %v3617 = vmul.f32 %v3577, %v3597
    %v3618 = vmul.f32 %v3578, %v3601
    %v3619 = vmul.f32 %v3579, %v3605
    %v3620 = vmul.f32 %v3580, %v3609
    %v3621 = vmul.f32 %v3581, %v3613
    %v3622 = vsel %vm76, %v3614, 0.0
    %v3623 = vsel %vm76, %v3615, 0.0
    %v3624 = vadd.f32 %v3622, %v3623
    %v3625 = vrot.slane %v3624, 4
    %v3626 = vadd.f32 %v3624, %v3625
    %v3627 = vrot.slane %v3626, 2
    %v3628 = vadd.f32 %v3626, %v3627
    %v3629 = vrot.slane %v3628, 1
    %v3630 = vadd.f32 %v3628, %v3629
    %v3631 = vsel %vm76, %v3616, 0.0
    %v3632 = vsel %vm76, %v3617, 0.0
    %v3633 = vadd.f32 %v3631, %v3632
    %v3634 = vrot.slane %v3633, 4
    %v3635 = vadd.f32 %v3633, %v3634
    %v3636 = vrot.slane %v3635, 2
    %v3637 = vadd.f32 %v3635, %v3636
    %v3638 = vrot.slane %v3637, 1
    %v3639 = vadd.f32 %v3637, %v3638
    %v3640 = vsel %vm76, %v3618, 0.0
    %v3641 = vsel %vm76, %v3619, 0.0
    %v3642 = vadd.f32 %v3640, %v3641
    %v3643 = vrot.slane %v3642, 4
    %v3644 = vadd.f32 %v3642, %v3643
    %v3645 = vrot.slane %v3644, 2
    %v3646 = vadd.f32 %v3644, %v3645
    %v3647 = vrot.slane %v3646, 1
    %v3648 = vadd.f32 %v3646, %v3647
    %v3649 = vsel %vm76, %v3620, 0.0
    %v3650 = vsel %vm76, %v3621, 0.0
    %v3651 = vadd.f32 %v3649, %v3650
    %v3652 = vrot.slane %v3651, 4
    %v3653 = vadd.f32 %v3651, %v3652
    %v3654 = vrot.slane %v3653, 2
    %v3655 = vadd.f32 %v3653, %v3654
    %v3656 = vrot.slane %v3655, 1
    %v3657 = vadd.f32 %v3655, %v3656
    %v3658 = vmul.f32 %v1507, %v3574
    %v3659 = vmul.f32 %v1509, %v3575
    %v3660 = vmul.f32 %v1571, %v3576
    %v3661 = vmul.f32 %v1573, %v3577
    %v3662 = vmul.f32 %v1635, %v3578
    %v3663 = vmul.f32 %v1637, %v3579
    %v3664 = vmul.f32 %v1699, %v3580
    %v3665 = vmul.f32 %v1701, %v3581
    %v3666 = vadd.f32 %v3658, %v3260
    %v3667 = vadd.f32 %v3659, %v3261
    %v3668 = vadd.f32 %v3660, %v3292
    %v3669 = vadd.f32 %v3661, %v3293
    %v3670 = vadd.f32 %v3662, %v3324
    %v3671 = vadd.f32 %v3663, %v3325
    %v3672 = vadd.f32 %v3664, %v3356
    %v3673 = vadd.f32 %v3665, %v3357
    %s3675 = sor.u32 256, 48
    %3676 = vbcast.lane.b32.xlu0 %v2205, %s3675
    %v3677 = vpop.permute.xlu0 %3676
    %s3679 = sor.u32 256, 56
    %3680 = vbcast.lane.b32.xlu0 %v2205, %s3679
    %v3681 = vpop.permute.xlu0 %3680
    %s3683 = sor.u32 256, 48
    %3684 = vbcast.lane.b32.xlu0 %v2397, %s3683
    %v3685 = vpop.permute.xlu0 %3684
    %s3687 = sor.u32 256, 56
    %3688 = vbcast.lane.b32.xlu0 %v2397, %s3687
    %v3689 = vpop.permute.xlu0 %3688
    %s3691 = sor.u32 256, 48
    %3692 = vbcast.lane.b32.xlu0 %v2589, %s3691
    %v3693 = vpop.permute.xlu0 %3692
    %s3695 = sor.u32 256, 56
    %3696 = vbcast.lane.b32.xlu0 %v2589, %s3695
    %v3697 = vpop.permute.xlu0 %3696
    %s3699 = sor.u32 256, 48
    %3700 = vbcast.lane.b32.xlu0 %v2781, %s3699
    %v3701 = vpop.permute.xlu0 %3700
    %s3703 = sor.u32 256, 56
    %3704 = vbcast.lane.b32.xlu0 %v2781, %s3703
    %v3705 = vpop.permute.xlu0 %3704
    %v3706 = vmul.f32 %v3666, %v3677
    %v3707 = vmul.f32 %v3667, %v3681
    %v3708 = vmul.f32 %v3668, %v3685
    %v3709 = vmul.f32 %v3669, %v3689
    %v3710 = vmul.f32 %v3670, %v3693
    %v3711 = vmul.f32 %v3671, %v3697
    %v3712 = vmul.f32 %v3672, %v3701
    %v3713 = vmul.f32 %v3673, %v3705
    %v3714 = vsel %vm76, %v3706, 0.0
    %v3715 = vsel %vm76, %v3707, 0.0
    %v3716 = vadd.f32 %v3714, %v3715
    %v3717 = vrot.slane %v3716, 4
    %v3718 = vadd.f32 %v3716, %v3717
    %v3719 = vrot.slane %v3718, 2
    %v3720 = vadd.f32 %v3718, %v3719
    %v3721 = vrot.slane %v3720, 1
    %v3722 = vadd.f32 %v3720, %v3721
    %v3723 = vsel %vm76, %v3708, 0.0
    %v3724 = vsel %vm76, %v3709, 0.0
    %v3725 = vadd.f32 %v3723, %v3724
    %v3726 = vrot.slane %v3725, 4
    %v3727 = vadd.f32 %v3725, %v3726
    %v3728 = vrot.slane %v3727, 2
    %v3729 = vadd.f32 %v3727, %v3728
    %v3730 = vrot.slane %v3729, 1
    %v3731 = vadd.f32 %v3729, %v3730
    %v3732 = vsel %vm76, %v3710, 0.0
    %v3733 = vsel %vm76, %v3711, 0.0
    %v3734 = vadd.f32 %v3732, %v3733
    %v3735 = vrot.slane %v3734, 4
    %v3736 = vadd.f32 %v3734, %v3735
    %v3737 = vrot.slane %v3736, 2
    %v3738 = vadd.f32 %v3736, %v3737
    %v3739 = vrot.slane %v3738, 1
    %v3740 = vadd.f32 %v3738, %v3739
    %v3741 = vsel %vm76, %v3712, 0.0
    %v3742 = vsel %vm76, %v3713, 0.0
    %v3743 = vadd.f32 %v3741, %v3742
    %v3744 = vrot.slane %v3743, 4
    %v3745 = vadd.f32 %v3743, %v3744
    %v3746 = vrot.slane %v3745, 2
    %v3747 = vadd.f32 %v3745, %v3746
    %v3748 = vrot.slane %v3747, 1
    %v3749 = vadd.f32 %v3747, %v3748
    %v3750 = vmul.f32 %v1511, %v3666
    %v3751 = vmul.f32 %v1513, %v3667
    %v3752 = vmul.f32 %v1575, %v3668
    %v3753 = vmul.f32 %v1577, %v3669
    %v3754 = vmul.f32 %v1639, %v3670
    %v3755 = vmul.f32 %v1641, %v3671
    %v3756 = vmul.f32 %v1703, %v3672
    %v3757 = vmul.f32 %v1705, %v3673
    %v3758 = vadd.f32 %v3750, %v3262
    %v3759 = vadd.f32 %v3751, %v3263
    %v3760 = vadd.f32 %v3752, %v3294
    %v3761 = vadd.f32 %v3753, %v3295
    %v3762 = vadd.f32 %v3754, %v3326
    %v3763 = vadd.f32 %v3755, %v3327
    %v3764 = vadd.f32 %v3756, %v3358
    %v3765 = vadd.f32 %v3757, %v3359
    %s3767 = sor.u32 256, 48
    %3768 = vbcast.lane.b32.xlu0 %v2217, %s3767
    %v3769 = vpop.permute.xlu0 %3768
    %s3771 = sor.u32 256, 56
    %3772 = vbcast.lane.b32.xlu0 %v2217, %s3771
    %v3773 = vpop.permute.xlu0 %3772
    %s3775 = sor.u32 256, 48
    %3776 = vbcast.lane.b32.xlu0 %v2409, %s3775
    %v3777 = vpop.permute.xlu0 %3776
    %s3779 = sor.u32 256, 56
    %3780 = vbcast.lane.b32.xlu0 %v2409, %s3779
    %v3781 = vpop.permute.xlu0 %3780
    %s3783 = sor.u32 256, 48
    %3784 = vbcast.lane.b32.xlu0 %v2601, %s3783
    %v3785 = vpop.permute.xlu0 %3784
    %s3787 = sor.u32 256, 56
    %3788 = vbcast.lane.b32.xlu0 %v2601, %s3787
    %v3789 = vpop.permute.xlu0 %3788
    %s3791 = sor.u32 256, 48
    %3792 = vbcast.lane.b32.xlu0 %v2793, %s3791
    %v3793 = vpop.permute.xlu0 %3792
    %s3795 = sor.u32 256, 56
    %3796 = vbcast.lane.b32.xlu0 %v2793, %s3795
    %v3797 = vpop.permute.xlu0 %3796
    %v3798 = vmul.f32 %v3758, %v3769
    %v3799 = vmul.f32 %v3759, %v3773
    %v3800 = vmul.f32 %v3760, %v3777
    %v3801 = vmul.f32 %v3761, %v3781
    %v3802 = vmul.f32 %v3762, %v3785
    %v3803 = vmul.f32 %v3763, %v3789
    %v3804 = vmul.f32 %v3764, %v3793
    %v3805 = vmul.f32 %v3765, %v3797
    %v3806 = vsel %vm76, %v3798, 0.0
    %v3807 = vsel %vm76, %v3799, 0.0
    %v3808 = vadd.f32 %v3806, %v3807
    %v3809 = vrot.slane %v3808, 4
    %v3810 = vadd.f32 %v3808, %v3809
    %v3811 = vrot.slane %v3810, 2
    %v3812 = vadd.f32 %v3810, %v3811
    %v3813 = vrot.slane %v3812, 1
    %v3814 = vadd.f32 %v3812, %v3813
    %v3815 = vsel %vm76, %v3800, 0.0
    %v3816 = vsel %vm76, %v3801, 0.0
    %v3817 = vadd.f32 %v3815, %v3816
    %v3818 = vrot.slane %v3817, 4
    %v3819 = vadd.f32 %v3817, %v3818
    %v3820 = vrot.slane %v3819, 2
    %v3821 = vadd.f32 %v3819, %v3820
    %v3822 = vrot.slane %v3821, 1
    %v3823 = vadd.f32 %v3821, %v3822
    %v3824 = vsel %vm76, %v3802, 0.0
    %v3825 = vsel %vm76, %v3803, 0.0
    %v3826 = vadd.f32 %v3824, %v3825
    %v3827 = vrot.slane %v3826, 4
    %v3828 = vadd.f32 %v3826, %v3827
    %v3829 = vrot.slane %v3828, 2
    %v3830 = vadd.f32 %v3828, %v3829
    %v3831 = vrot.slane %v3830, 1
    %v3832 = vadd.f32 %v3830, %v3831
    %v3833 = vsel %vm76, %v3804, 0.0
    %v3834 = vsel %vm76, %v3805, 0.0
    %v3835 = vadd.f32 %v3833, %v3834
    %v3836 = vrot.slane %v3835, 4
    %v3837 = vadd.f32 %v3835, %v3836
    %v3838 = vrot.slane %v3837, 2
    %v3839 = vadd.f32 %v3837, %v3838
    %v3840 = vrot.slane %v3839, 1
    %v3841 = vadd.f32 %v3839, %v3840
    %v3842 = vmul.f32 %v1515, %v3758
    %v3843 = vmul.f32 %v1517, %v3759
    %v3844 = vmul.f32 %v1579, %v3760
    %v3845 = vmul.f32 %v1581, %v3761
    %v3846 = vmul.f32 %v1643, %v3762
    %v3847 = vmul.f32 %v1645, %v3763
    %v3848 = vmul.f32 %v1707, %v3764
    %v3849 = vmul.f32 %v1709, %v3765
    %v3850 = vadd.f32 %v3842, %v3264
    %v3851 = vadd.f32 %v3843, %v3265
    %v3852 = vadd.f32 %v3844, %v3296
    %v3853 = vadd.f32 %v3845, %v3297
    %v3854 = vadd.f32 %v3846, %v3328
    %v3855 = vadd.f32 %v3847, %v3329
    %v3856 = vadd.f32 %v3848, %v3360
    %v3857 = vadd.f32 %v3849, %v3361
    %s3859 = sor.u32 256, 48
    %3860 = vbcast.lane.b32.xlu0 %v2229, %s3859
    %v3861 = vpop.permute.xlu0 %3860
    %s3863 = sor.u32 256, 56
    %3864 = vbcast.lane.b32.xlu0 %v2229, %s3863
    %v3865 = vpop.permute.xlu0 %3864
    %s3867 = sor.u32 256, 48
    %3868 = vbcast.lane.b32.xlu0 %v2421, %s3867
    %v3869 = vpop.permute.xlu0 %3868
    %s3871 = sor.u32 256, 56
    %3872 = vbcast.lane.b32.xlu0 %v2421, %s3871
    %v3873 = vpop.permute.xlu0 %3872
    %s3875 = sor.u32 256, 48
    %3876 = vbcast.lane.b32.xlu0 %v2613, %s3875
    %v3877 = vpop.permute.xlu0 %3876
    %s3879 = sor.u32 256, 56
    %3880 = vbcast.lane.b32.xlu0 %v2613, %s3879
    %v3881 = vpop.permute.xlu0 %3880
    %s3883 = sor.u32 256, 48
    %3884 = vbcast.lane.b32.xlu0 %v2805, %s3883
    %v3885 = vpop.permute.xlu0 %3884
    %s3887 = sor.u32 256, 56
    %3888 = vbcast.lane.b32.xlu0 %v2805, %s3887
    %v3889 = vpop.permute.xlu0 %3888
    %v3890 = vmul.f32 %v3850, %v3861
    %v3891 = vmul.f32 %v3851, %v3865
    %v3892 = vmul.f32 %v3852, %v3869
    %v3893 = vmul.f32 %v3853, %v3873
    %v3894 = vmul.f32 %v3854, %v3877
    %v3895 = vmul.f32 %v3855, %v3881
    %v3896 = vmul.f32 %v3856, %v3885
    %v3897 = vmul.f32 %v3857, %v3889
    %v3898 = vsel %vm76, %v3890, 0.0
    %v3899 = vsel %vm76, %v3891, 0.0
    %v3900 = vadd.f32 %v3898, %v3899
    %v3901 = vrot.slane %v3900, 4
    %v3902 = vadd.f32 %v3900, %v3901
    %v3903 = vrot.slane %v3902, 2
    %v3904 = vadd.f32 %v3902, %v3903
    %v3905 = vrot.slane %v3904, 1
    %v3906 = vadd.f32 %v3904, %v3905
    %v3907 = vsel %vm76, %v3892, 0.0
    %v3908 = vsel %vm76, %v3893, 0.0
    %v3909 = vadd.f32 %v3907, %v3908
    %v3910 = vrot.slane %v3909, 4
    %v3911 = vadd.f32 %v3909, %v3910
    %v3912 = vrot.slane %v3911, 2
    %v3913 = vadd.f32 %v3911, %v3912
    %v3914 = vrot.slane %v3913, 1
    %v3915 = vadd.f32 %v3913, %v3914
    %v3916 = vsel %vm76, %v3894, 0.0
    %v3917 = vsel %vm76, %v3895, 0.0
    %v3918 = vadd.f32 %v3916, %v3917
    %v3919 = vrot.slane %v3918, 4
    %v3920 = vadd.f32 %v3918, %v3919
    %v3921 = vrot.slane %v3920, 2
    %v3922 = vadd.f32 %v3920, %v3921
    %v3923 = vrot.slane %v3922, 1
    %v3924 = vadd.f32 %v3922, %v3923
    %v3925 = vsel %vm76, %v3896, 0.0
    %v3926 = vsel %vm76, %v3897, 0.0
    %v3927 = vadd.f32 %v3925, %v3926
    %v3928 = vrot.slane %v3927, 4
    %v3929 = vadd.f32 %v3927, %v3928
    %v3930 = vrot.slane %v3929, 2
    %v3931 = vadd.f32 %v3929, %v3930
    %v3932 = vrot.slane %v3931, 1
    %v3933 = vadd.f32 %v3931, %v3932
    %v3934 = vmul.f32 %v1519, %v3850
    %v3935 = vmul.f32 %v1521, %v3851
    %v3936 = vmul.f32 %v1583, %v3852
    %v3937 = vmul.f32 %v1585, %v3853
    %v3938 = vmul.f32 %v1647, %v3854
    %v3939 = vmul.f32 %v1649, %v3855
    %v3940 = vmul.f32 %v1711, %v3856
    %v3941 = vmul.f32 %v1713, %v3857
    %v3942 = vadd.f32 %v3934, %v3266
    %v3943 = vadd.f32 %v3935, %v3267
    %v3944 = vadd.f32 %v3936, %v3298
    %v3945 = vadd.f32 %v3937, %v3299
    %v3946 = vadd.f32 %v3938, %v3330
    %v3947 = vadd.f32 %v3939, %v3331
    %v3948 = vadd.f32 %v3940, %v3362
    %v3949 = vadd.f32 %v3941, %v3363
    %s3951 = sor.u32 256, 48
    %3952 = vbcast.lane.b32.xlu0 %v2241, %s3951
    %v3953 = vpop.permute.xlu0 %3952
    %s3955 = sor.u32 256, 56
    %3956 = vbcast.lane.b32.xlu0 %v2241, %s3955
    %v3957 = vpop.permute.xlu0 %3956
    %s3959 = sor.u32 256, 48
    %3960 = vbcast.lane.b32.xlu0 %v2433, %s3959
    %v3961 = vpop.permute.xlu0 %3960
    %s3963 = sor.u32 256, 56
    %3964 = vbcast.lane.b32.xlu0 %v2433, %s3963
    %v3965 = vpop.permute.xlu0 %3964
    %s3967 = sor.u32 256, 48
    %3968 = vbcast.lane.b32.xlu0 %v2625, %s3967
    %v3969 = vpop.permute.xlu0 %3968
    %s3971 = sor.u32 256, 56
    %3972 = vbcast.lane.b32.xlu0 %v2625, %s3971
    %v3973 = vpop.permute.xlu0 %3972
    %s3975 = sor.u32 256, 48
    %3976 = vbcast.lane.b32.xlu0 %v2817, %s3975
    %v3977 = vpop.permute.xlu0 %3976
    %s3979 = sor.u32 256, 56
    %3980 = vbcast.lane.b32.xlu0 %v2817, %s3979
    %v3981 = vpop.permute.xlu0 %3980
    %v3982 = vmul.f32 %v3942, %v3953
    %v3983 = vmul.f32 %v3943, %v3957
    %v3984 = vmul.f32 %v3944, %v3961
    %v3985 = vmul.f32 %v3945, %v3965
    %v3986 = vmul.f32 %v3946, %v3969
    %v3987 = vmul.f32 %v3947, %v3973
    %v3988 = vmul.f32 %v3948, %v3977
    %v3989 = vmul.f32 %v3949, %v3981
    %v3990 = vsel %vm76, %v3982, 0.0
    %v3991 = vsel %vm76, %v3983, 0.0
    %v3992 = vadd.f32 %v3990, %v3991
    %v3993 = vrot.slane %v3992, 4
    %v3994 = vadd.f32 %v3992, %v3993
    %v3995 = vrot.slane %v3994, 2
    %v3996 = vadd.f32 %v3994, %v3995
    %v3997 = vrot.slane %v3996, 1
    %v3998 = vadd.f32 %v3996, %v3997
    %v3999 = vsel %vm76, %v3984, 0.0
    %v4000 = vsel %vm76, %v3985, 0.0
    %v4001 = vadd.f32 %v3999, %v4000
    %v4002 = vrot.slane %v4001, 4
    %v4003 = vadd.f32 %v4001, %v4002
    %v4004 = vrot.slane %v4003, 2
    %v4005 = vadd.f32 %v4003, %v4004
    %v4006 = vrot.slane %v4005, 1
    %v4007 = vadd.f32 %v4005, %v4006
    %v4008 = vsel %vm76, %v3986, 0.0
    %v4009 = vsel %vm76, %v3987, 0.0
    %v4010 = vadd.f32 %v4008, %v4009
    %v4011 = vrot.slane %v4010, 4
    %v4012 = vadd.f32 %v4010, %v4011
    %v4013 = vrot.slane %v4012, 2
    %v4014 = vadd.f32 %v4012, %v4013
    %v4015 = vrot.slane %v4014, 1
    %v4016 = vadd.f32 %v4014, %v4015
    %v4017 = vsel %vm76, %v3988, 0.0
    %v4018 = vsel %vm76, %v3989, 0.0
    %v4019 = vadd.f32 %v4017, %v4018
    %v4020 = vrot.slane %v4019, 4
    %v4021 = vadd.f32 %v4019, %v4020
    %v4022 = vrot.slane %v4021, 2
    %v4023 = vadd.f32 %v4021, %v4022
    %v4024 = vrot.slane %v4023, 1
    %v4025 = vadd.f32 %v4023, %v4024
    %v4026 = vmul.f32 %v1523, %v3942
    %v4027 = vmul.f32 %v1525, %v3943
    %v4028 = vmul.f32 %v1587, %v3944
    %v4029 = vmul.f32 %v1589, %v3945
    %v4030 = vmul.f32 %v1651, %v3946
    %v4031 = vmul.f32 %v1653, %v3947
    %v4032 = vmul.f32 %v1715, %v3948
    %v4033 = vmul.f32 %v1717, %v3949
    %v4034 = vadd.f32 %v4026, %v3268
    %v4035 = vadd.f32 %v4027, %v3269
    %v4036 = vadd.f32 %v4028, %v3300
    %v4037 = vadd.f32 %v4029, %v3301
    %v4038 = vadd.f32 %v4030, %v3332
    %v4039 = vadd.f32 %v4031, %v3333
    %v4040 = vadd.f32 %v4032, %v3364
    %v4041 = vadd.f32 %v4033, %v3365
    %s4043 = sor.u32 256, 48
    %4044 = vbcast.lane.b32.xlu0 %v2253, %s4043
    %v4045 = vpop.permute.xlu0 %4044
    %s4047 = sor.u32 256, 56
    %4048 = vbcast.lane.b32.xlu0 %v2253, %s4047
    %v4049 = vpop.permute.xlu0 %4048
    %s4051 = sor.u32 256, 48
    %4052 = vbcast.lane.b32.xlu0 %v2445, %s4051
    %v4053 = vpop.permute.xlu0 %4052
    %s4055 = sor.u32 256, 56
    %4056 = vbcast.lane.b32.xlu0 %v2445, %s4055
    %v4057 = vpop.permute.xlu0 %4056
    %s4059 = sor.u32 256, 48
    %4060 = vbcast.lane.b32.xlu0 %v2637, %s4059
    %v4061 = vpop.permute.xlu0 %4060
    %s4063 = sor.u32 256, 56
    %4064 = vbcast.lane.b32.xlu0 %v2637, %s4063
    %v4065 = vpop.permute.xlu0 %4064
    %s4067 = sor.u32 256, 48
    %4068 = vbcast.lane.b32.xlu0 %v2829, %s4067
    %v4069 = vpop.permute.xlu0 %4068
    %s4071 = sor.u32 256, 56
    %4072 = vbcast.lane.b32.xlu0 %v2829, %s4071
    %v4073 = vpop.permute.xlu0 %4072
    %v4074 = vmul.f32 %v4034, %v4045
    %v4075 = vmul.f32 %v4035, %v4049
    %v4076 = vmul.f32 %v4036, %v4053
    %v4077 = vmul.f32 %v4037, %v4057
    %v4078 = vmul.f32 %v4038, %v4061
    %v4079 = vmul.f32 %v4039, %v4065
    %v4080 = vmul.f32 %v4040, %v4069
    %v4081 = vmul.f32 %v4041, %v4073
    %v4082 = vsel %vm76, %v4074, 0.0
    %v4083 = vsel %vm76, %v4075, 0.0
    %v4084 = vadd.f32 %v4082, %v4083
    %v4085 = vrot.slane %v4084, 4
    %v4086 = vadd.f32 %v4084, %v4085
    %v4087 = vrot.slane %v4086, 2
    %v4088 = vadd.f32 %v4086, %v4087
    %v4089 = vrot.slane %v4088, 1
    %v4090 = vadd.f32 %v4088, %v4089
    %v4091 = vsel %vm76, %v4076, 0.0
    %v4092 = vsel %vm76, %v4077, 0.0
    %v4093 = vadd.f32 %v4091, %v4092
    %v4094 = vrot.slane %v4093, 4
    %v4095 = vadd.f32 %v4093, %v4094
    %v4096 = vrot.slane %v4095, 2
    %v4097 = vadd.f32 %v4095, %v4096
    %v4098 = vrot.slane %v4097, 1
    %v4099 = vadd.f32 %v4097, %v4098
    %v4100 = vsel %vm76, %v4078, 0.0
    %v4101 = vsel %vm76, %v4079, 0.0
    %v4102 = vadd.f32 %v4100, %v4101
    %v4103 = vrot.slane %v4102, 4
    %v4104 = vadd.f32 %v4102, %v4103
    %v4105 = vrot.slane %v4104, 2
    %v4106 = vadd.f32 %v4104, %v4105
    %v4107 = vrot.slane %v4106, 1
    %v4108 = vadd.f32 %v4106, %v4107
    %v4109 = vsel %vm76, %v4080, 0.0
    %v4110 = vsel %vm76, %v4081, 0.0
    %v4111 = vadd.f32 %v4109, %v4110
    %v4112 = vrot.slane %v4111, 4
    %v4113 = vadd.f32 %v4111, %v4112
    %v4114 = vrot.slane %v4113, 2
    %v4115 = vadd.f32 %v4113, %v4114
    %v4116 = vrot.slane %v4115, 1
    %v4117 = vadd.f32 %v4115, %v4116
    %v4118 = vmul.f32 %v1527, %v4034
    %v4119 = vmul.f32 %v1529, %v4035
    %v4120 = vmul.f32 %v1591, %v4036
    %v4121 = vmul.f32 %v1593, %v4037
    %v4122 = vmul.f32 %v1655, %v4038
    %v4123 = vmul.f32 %v1657, %v4039
    %v4124 = vmul.f32 %v1719, %v4040
    %v4125 = vmul.f32 %v1721, %v4041
    %v4126 = vadd.f32 %v4118, %v3270
    %v4127 = vadd.f32 %v4119, %v3271
    %v4128 = vadd.f32 %v4120, %v3302
    %v4129 = vadd.f32 %v4121, %v3303
    %v4130 = vadd.f32 %v4122, %v3334
    %v4131 = vadd.f32 %v4123, %v3335
    %v4132 = vadd.f32 %v4124, %v3366
    %v4133 = vadd.f32 %v4125, %v3367
    %s4135 = sor.u32 256, 48
    %4136 = vbcast.lane.b32.xlu0 %v2265, %s4135
    %v4137 = vpop.permute.xlu0 %4136
    %s4139 = sor.u32 256, 56
    %4140 = vbcast.lane.b32.xlu0 %v2265, %s4139
    %v4141 = vpop.permute.xlu0 %4140
    %s4143 = sor.u32 256, 48
    %4144 = vbcast.lane.b32.xlu0 %v2457, %s4143
    %v4145 = vpop.permute.xlu0 %4144
    %s4147 = sor.u32 256, 56
    %4148 = vbcast.lane.b32.xlu0 %v2457, %s4147
    %v4149 = vpop.permute.xlu0 %4148
    %s4151 = sor.u32 256, 48
    %4152 = vbcast.lane.b32.xlu0 %v2649, %s4151
    %v4153 = vpop.permute.xlu0 %4152
    %s4155 = sor.u32 256, 56
    %4156 = vbcast.lane.b32.xlu0 %v2649, %s4155
    %v4157 = vpop.permute.xlu0 %4156
    %s4159 = sor.u32 256, 48
    %4160 = vbcast.lane.b32.xlu0 %v2841, %s4159
    %v4161 = vpop.permute.xlu0 %4160
    %s4163 = sor.u32 256, 56
    %4164 = vbcast.lane.b32.xlu0 %v2841, %s4163
    %v4165 = vpop.permute.xlu0 %4164
    %v4166 = vmul.f32 %v4126, %v4137
    %v4167 = vmul.f32 %v4127, %v4141
    %v4168 = vmul.f32 %v4128, %v4145
    %v4169 = vmul.f32 %v4129, %v4149
    %v4170 = vmul.f32 %v4130, %v4153
    %v4171 = vmul.f32 %v4131, %v4157
    %v4172 = vmul.f32 %v4132, %v4161
    %v4173 = vmul.f32 %v4133, %v4165
    %v4174 = vsel %vm76, %v4166, 0.0
    %v4175 = vsel %vm76, %v4167, 0.0
    %v4176 = vadd.f32 %v4174, %v4175
    %v4177 = vrot.slane %v4176, 4
    %v4178 = vadd.f32 %v4176, %v4177
    %v4179 = vrot.slane %v4178, 2
    %v4180 = vadd.f32 %v4178, %v4179
    %v4181 = vrot.slane %v4180, 1
    %v4182 = vadd.f32 %v4180, %v4181
    %v4183 = vsel %vm76, %v4168, 0.0
    %v4184 = vsel %vm76, %v4169, 0.0
    %v4185 = vadd.f32 %v4183, %v4184
    %v4186 = vrot.slane %v4185, 4
    %v4187 = vadd.f32 %v4185, %v4186
    %v4188 = vrot.slane %v4187, 2
    %v4189 = vadd.f32 %v4187, %v4188
    %v4190 = vrot.slane %v4189, 1
    %v4191 = vadd.f32 %v4189, %v4190
    %v4192 = vsel %vm76, %v4170, 0.0
    %v4193 = vsel %vm76, %v4171, 0.0
    %v4194 = vadd.f32 %v4192, %v4193
    %v4195 = vrot.slane %v4194, 4
    %v4196 = vadd.f32 %v4194, %v4195
    %v4197 = vrot.slane %v4196, 2
    %v4198 = vadd.f32 %v4196, %v4197
    %v4199 = vrot.slane %v4198, 1
    %v4200 = vadd.f32 %v4198, %v4199
    %v4201 = vsel %vm76, %v4172, 0.0
    %v4202 = vsel %vm76, %v4173, 0.0
    %v4203 = vadd.f32 %v4201, %v4202
    %v4204 = vrot.slane %v4203, 4
    %v4205 = vadd.f32 %v4203, %v4204
    %v4206 = vrot.slane %v4205, 2
    %v4207 = vadd.f32 %v4205, %v4206
    %v4208 = vrot.slane %v4207, 1
    %v4209 = vadd.f32 %v4207, %v4208
    %v4210 = vmul.f32 %v1531, %v4126
    %v4211 = vmul.f32 %v1533, %v4127
    %v4212 = vmul.f32 %v1595, %v4128
    %v4213 = vmul.f32 %v1597, %v4129
    %v4214 = vmul.f32 %v1659, %v4130
    %v4215 = vmul.f32 %v1661, %v4131
    %v4216 = vmul.f32 %v1723, %v4132
    %v4217 = vmul.f32 %v1725, %v4133
    %v4218 = vadd.f32 %v4210, %v3272
    %v4219 = vadd.f32 %v4211, %v3273
    %v4220 = vadd.f32 %v4212, %v3304
    %v4221 = vadd.f32 %v4213, %v3305
    %v4222 = vadd.f32 %v4214, %v3336
    %v4223 = vadd.f32 %v4215, %v3337
    %v4224 = vadd.f32 %v4216, %v3368
    %v4225 = vadd.f32 %v4217, %v3369
    %s4227 = sor.u32 256, 48
    %4228 = vbcast.lane.b32.xlu0 %v2277, %s4227
    %v4229 = vpop.permute.xlu0 %4228
    %s4231 = sor.u32 256, 56
    %4232 = vbcast.lane.b32.xlu0 %v2277, %s4231
    %v4233 = vpop.permute.xlu0 %4232
    %s4235 = sor.u32 256, 48
    %4236 = vbcast.lane.b32.xlu0 %v2469, %s4235
    %v4237 = vpop.permute.xlu0 %4236
    %s4239 = sor.u32 256, 56
    %4240 = vbcast.lane.b32.xlu0 %v2469, %s4239
    %v4241 = vpop.permute.xlu0 %4240
    %s4243 = sor.u32 256, 48
    %4244 = vbcast.lane.b32.xlu0 %v2661, %s4243
    %v4245 = vpop.permute.xlu0 %4244
    %s4247 = sor.u32 256, 56
    %4248 = vbcast.lane.b32.xlu0 %v2661, %s4247
    %v4249 = vpop.permute.xlu0 %4248
    %s4251 = sor.u32 256, 48
    %4252 = vbcast.lane.b32.xlu0 %v2853, %s4251
    %v4253 = vpop.permute.xlu0 %4252
    %s4255 = sor.u32 256, 56
    %4256 = vbcast.lane.b32.xlu0 %v2853, %s4255
    %v4257 = vpop.permute.xlu0 %4256
    %v4258 = vmul.f32 %v4218, %v4229
    %v4259 = vmul.f32 %v4219, %v4233
    %v4260 = vmul.f32 %v4220, %v4237
    %v4261 = vmul.f32 %v4221, %v4241
    %v4262 = vmul.f32 %v4222, %v4245
    %v4263 = vmul.f32 %v4223, %v4249
    %v4264 = vmul.f32 %v4224, %v4253
    %v4265 = vmul.f32 %v4225, %v4257
    %v4266 = vsel %vm76, %v4258, 0.0
    %v4267 = vsel %vm76, %v4259, 0.0
    %v4268 = vadd.f32 %v4266, %v4267
    %v4269 = vrot.slane %v4268, 4
    %v4270 = vadd.f32 %v4268, %v4269
    %v4271 = vrot.slane %v4270, 2
    %v4272 = vadd.f32 %v4270, %v4271
    %v4273 = vrot.slane %v4272, 1
    %v4274 = vadd.f32 %v4272, %v4273
    %v4275 = vsel %vm76, %v4260, 0.0
    %v4276 = vsel %vm76, %v4261, 0.0
    %v4277 = vadd.f32 %v4275, %v4276
    %v4278 = vrot.slane %v4277, 4
    %v4279 = vadd.f32 %v4277, %v4278
    %v4280 = vrot.slane %v4279, 2
    %v4281 = vadd.f32 %v4279, %v4280
    %v4282 = vrot.slane %v4281, 1
    %v4283 = vadd.f32 %v4281, %v4282
    %v4284 = vsel %vm76, %v4262, 0.0
    %v4285 = vsel %vm76, %v4263, 0.0
    %v4286 = vadd.f32 %v4284, %v4285
    %v4287 = vrot.slane %v4286, 4
    %v4288 = vadd.f32 %v4286, %v4287
    %v4289 = vrot.slane %v4288, 2
    %v4290 = vadd.f32 %v4288, %v4289
    %v4291 = vrot.slane %v4290, 1
    %v4292 = vadd.f32 %v4290, %v4291
    %v4293 = vsel %vm76, %v4264, 0.0
    %v4294 = vsel %vm76, %v4265, 0.0
    %v4295 = vadd.f32 %v4293, %v4294
    %v4296 = vrot.slane %v4295, 4
    %v4297 = vadd.f32 %v4295, %v4296
    %v4298 = vrot.slane %v4297, 2
    %v4299 = vadd.f32 %v4297, %v4298
    %v4300 = vrot.slane %v4299, 1
    %v4301 = vadd.f32 %v4299, %v4300
    %v4302 = vmul.f32 %v1535, %v4218
    %v4303 = vmul.f32 %v1537, %v4219
    %v4304 = vmul.f32 %v1599, %v4220
    %v4305 = vmul.f32 %v1601, %v4221
    %v4306 = vmul.f32 %v1663, %v4222
    %v4307 = vmul.f32 %v1665, %v4223
    %v4308 = vmul.f32 %v1727, %v4224
    %v4309 = vmul.f32 %v1729, %v4225
    %v4310 = vadd.f32 %v4302, %v3274
    %v4311 = vadd.f32 %v4303, %v3275
    %v4312 = vadd.f32 %v4304, %v3306
    %v4313 = vadd.f32 %v4305, %v3307
    %v4314 = vadd.f32 %v4306, %v3338
    %v4315 = vadd.f32 %v4307, %v3339
    %v4316 = vadd.f32 %v4308, %v3370
    %v4317 = vadd.f32 %v4309, %v3371
    %s4319 = sor.u32 256, 48
    %4320 = vbcast.lane.b32.xlu0 %v2289, %s4319
    %v4321 = vpop.permute.xlu0 %4320
    %s4323 = sor.u32 256, 56
    %4324 = vbcast.lane.b32.xlu0 %v2289, %s4323
    %v4325 = vpop.permute.xlu0 %4324
    %s4327 = sor.u32 256, 48
    %4328 = vbcast.lane.b32.xlu0 %v2481, %s4327
    %v4329 = vpop.permute.xlu0 %4328
    %s4331 = sor.u32 256, 56
    %4332 = vbcast.lane.b32.xlu0 %v2481, %s4331
    %v4333 = vpop.permute.xlu0 %4332
    %s4335 = sor.u32 256, 48
    %4336 = vbcast.lane.b32.xlu0 %v2673, %s4335
    %v4337 = vpop.permute.xlu0 %4336
    %s4339 = sor.u32 256, 56
    %4340 = vbcast.lane.b32.xlu0 %v2673, %s4339
    %v4341 = vpop.permute.xlu0 %4340
    %s4343 = sor.u32 256, 48
    %4344 = vbcast.lane.b32.xlu0 %v2865, %s4343
    %v4345 = vpop.permute.xlu0 %4344
    %s4347 = sor.u32 256, 56
    %4348 = vbcast.lane.b32.xlu0 %v2865, %s4347
    %v4349 = vpop.permute.xlu0 %4348
    %v4350 = vmul.f32 %v4310, %v4321
    %v4351 = vmul.f32 %v4311, %v4325
    %v4352 = vmul.f32 %v4312, %v4329
    %v4353 = vmul.f32 %v4313, %v4333
    %v4354 = vmul.f32 %v4314, %v4337
    %v4355 = vmul.f32 %v4315, %v4341
    %v4356 = vmul.f32 %v4316, %v4345
    %v4357 = vmul.f32 %v4317, %v4349
    %v4358 = vsel %vm76, %v4350, 0.0
    %v4359 = vsel %vm76, %v4351, 0.0
    %v4360 = vadd.f32 %v4358, %v4359
    %v4361 = vrot.slane %v4360, 4
    %v4362 = vadd.f32 %v4360, %v4361
    %v4363 = vrot.slane %v4362, 2
    %v4364 = vadd.f32 %v4362, %v4363
    %v4365 = vrot.slane %v4364, 1
    %v4366 = vadd.f32 %v4364, %v4365
    %v4367 = vsel %vm76, %v4352, 0.0
    %v4368 = vsel %vm76, %v4353, 0.0
    %v4369 = vadd.f32 %v4367, %v4368
    %v4370 = vrot.slane %v4369, 4
    %v4371 = vadd.f32 %v4369, %v4370
    %v4372 = vrot.slane %v4371, 2
    %v4373 = vadd.f32 %v4371, %v4372
    %v4374 = vrot.slane %v4373, 1
    %v4375 = vadd.f32 %v4373, %v4374
    %v4376 = vsel %vm76, %v4354, 0.0
    %v4377 = vsel %vm76, %v4355, 0.0
    %v4378 = vadd.f32 %v4376, %v4377
    %v4379 = vrot.slane %v4378, 4
    %v4380 = vadd.f32 %v4378, %v4379
    %v4381 = vrot.slane %v4380, 2
    %v4382 = vadd.f32 %v4380, %v4381
    %v4383 = vrot.slane %v4382, 1
    %v4384 = vadd.f32 %v4382, %v4383
    %v4385 = vsel %vm76, %v4356, 0.0
    %v4386 = vsel %vm76, %v4357, 0.0
    %v4387 = vadd.f32 %v4385, %v4386
    %v4388 = vrot.slane %v4387, 4
    %v4389 = vadd.f32 %v4387, %v4388
    %v4390 = vrot.slane %v4389, 2
    %v4391 = vadd.f32 %v4389, %v4390
    %v4392 = vrot.slane %v4391, 1
    %v4393 = vadd.f32 %v4391, %v4392
    %v4394 = vmul.f32 %v1539, %v4310
    %v4395 = vmul.f32 %v1541, %v4311
    %v4396 = vmul.f32 %v1603, %v4312
    %v4397 = vmul.f32 %v1605, %v4313
    %v4398 = vmul.f32 %v1667, %v4314
    %v4399 = vmul.f32 %v1669, %v4315
    %v4400 = vmul.f32 %v1731, %v4316
    %v4401 = vmul.f32 %v1733, %v4317
    %v4402 = vadd.f32 %v4394, %v3276
    %v4403 = vadd.f32 %v4395, %v3277
    %v4404 = vadd.f32 %v4396, %v3308
    %v4405 = vadd.f32 %v4397, %v3309
    %v4406 = vadd.f32 %v4398, %v3340
    %v4407 = vadd.f32 %v4399, %v3341
    %v4408 = vadd.f32 %v4400, %v3372
    %v4409 = vadd.f32 %v4401, %v3373
    %s4411 = sor.u32 256, 48
    %4412 = vbcast.lane.b32.xlu0 %v2301, %s4411
    %v4413 = vpop.permute.xlu0 %4412
    %s4415 = sor.u32 256, 56
    %4416 = vbcast.lane.b32.xlu0 %v2301, %s4415
    %v4417 = vpop.permute.xlu0 %4416
    %s4419 = sor.u32 256, 48
    %4420 = vbcast.lane.b32.xlu0 %v2493, %s4419
    %v4421 = vpop.permute.xlu0 %4420
    %s4423 = sor.u32 256, 56
    %4424 = vbcast.lane.b32.xlu0 %v2493, %s4423
    %v4425 = vpop.permute.xlu0 %4424
    %s4427 = sor.u32 256, 48
    %4428 = vbcast.lane.b32.xlu0 %v2685, %s4427
    %v4429 = vpop.permute.xlu0 %4428
    %s4431 = sor.u32 256, 56
    %4432 = vbcast.lane.b32.xlu0 %v2685, %s4431
    %v4433 = vpop.permute.xlu0 %4432
    %s4435 = sor.u32 256, 48
    %4436 = vbcast.lane.b32.xlu0 %v2877, %s4435
    %v4437 = vpop.permute.xlu0 %4436
    %s4439 = sor.u32 256, 56
    %4440 = vbcast.lane.b32.xlu0 %v2877, %s4439
    %v4441 = vpop.permute.xlu0 %4440
    %v4442 = vmul.f32 %v4402, %v4413
    %v4443 = vmul.f32 %v4403, %v4417
    %v4444 = vmul.f32 %v4404, %v4421
    %v4445 = vmul.f32 %v4405, %v4425
    %v4446 = vmul.f32 %v4406, %v4429
    %v4447 = vmul.f32 %v4407, %v4433
    %v4448 = vmul.f32 %v4408, %v4437
    %v4449 = vmul.f32 %v4409, %v4441
    %v4450 = vsel %vm76, %v4442, 0.0
    %v4451 = vsel %vm76, %v4443, 0.0
    %v4452 = vadd.f32 %v4450, %v4451
    %v4453 = vrot.slane %v4452, 4
    %v4454 = vadd.f32 %v4452, %v4453
    %v4455 = vrot.slane %v4454, 2
    %v4456 = vadd.f32 %v4454, %v4455
    %v4457 = vrot.slane %v4456, 1
    %v4458 = vadd.f32 %v4456, %v4457
    %v4459 = vsel %vm76, %v4444, 0.0
    %v4460 = vsel %vm76, %v4445, 0.0
    %v4461 = vadd.f32 %v4459, %v4460
    %v4462 = vrot.slane %v4461, 4
    %v4463 = vadd.f32 %v4461, %v4462
    %v4464 = vrot.slane %v4463, 2
    %v4465 = vadd.f32 %v4463, %v4464
    %v4466 = vrot.slane %v4465, 1
    %v4467 = vadd.f32 %v4465, %v4466
    %v4468 = vsel %vm76, %v4446, 0.0
    %v4469 = vsel %vm76, %v4447, 0.0
    %v4470 = vadd.f32 %v4468, %v4469
    %v4471 = vrot.slane %v4470, 4
    %v4472 = vadd.f32 %v4470, %v4471
    %v4473 = vrot.slane %v4472, 2
    %v4474 = vadd.f32 %v4472, %v4473
    %v4475 = vrot.slane %v4474, 1
    %v4476 = vadd.f32 %v4474, %v4475
    %v4477 = vsel %vm76, %v4448, 0.0
    %v4478 = vsel %vm76, %v4449, 0.0
    %v4479 = vadd.f32 %v4477, %v4478
    %v4480 = vrot.slane %v4479, 4
    %v4481 = vadd.f32 %v4479, %v4480
    %v4482 = vrot.slane %v4481, 2
    %v4483 = vadd.f32 %v4481, %v4482
    %v4484 = vrot.slane %v4483, 1
    %v4485 = vadd.f32 %v4483, %v4484
    %v4486 = vmul.f32 %v1543, %v4402
    %v4487 = vmul.f32 %v1545, %v4403
    %v4488 = vmul.f32 %v1607, %v4404
    %v4489 = vmul.f32 %v1609, %v4405
    %v4490 = vmul.f32 %v1671, %v4406
    %v4491 = vmul.f32 %v1673, %v4407
    %v4492 = vmul.f32 %v1735, %v4408
    %v4493 = vmul.f32 %v1737, %v4409
    %v4494 = vadd.f32 %v4486, %v3278
    %v4495 = vadd.f32 %v4487, %v3279
    %v4496 = vadd.f32 %v4488, %v3310
    %v4497 = vadd.f32 %v4489, %v3311
    %v4498 = vadd.f32 %v4490, %v3342
    %v4499 = vadd.f32 %v4491, %v3343
    %v4500 = vadd.f32 %v4492, %v3374
    %v4501 = vadd.f32 %v4493, %v3375
    %s4503 = sor.u32 256, 48
    %4504 = vbcast.lane.b32.xlu0 %v2313, %s4503
    %v4505 = vpop.permute.xlu0 %4504
    %s4507 = sor.u32 256, 56
    %4508 = vbcast.lane.b32.xlu0 %v2313, %s4507
    %v4509 = vpop.permute.xlu0 %4508
    %s4511 = sor.u32 256, 48
    %4512 = vbcast.lane.b32.xlu0 %v2505, %s4511
    %v4513 = vpop.permute.xlu0 %4512
    %s4515 = sor.u32 256, 56
    %4516 = vbcast.lane.b32.xlu0 %v2505, %s4515
    %v4517 = vpop.permute.xlu0 %4516
    %s4519 = sor.u32 256, 48
    %4520 = vbcast.lane.b32.xlu0 %v2697, %s4519
    %v4521 = vpop.permute.xlu0 %4520
    %s4523 = sor.u32 256, 56
    %4524 = vbcast.lane.b32.xlu0 %v2697, %s4523
    %v4525 = vpop.permute.xlu0 %4524
    %s4527 = sor.u32 256, 48
    %4528 = vbcast.lane.b32.xlu0 %v2889, %s4527
    %v4529 = vpop.permute.xlu0 %4528
    %s4531 = sor.u32 256, 56
    %4532 = vbcast.lane.b32.xlu0 %v2889, %s4531
    %v4533 = vpop.permute.xlu0 %4532
    %v4534 = vmul.f32 %v4494, %v4505
    %v4535 = vmul.f32 %v4495, %v4509
    %v4536 = vmul.f32 %v4496, %v4513
    %v4537 = vmul.f32 %v4497, %v4517
    %v4538 = vmul.f32 %v4498, %v4521
    %v4539 = vmul.f32 %v4499, %v4525
    %v4540 = vmul.f32 %v4500, %v4529
    %v4541 = vmul.f32 %v4501, %v4533
    %v4542 = vsel %vm76, %v4534, 0.0
    %v4543 = vsel %vm76, %v4535, 0.0
    %v4544 = vadd.f32 %v4542, %v4543
    %v4545 = vrot.slane %v4544, 4
    %v4546 = vadd.f32 %v4544, %v4545
    %v4547 = vrot.slane %v4546, 2
    %v4548 = vadd.f32 %v4546, %v4547
    %v4549 = vrot.slane %v4548, 1
    %v4550 = vadd.f32 %v4548, %v4549
    %v4551 = vsel %vm76, %v4536, 0.0
    %v4552 = vsel %vm76, %v4537, 0.0
    %v4553 = vadd.f32 %v4551, %v4552
    %v4554 = vrot.slane %v4553, 4
    %v4555 = vadd.f32 %v4553, %v4554
    %v4556 = vrot.slane %v4555, 2
    %v4557 = vadd.f32 %v4555, %v4556
    %v4558 = vrot.slane %v4557, 1
    %v4559 = vadd.f32 %v4557, %v4558
    %v4560 = vsel %vm76, %v4538, 0.0
    %v4561 = vsel %vm76, %v4539, 0.0
    %v4562 = vadd.f32 %v4560, %v4561
    %v4563 = vrot.slane %v4562, 4
    %v4564 = vadd.f32 %v4562, %v4563
    %v4565 = vrot.slane %v4564, 2
    %v4566 = vadd.f32 %v4564, %v4565
    %v4567 = vrot.slane %v4566, 1
    %v4568 = vadd.f32 %v4566, %v4567
    %v4569 = vsel %vm76, %v4540, 0.0
    %v4570 = vsel %vm76, %v4541, 0.0
    %v4571 = vadd.f32 %v4569, %v4570
    %v4572 = vrot.slane %v4571, 4
    %v4573 = vadd.f32 %v4571, %v4572
    %v4574 = vrot.slane %v4573, 2
    %v4575 = vadd.f32 %v4573, %v4574
    %v4576 = vrot.slane %v4575, 1
    %v4577 = vadd.f32 %v4575, %v4576
    %v4578 = vmul.f32 %v1547, %v4494
    %v4579 = vmul.f32 %v1549, %v4495
    %v4580 = vmul.f32 %v1611, %v4496
    %v4581 = vmul.f32 %v1613, %v4497
    %v4582 = vmul.f32 %v1675, %v4498
    %v4583 = vmul.f32 %v1677, %v4499
    %v4584 = vmul.f32 %v1739, %v4500
    %v4585 = vmul.f32 %v1741, %v4501
    %v4586 = vadd.f32 %v4578, %v3280
    %v4587 = vadd.f32 %v4579, %v3281
    %v4588 = vadd.f32 %v4580, %v3312
    %v4589 = vadd.f32 %v4581, %v3313
    %v4590 = vadd.f32 %v4582, %v3344
    %v4591 = vadd.f32 %v4583, %v3345
    %v4592 = vadd.f32 %v4584, %v3376
    %v4593 = vadd.f32 %v4585, %v3377
    %s4595 = sor.u32 256, 48
    %4596 = vbcast.lane.b32.xlu0 %v2325, %s4595
    %v4597 = vpop.permute.xlu0 %4596
    %s4599 = sor.u32 256, 56
    %4600 = vbcast.lane.b32.xlu0 %v2325, %s4599
    %v4601 = vpop.permute.xlu0 %4600
    %s4603 = sor.u32 256, 48
    %4604 = vbcast.lane.b32.xlu0 %v2517, %s4603
    %v4605 = vpop.permute.xlu0 %4604
    %s4607 = sor.u32 256, 56
    %4608 = vbcast.lane.b32.xlu0 %v2517, %s4607
    %v4609 = vpop.permute.xlu0 %4608
    %s4611 = sor.u32 256, 48
    %4612 = vbcast.lane.b32.xlu0 %v2709, %s4611
    %v4613 = vpop.permute.xlu0 %4612
    %s4615 = sor.u32 256, 56
    %4616 = vbcast.lane.b32.xlu0 %v2709, %s4615
    %v4617 = vpop.permute.xlu0 %4616
    %s4619 = sor.u32 256, 48
    %4620 = vbcast.lane.b32.xlu0 %v2901, %s4619
    %v4621 = vpop.permute.xlu0 %4620
    %s4623 = sor.u32 256, 56
    %4624 = vbcast.lane.b32.xlu0 %v2901, %s4623
    %v4625 = vpop.permute.xlu0 %4624
    %v4626 = vmul.f32 %v4586, %v4597
    %v4627 = vmul.f32 %v4587, %v4601
    %v4628 = vmul.f32 %v4588, %v4605
    %v4629 = vmul.f32 %v4589, %v4609
    %v4630 = vmul.f32 %v4590, %v4613
    %v4631 = vmul.f32 %v4591, %v4617
    %v4632 = vmul.f32 %v4592, %v4621
    %v4633 = vmul.f32 %v4593, %v4625
    %v4634 = vsel %vm76, %v4626, 0.0
    %v4635 = vsel %vm76, %v4627, 0.0
    %v4636 = vadd.f32 %v4634, %v4635
    %v4637 = vrot.slane %v4636, 4
    %v4638 = vadd.f32 %v4636, %v4637
    %v4639 = vrot.slane %v4638, 2
    %v4640 = vadd.f32 %v4638, %v4639
    %v4641 = vrot.slane %v4640, 1
    %v4642 = vadd.f32 %v4640, %v4641
    %v4643 = vsel %vm76, %v4628, 0.0
    %v4644 = vsel %vm76, %v4629, 0.0
    %v4645 = vadd.f32 %v4643, %v4644
    %v4646 = vrot.slane %v4645, 4
    %v4647 = vadd.f32 %v4645, %v4646
    %v4648 = vrot.slane %v4647, 2
    %v4649 = vadd.f32 %v4647, %v4648
    %v4650 = vrot.slane %v4649, 1
    %v4651 = vadd.f32 %v4649, %v4650
    %v4652 = vsel %vm76, %v4630, 0.0
    %v4653 = vsel %vm76, %v4631, 0.0
    %v4654 = vadd.f32 %v4652, %v4653
    %v4655 = vrot.slane %v4654, 4
    %v4656 = vadd.f32 %v4654, %v4655
    %v4657 = vrot.slane %v4656, 2
    %v4658 = vadd.f32 %v4656, %v4657
    %v4659 = vrot.slane %v4658, 1
    %v4660 = vadd.f32 %v4658, %v4659
    %v4661 = vsel %vm76, %v4632, 0.0
    %v4662 = vsel %vm76, %v4633, 0.0
    %v4663 = vadd.f32 %v4661, %v4662
    %v4664 = vrot.slane %v4663, 4
    %v4665 = vadd.f32 %v4663, %v4664
    %v4666 = vrot.slane %v4665, 2
    %v4667 = vadd.f32 %v4665, %v4666
    %v4668 = vrot.slane %v4667, 1
    %v4669 = vadd.f32 %v4667, %v4668
    %v4670 = vmul.f32 %v1551, %v4586
    %v4671 = vmul.f32 %v1553, %v4587
    %v4672 = vmul.f32 %v1615, %v4588
    %v4673 = vmul.f32 %v1617, %v4589
    %v4674 = vmul.f32 %v1679, %v4590
    %v4675 = vmul.f32 %v1681, %v4591
    %v4676 = vmul.f32 %v1743, %v4592
    %v4677 = vmul.f32 %v1745, %v4593
    %v4678 = vadd.f32 %v4670, %v3282
    %v4679 = vadd.f32 %v4671, %v3283
    %v4680 = vadd.f32 %v4672, %v3314
    %v4681 = vadd.f32 %v4673, %v3315
    %v4682 = vadd.f32 %v4674, %v3346
    %v4683 = vadd.f32 %v4675, %v3347
    %v4684 = vadd.f32 %v4676, %v3378
    %v4685 = vadd.f32 %v4677, %v3379
    %s4687 = sor.u32 256, 48
    %4688 = vbcast.lane.b32.xlu0 %v2337, %s4687
    %v4689 = vpop.permute.xlu0 %4688
    %s4691 = sor.u32 256, 56
    %4692 = vbcast.lane.b32.xlu0 %v2337, %s4691
    %v4693 = vpop.permute.xlu0 %4692
    %s4695 = sor.u32 256, 48
    %4696 = vbcast.lane.b32.xlu0 %v2529, %s4695
    %v4697 = vpop.permute.xlu0 %4696
    %s4699 = sor.u32 256, 56
    %4700 = vbcast.lane.b32.xlu0 %v2529, %s4699
    %v4701 = vpop.permute.xlu0 %4700
    %s4703 = sor.u32 256, 48
    %4704 = vbcast.lane.b32.xlu0 %v2721, %s4703
    %v4705 = vpop.permute.xlu0 %4704
    %s4707 = sor.u32 256, 56
    %4708 = vbcast.lane.b32.xlu0 %v2721, %s4707
    %v4709 = vpop.permute.xlu0 %4708
    %s4711 = sor.u32 256, 48
    %4712 = vbcast.lane.b32.xlu0 %v2913, %s4711
    %v4713 = vpop.permute.xlu0 %4712
    %s4715 = sor.u32 256, 56
    %4716 = vbcast.lane.b32.xlu0 %v2913, %s4715
    %v4717 = vpop.permute.xlu0 %4716
    %v4718 = vmul.f32 %v4678, %v4689
    %v4719 = vmul.f32 %v4679, %v4693
    %v4720 = vmul.f32 %v4680, %v4697
    %v4721 = vmul.f32 %v4681, %v4701
    %v4722 = vmul.f32 %v4682, %v4705
    %v4723 = vmul.f32 %v4683, %v4709
    %v4724 = vmul.f32 %v4684, %v4713
    %v4725 = vmul.f32 %v4685, %v4717
    %v4726 = vsel %vm76, %v4718, 0.0
    %v4727 = vsel %vm76, %v4719, 0.0
    %v4728 = vadd.f32 %v4726, %v4727
    %v4729 = vrot.slane %v4728, 4
    %v4730 = vadd.f32 %v4728, %v4729
    %v4731 = vrot.slane %v4730, 2
    %v4732 = vadd.f32 %v4730, %v4731
    %v4733 = vrot.slane %v4732, 1
    %v4734 = vadd.f32 %v4732, %v4733
    %v4735 = vsel %vm76, %v4720, 0.0
    %v4736 = vsel %vm76, %v4721, 0.0
    %v4737 = vadd.f32 %v4735, %v4736
    %v4738 = vrot.slane %v4737, 4
    %v4739 = vadd.f32 %v4737, %v4738
    %v4740 = vrot.slane %v4739, 2
    %v4741 = vadd.f32 %v4739, %v4740
    %v4742 = vrot.slane %v4741, 1
    %v4743 = vadd.f32 %v4741, %v4742
    %v4744 = vsel %vm76, %v4722, 0.0
    %v4745 = vsel %vm76, %v4723, 0.0
    %v4746 = vadd.f32 %v4744, %v4745
    %v4747 = vrot.slane %v4746, 4
    %v4748 = vadd.f32 %v4746, %v4747
    %v4749 = vrot.slane %v4748, 2
    %v4750 = vadd.f32 %v4748, %v4749
    %v4751 = vrot.slane %v4750, 1
    %v4752 = vadd.f32 %v4750, %v4751
    %v4753 = vsel %vm76, %v4724, 0.0
    %v4754 = vsel %vm76, %v4725, 0.0
    %v4755 = vadd.f32 %v4753, %v4754
    %v4756 = vrot.slane %v4755, 4
    %v4757 = vadd.f32 %v4755, %v4756
    %v4758 = vrot.slane %v4757, 2
    %v4759 = vadd.f32 %v4757, %v4758
    %v4760 = vrot.slane %v4759, 1
    %v4761 = vadd.f32 %v4759, %v4760
    %v4762 = vmul.f32 %v1555, %v4678
    %v4763 = vmul.f32 %v1557, %v4679
    %v4764 = vmul.f32 %v1619, %v4680
    %v4765 = vmul.f32 %v1621, %v4681
    %v4766 = vmul.f32 %v1683, %v4682
    %v4767 = vmul.f32 %v1685, %v4683
    %v4768 = vmul.f32 %v1747, %v4684
    %v4769 = vmul.f32 %v1749, %v4685
    %v4770 = vadd.f32 %v4762, %v3284
    %v4771 = vadd.f32 %v4763, %v3285
    %v4772 = vadd.f32 %v4764, %v3316
    %v4773 = vadd.f32 %v4765, %v3317
    %v4774 = vadd.f32 %v4766, %v3348
    %v4775 = vadd.f32 %v4767, %v3349
    %v4776 = vadd.f32 %v4768, %v3380
    %v4777 = vadd.f32 %v4769, %v3381
    %s4779 = sor.u32 256, 48
    %4780 = vbcast.lane.b32.xlu0 %v2349, %s4779
    %v4781 = vpop.permute.xlu0 %4780
    %s4783 = sor.u32 256, 56
    %4784 = vbcast.lane.b32.xlu0 %v2349, %s4783
    %v4785 = vpop.permute.xlu0 %4784
    %s4787 = sor.u32 256, 48
    %4788 = vbcast.lane.b32.xlu0 %v2541, %s4787
    %v4789 = vpop.permute.xlu0 %4788
    %s4791 = sor.u32 256, 56
    %4792 = vbcast.lane.b32.xlu0 %v2541, %s4791
    %v4793 = vpop.permute.xlu0 %4792
    %s4795 = sor.u32 256, 48
    %4796 = vbcast.lane.b32.xlu0 %v2733, %s4795
    %v4797 = vpop.permute.xlu0 %4796
    %s4799 = sor.u32 256, 56
    %4800 = vbcast.lane.b32.xlu0 %v2733, %s4799
    %v4801 = vpop.permute.xlu0 %4800
    %s4803 = sor.u32 256, 48
    %4804 = vbcast.lane.b32.xlu0 %v2925, %s4803
    %v4805 = vpop.permute.xlu0 %4804
    %s4807 = sor.u32 256, 56
    %4808 = vbcast.lane.b32.xlu0 %v2925, %s4807
    %v4809 = vpop.permute.xlu0 %4808
    %v4810 = vmul.f32 %v4770, %v4781
    %v4811 = vmul.f32 %v4771, %v4785
    %v4812 = vmul.f32 %v4772, %v4789
    %v4813 = vmul.f32 %v4773, %v4793
    %v4814 = vmul.f32 %v4774, %v4797
    %v4815 = vmul.f32 %v4775, %v4801
    %v4816 = vmul.f32 %v4776, %v4805
    %v4817 = vmul.f32 %v4777, %v4809
    %v4818 = vsel %vm76, %v4810, 0.0
    %v4819 = vsel %vm76, %v4811, 0.0
    %v4820 = vadd.f32 %v4818, %v4819
    %v4821 = vrot.slane %v4820, 4
    %v4822 = vadd.f32 %v4820, %v4821
    %v4823 = vrot.slane %v4822, 2
    %v4824 = vadd.f32 %v4822, %v4823
    %v4825 = vrot.slane %v4824, 1
    %v4826 = vadd.f32 %v4824, %v4825
    %v4827 = vsel %vm76, %v4812, 0.0
    %v4828 = vsel %vm76, %v4813, 0.0
    %v4829 = vadd.f32 %v4827, %v4828
    %v4830 = vrot.slane %v4829, 4
    %v4831 = vadd.f32 %v4829, %v4830
    %v4832 = vrot.slane %v4831, 2
    %v4833 = vadd.f32 %v4831, %v4832
    %v4834 = vrot.slane %v4833, 1
    %v4835 = vadd.f32 %v4833, %v4834
    %v4836 = vsel %vm76, %v4814, 0.0
    %v4837 = vsel %vm76, %v4815, 0.0
    %v4838 = vadd.f32 %v4836, %v4837
    %v4839 = vrot.slane %v4838, 4
    %v4840 = vadd.f32 %v4838, %v4839
    %v4841 = vrot.slane %v4840, 2
    %v4842 = vadd.f32 %v4840, %v4841
    %v4843 = vrot.slane %v4842, 1
    %v4844 = vadd.f32 %v4842, %v4843
    %v4845 = vsel %vm76, %v4816, 0.0
    %v4846 = vsel %vm76, %v4817, 0.0
    %v4847 = vadd.f32 %v4845, %v4846
    %v4848 = vrot.slane %v4847, 4
    %v4849 = vadd.f32 %v4847, %v4848
    %v4850 = vrot.slane %v4849, 2
    %v4851 = vadd.f32 %v4849, %v4850
    %v4852 = vrot.slane %v4851, 1
    %v4853 = vadd.f32 %v4851, %v4852
    %vm4854 = vcmask 1040384
    %v4855 = vsel %vm4854, %v3446, %v3538
    %v4856 = vsel %vm4854, %v3455, %v3547
    %v4857 = vsel %vm4854, %v3464, %v3556
    %v4858 = vsel %vm4854, %v3473, %v3565
    %vm4859 = vcmask 1041408
    %v4860 = vsel %vm4859, %v4855, %v3630
    %v4861 = vsel %vm4859, %v4856, %v3639
    %v4862 = vsel %vm4859, %v4857, %v3648
    %v4863 = vsel %vm4859, %v4858, %v3657
    %vm4864 = vcmask 1042432
    %v4865 = vsel %vm4864, %v4860, %v3722
    %v4866 = vsel %vm4864, %v4861, %v3731
    %v4867 = vsel %vm4864, %v4862, %v3740
    %v4868 = vsel %vm4864, %v4863, %v3749
    %vm4869 = vcmask 1043456
    %v4870 = vsel %vm4869, %v4865, %v3814
    %v4871 = vsel %vm4869, %v4866, %v3823
    %v4872 = vsel %vm4869, %v4867, %v3832
    %v4873 = vsel %vm4869, %v4868, %v3841
    %vm4874 = vcmask 1044480
    %v4875 = vsel %vm4874, %v4870, %v3906
    %v4876 = vsel %vm4874, %v4871, %v3915
    %v4877 = vsel %vm4874, %v4872, %v3924
    %v4878 = vsel %vm4874, %v4873, %v3933
    %vm4879 = vcmask 1045504
    %v4880 = vsel %vm4879, %v4875, %v3998
    %v4881 = vsel %vm4879, %v4876, %v4007
    %v4882 = vsel %vm4879, %v4877, %v4016
    %v4883 = vsel %vm4879, %v4878, %v4025
    %vm4884 = vcmask 1046528
    %v4885 = vsel %vm4884, %v4880, %v4090
    %v4886 = vsel %vm4884, %v4881, %v4099
    %v4887 = vsel %vm4884, %v4882, %v4108
    %v4888 = vsel %vm4884, %v4883, %v4117
    %v4889 = vsel %vm4854, %v4182, %v4274
    %v4890 = vsel %vm4854, %v4191, %v4283
    %v4891 = vsel %vm4854, %v4200, %v4292
    %v4892 = vsel %vm4854, %v4209, %v4301
    %v4893 = vsel %vm4859, %v4889, %v4366
    %v4894 = vsel %vm4859, %v4890, %v4375
    %v4895 = vsel %vm4859, %v4891, %v4384
    %v4896 = vsel %vm4859, %v4892, %v4393
    %v4897 = vsel %vm4864, %v4893, %v4458
    %v4898 = vsel %vm4864, %v4894, %v4467
    %v4899 = vsel %vm4864, %v4895, %v4476
    %v4900 = vsel %vm4864, %v4896, %v4485
    %v4901 = vsel %vm4869, %v4897, %v4550
    %v4902 = vsel %vm4869, %v4898, %v4559
    %v4903 = vsel %vm4869, %v4899, %v4568
    %v4904 = vsel %vm4869, %v4900, %v4577
    %v4905 = vsel %vm4874, %v4901, %v4642
    %v4906 = vsel %vm4874, %v4902, %v4651
    %v4907 = vsel %vm4874, %v4903, %v4660
    %v4908 = vsel %vm4874, %v4904, %v4669
    %v4909 = vsel %vm4879, %v4905, %v4734
    %v4910 = vsel %vm4879, %v4906, %v4743
    %v4911 = vsel %vm4879, %v4907, %v4752
    %v4912 = vsel %vm4879, %v4908, %v4761
    %v4913 = vsel %vm4884, %v4909, %v4826
    %v4914 = vsel %vm4884, %v4910, %v4835
    %v4915 = vsel %vm4884, %v4911, %v4844
    %v4916 = vsel %vm4884, %v4912, %v4853
    %v4917 = vadd.f32 %v4885, %v4887
    %v4918 = vadd.f32 %v4913, %v4915
    %v4919 = vadd.f32 %v4886, %v4888
    %v4920 = vadd.f32 %v4914, %v4916
    %v4921 = vadd.f32 %v347, %v356
    %v4922 = vadd.f32 %v348, %v358
    %v4923 = vadd.f32 %v349, %v360
    %v4924 = vadd.f32 %v350, %v362
    %v4925 = vlaneseq
    %v4926 = vshrl.u32 %v4925, 7
    %v4927 = vsub.s32 2, %v4926
    %v4928 = vrot.slane %v75, %v4927
    %4930 = vrot.lane.b32.xlu0 %v4928, 32
    %v4931 = vpop.permute.xlu0 %4930
    %v4933 = vmul.f32 %v4921, %v4931
    %v4934 = vmul.f32 %v4922, %v4931
    %v4935 = vmul.f32 %v4923, %v4931
    %v4936 = vmul.f32 %v4924, %v4931
    %4941 = vrot.lane.b32.xlu0 %v4933, 96
    %v4942 = vpop.permute.xlu0 %4941
    %4943 = vrot.lane.b32.xlu0 %v4934, 96
    %v4944 = vpop.permute.xlu0 %4943
    %4945 = vrot.lane.b32.xlu0 %v4935, 96
    %v4946 = vpop.permute.xlu0 %4945
    %4947 = vrot.lane.b32.xlu0 %v4936, 96
    %v4948 = vpop.permute.xlu0 %4947
    %v4953 = vadd.f32 %v4917, %v4942
    %v4954 = vadd.f32 %v4918, %v4944
    %v4955 = vadd.f32 %v4919, %v4946
    %v4956 = vadd.f32 %v4920, %v4948
    %v4957 = vmul.f32 %v4953, %v275
    %v4958 = vmul.f32 %v4954, %v276
    %v4959 = vmul.f32 %v4955, %v277
    %v4960 = vmul.f32 %v4956, %v278
    %v4961 = vadd.f32 %v4957, %v71
    %v4962 = vadd.f32 %v4958, %v72
    %v4963 = vadd.f32 %v4959, %v73
    %v4964 = vadd.f32 %v4960, %v74
    %4965 = vst.msk [vmem:[#allocation10] sm:$0xff] %vm76, %v4961
    %4966 = vst.msk [vmem:[#allocation10 + $0x8] sm:$0xff] %vm76, %v4962
    %4967 = vst.msk [vmem:[#allocation10 + $0x10] sm:$0xff] %vm76, %v4963
    %4968 = vst.msk [vmem:[#allocation10 + $0x18] sm:$0xff] %vm76, %v4964
    // Predicated region
    $region34: #{tpu_custom_call.1} parent=1 // pred_check
      _
    $region35: #{tpu_custom_call.1} parent=1 // pred_check_branch
      %4970 = sbr.rel (0) target = $region37
    $region36: #{tpu_custom_call.1} parent=1 // pred_region
      %s4972 = ssub.s32 512, 512
      %4973 = vsyncadd [#allocation4], %s4972
      %s4974 = sshll.u32 [#allocation10], 4
      %s4975 = int_to_ptr.vmem [resolvable:$true] %s4974
      %4980 = dma.vmem_to_hbm [thread:$0]  %s4975, 512, %s4, [#allocation4], 128, 128, 8
    $region37: #{tpu_custom_call.1} parent=1 // pred_fallthru
      _
    // Predicated region
    $region38: #{tpu_custom_call.1} parent=1 // pred_check
      _
    $region39: #{tpu_custom_call.1} parent=1 // pred_check_branch
      %4982 = sbr.rel (0) target = $region41
    $region40: #{tpu_custom_call.1} parent=1 // pred_region
      %4983 = dma.done [#allocation4], 512
    $region41: #{tpu_custom_call.1} parent=1 // pred_fallthru
      _
    %4984 = vsyncpa [#allocation3], 1
    %4985 = vsyncpa [#allocation6], 1
    %4986 = vsyncpa [#allocation9], 1
    %4987 = vsyncpa [#allocation4], 1

</llo_original>
